<compile_context>
chip_gen: v5e
topology: v5e:2x2
jax: 0.10.0
libtpu: 0.0.40
codegen_flags: <defaults>
</compile_context>

<pallas_src>
import functools

import numpy as np
import jax
import jax.numpy as jnp
from jax.experimental import pallas as pl
from jax.experimental.pallas import tpu as pltpu

ALIGN_CORNERS = False
_TAPS = tuple((dy, dx) for dy in range(3) for dx in range(3))


# ------------------------------------------------------------------
# Host-side constant operators (numpy, built once per shape)
# ------------------------------------------------------------------
def _bilinear_matrix(out_size, in_size, align_corners=ALIGN_CORNERS):
    # PyTorch bilinear-resize weights as a dense (out_size, in_size) matrix.
    u = np.zeros((out_size, in_size), dtype=np.float32)
    if align_corners and out_size > 1:
        scale = (in_size - 1) / (out_size - 1)
        srcs = [o * scale for o in range(out_size)]
    else:
        scale = in_size / out_size
        srcs = [(o + 0.5) * scale - 0.5 for o in range(out_size)]
    for o, src in enumerate(srcs):
        i0 = int(np.floor(src))
        frac = src - i0
        i0c = min(max(i0, 0), in_size - 1)
        i1c = min(max(i0 + 1, 0), in_size - 1)
        u[o, i0c] += 1.0 - frac
        u[o, i1c] += frac
    return u


def _upsample_pad_matrix(H, W, p1a):
    # (H*W, P1A): flattened input image -> flattened x2-upsampled image embedded
    # in a zero-padded (2H+2, 2W+2) frame; columns [Hp*Wp, P1A) are zero so the
    # interior VMEM store is a full lane-aligned (C, P1A) slab.
    Ho, Wo = 2 * H, 2 * W
    Hp, Wp = Ho + 2, Wo + 2
    uh = _bilinear_matrix(Ho, H)
    uw = _bilinear_matrix(Wo, W)
    m = np.zeros((H, W, Hp, Wp), dtype=np.float32)
    m[:, :, 1:Ho + 1, 1:Wo + 1] = np.einsum("oh,pw->hwop", uh, uw)
    m = m.reshape(H * W, Hp * Wp)
    m = np.pad(m, ((0, 0), (0, p1a - Hp * Wp)))
    return jnp.asarray(m)


def _interior_mask(Ho, Wo, p1a):
    # 1.0 at interior pixels of the (Ho+2, Wo+2) padded frame, 0.0 on the pad
    # ring and on the lane-alignment tail.
    Hp, Wp = Ho + 2, Wo + 2
    m = np.zeros((Hp, Wp), dtype=np.float32)
    m[1:Ho + 1, 1:Wo + 1] = 1.0
    m = m.reshape(1, Hp * Wp)
    return jnp.asarray(np.pad(m, ((0, 0), (0, p1a - Hp * Wp))))


def _round_up(x, m):
    return (x + m - 1) // m * m


def _nbytes(shape, dtype):
    return int(np.prod(shape)) * jnp.dtype(dtype).itemsize


# ------------------------------------------------------------------
# Fused Decoder kernel (one program per batch element)
# ------------------------------------------------------------------
def _decoder_kernel(x_ref, m_ref, w1_ref, b1_ref, w2_ref, b2_ref, mask_ref,
                    o_ref, up_buf, c1_buf, *, wp, ml, p1a):
    cin_pad, wbuf = up_buf.shape
    ch_pad = c1_buf.shape[0]
    mr = wbuf - ml - p1a
    base = ml - (wp + 1)          # tap (dy,dx) reads lanes [base+dy*wp+dx, +p1a)

    # Zero only the invariant halo lanes; the (ML, ML+P1A) interior is fully
    # overwritten every step.  Re-done every step on purpose: scratch is
    # per-core under megacore, so a program_id==0 gate would be wrong.
    up_buf[:, pl.ds(0, ml)] = jnp.zeros((cin_pad, ml), up_buf.dtype)
    up_buf[:, pl.ds(ml + p1a, mr)] = jnp.zeros((cin_pad, mr), up_buf.dtype)
    c1_buf[:, pl.ds(0, ml)] = jnp.zeros((ch_pad, ml), c1_buf.dtype)
    c1_buf[:, pl.ds(ml + p1a, mr)] = jnp.zeros((ch_pad, mr), c1_buf.dtype)

    # ---- stage 1: bilinear x2 upsample + zero pad ring, ONE MXU matmul.
    # Store start ML and width P1A are multiples of 128 -> unmasked vst.
    up = jnp.dot(x_ref[...], m_ref[...], preferred_element_type=jnp.float32)
    up_buf[:, pl.ds(ml, p1a)] = up.astype(up_buf.dtype)

    # ---- stage 2: conv1 3x3 (pad 1) + folded BN + ReLU -----------------------
    # 9 tap-accumulated matmuls on lane-shifted views; accumulator lives in
    # vregs -> no im2col buffer, no extra store pass.
    z1 = None
    for k, (dy, dx) in enumerate(_TAPS):
        t = jnp.dot(w1_ref[k], up_buf[:, pl.ds(base + dy * wp + dx, p1a)],
                    preferred_element_type=jnp.float32)
        z1 = t if z1 is None else z1 + t
    # bias + ReLU, then re-zero the pad ring / tail so it is valid zero padding
    # for conv2.  Padded output-channel rows have zero weights+bias -> stay 0.
    c1 = jnp.maximum(z1 + b1_ref[...], 0.0) * mask_ref[...]
    c1_buf[:, pl.ds(ml, p1a)] = c1.astype(c1_buf.dtype)

    # ---- stage 3: conv2 3x3 (pad 1) + folded BN + ReLU -----------------------
    z2 = None
    for k, (dy, dx) in enumerate(_TAPS):
        t = jnp.dot(w2_ref[k], c1_buf[:, pl.ds(base + dy * wp + dx, p1a)],
                    preferred_element_type=jnp.float32)
        z2 = t if z2 is None else z2 + t
    # Valid pixels live at the interior of the padded frame; wrapper crops.
    o_ref[...] = jnp.maximum(z2 + b2_ref[...], 0.0).astype(o_ref.dtype)


def _pack_conv_taps(w_hwio, cin_pad, cout_pad):
    # (3,3,Cin,Cout) HWIO -> (9, cout_pad, cin_pad) per-tap matrices; padded
    # rows/cols are zero so tap matmuls over padded channels are exact.
    kh, kw, cin, cout = w_hwio.shape
    w = jnp.transpose(w_hwio, (0, 1, 3, 2)).reshape(kh * kw, cout, cin)
    return jnp.pad(w, ((0, 0), (0, cout_pad - cout), (0, cin_pad - cin)))


def decoder_forward(x_nchw, params, *, compute_dtype=jnp.float32):
    # compute_dtype=jnp.bfloat16 halves bandwidth and uses v5e's bf16-native MXU
    # (accumulation stays f32); keep f32 for tight numerical parity.
    N, Cin, H, W = x_nchw.shape
    CH = params["w1"].shape[-1]
    Cout = params["w2"].shape[-1]
    Ho, Wo = 2 * H, 2 * W
    Hp, Wp = Ho + 2, Wo + 2
    P1 = Hp * Wp
    P1A = _round_up(P1, 128)                 # lane-aligned flattened frame width
    ML = _round_up(Wp + 1, 128)              # left margin (aligned interior store)
    MR = _round_up(Wp + 1, 128)              # right margin (covers max tap shift)
    WBUF = ML + P1A + MR
    cin_pad = _round_up(Cin, 8)
    ch_pad = _round_up(CH, 8)

    # Host-side layout plumbing (no compute): flatten + pad channels to 8.
    x_flat = x_nchw.reshape(N, Cin, H * W)
    if cin_pad != Cin:
        x_flat = jnp.pad(x_flat, ((0, 0), (0, cin_pad - Cin), (0, 0)))
    x_flat = x_flat.astype(compute_dtype)

    m_up = _upsample_pad_matrix(H, W, P1A).astype(compute_dtype)
    w1t = _pack_conv_taps(params["w1"], cin_pad, ch_pad).astype(compute_dtype)
    w2t = _pack_conv_taps(params["w2"], ch_pad, Cout).astype(compute_dtype)
    b1 = jnp.pad(params["b1"].astype(jnp.float32).reshape(CH, 1),
                 ((0, ch_pad - CH), (0, 0)))
    b2 = params["b2"].astype(jnp.float32).reshape(Cout, 1)
    mask = _interior_mask(Ho, Wo, P1A)

    # Explicit scoped-VMEM budget: double-buffered operands/output + scratch,
    # 2x headroom, floored at 32 MiB (safe on v5e/v6e/v7x), capped at 64 MiB.
    est = 2 * (_nbytes((cin_pad, H * W), compute_dtype)
               + _nbytes((H * W, P1A), compute_dtype)
               + _nbytes((9, ch_pad, cin_pad), compute_dtype)
               + _nbytes((9, Cout, ch_pad), compute_dtype)
               + _nbytes((ch_pad, 1), jnp.float32)
               + _nbytes((Cout, 1), jnp.float32)
               + _nbytes((1, P1A), jnp.float32)
               + _nbytes((Cout, P1A), jnp.float32))
    est += _nbytes((cin_pad, WBUF), compute_dtype)
    est += _nbytes((ch_pad, WBUF), compute_dtype)
    vmem_limit = int(min(64 * 2**20, max(32 * 2**20, 2 * est)))

    kernel = functools.partial(_decoder_kernel, wp=Wp, ml=ML, p1a=P1A)

    out_pad = pl.pallas_call(
        kernel,
        out_shape=jax.ShapeDtypeStruct((N, Cout, P1A), jnp.float32),
        grid=(N,),
        in_specs=[
            pl.BlockSpec((pl.Squeezed(), cin_pad, H * W), lambda n: (n, 0, 0)),
            pl.BlockSpec((H * W, P1A), lambda n: (0, 0)),
            pl.BlockSpec((9, ch_pad, cin_pad), lambda n: (0, 0, 0)),
            pl.BlockSpec((ch_pad, 1), lambda n: (0, 0)),
            pl.BlockSpec((9, Cout, ch_pad), lambda n: (0, 0, 0)),
            pl.BlockSpec((Cout, 1), lambda n: (0, 0)),
            pl.BlockSpec((1, P1A), lambda n: (0, 0)),
        ],
        out_specs=pl.BlockSpec((pl.Squeezed(), Cout, P1A),
                               lambda n: (n, 0, 0)),
        scratch_shapes=[
            pltpu.VMEM((cin_pad, WBUF), compute_dtype),   # upsampled frame + halo
            pltpu.VMEM((ch_pad, WBUF), compute_dtype),    # conv1 act frame + halo
        ],
        compiler_params=pltpu.CompilerParams(
            dimension_semantics=("parallel",),
            vmem_limit_bytes=vmem_limit),
    )(x_flat, m_up, w1t, b1, w2t, b2, mask)

    # Remaining glue to match the nn.Module contract (see TODO at top).
    return out_pad[:, :, :P1].reshape(N, Cout, Hp, Wp)[:, :, 1:Ho + 1, 1:Wo + 1]


# ------------------------------------------------------------------
# Parameter init (deterministic) + BN folding
# ------------------------------------------------------------------
def _fold_bn(w_hwio, gamma, beta, mean, var, eps=1e-5):
    scale = gamma / jnp.sqrt(var + eps)
    return w_hwio * scale[None, None, None, :], beta - mean * scale


def init_decoder_params(key, in_channels, channels, out_channels):
    ks = jax.random.split(key, 10)
    w1 = jax.random.normal(ks[0], (3, 3, in_channels, channels), jnp.float32) * 0.2
    w2 = jax.random.normal(ks[1], (3, 3, channels, out_channels), jnp.float32) * 0.2
    g1 = jax.random.uniform(ks[2], (channels,), minval=0.5, maxval=1.5)
    b1 = jax.random.normal(ks[3], (channels,)) * 0.1
    m1 = jax.random.normal(ks[4], (channels,)) * 0.1
    v1 = jax.random.uniform(ks[5], (channels,), minval=0.5, maxval=1.5)
    g2 = jax.random.uniform(ks[6], (out_channels,), minval=0.5, maxval=1.5)
    b2 = jax.random.normal(ks[7], (out_channels,)) * 0.1
    m2 = jax.random.normal(ks[8], (out_channels,)) * 0.1
    v2 = jax.random.uniform(ks[9], (out_channels,), minval=0.5, maxval=1.5)
    w1f, b1f = _fold_bn(w1, g1, b1, m1, v1)
    w2f, b2f = _fold_bn(w2, g2, b2, m2, v2)
    return {"w1": w1f, "b1": b1f, "w2": w2f, "b2": b2f}


# ------------------------------------------------------------------
# Pure-JAX reference
# ------------------------------------------------------------------
def decoder_reference(x_nchw, params):
    N, C, H, W = x_nchw.shape
    uh = jnp.asarray(_bilinear_matrix(2 * H, H))
    uw = jnp.asarray(_bilinear_matrix(2 * W, W))
    up = jnp.einsum("oh,nchw,pw->ncop", uh, x_nchw, uw)
    h = jnp.transpose(up, (0, 2, 3, 1))
    dn = ("NHWC", "HWIO", "NHWC")
    h = jax.nn.relu(jax.lax.conv_general_dilated(
        h, params["w1"], (1, 1), "SAME", dimension_numbers=dn) + params["b1"])
    h = jax.nn.relu(jax.lax.conv_general_dilated(
        h, params["w2"], (1, 1), "SAME", dimension_numbers=dn) + params["b2"])
    return jnp.transpose(h, (0, 3, 1, 2))


if __name__ == "__main__":
    N, IN_CH, CH, OUT_CH, H, W = 2, 4, 8, 4, 16, 16

    key = jax.random.PRNGKey(0)
    kx, kp = jax.random.split(key)
    x = jax.random.normal(kx, (N, IN_CH, H, W), jnp.float32)   # NCHW like PyTorch
    params = init_decoder_params(kp, IN_CH, CH, OUT_CH)

    out = jax.block_until_ready(decoder_forward(x, params))
    assert out.shape == (N, OUT_CH, 2 * H, 2 * W), out.shape

    ref = jax.block_until_ready(decoder_reference(x, params))
    np.testing.assert_allclose(np.asarray(out), np.asarray(ref),
                               rtol=1e-4, atol=2e-4)

    print("KERNEL_OK")
</pallas_src>

<mosaic_0001>
module attributes {stable_mosaic.version = 11 : i64} {
  func.func @_decoder_kernel(%arg0: i32, %arg1: memref<1x8x256xf32, #tpu.memory_space<vmem>>, %arg2: memref<256x1280xf32, #tpu.memory_space<vmem>>, %arg3: memref<9x8x8xf32, #tpu.memory_space<vmem>>, %arg4: memref<8x1xf32, #tpu.memory_space<vmem>>, %arg5: memref<9x4x8xf32, #tpu.memory_space<vmem>>, %arg6: memref<4x1xf32, #tpu.memory_space<vmem>>, %arg7: memref<1x1280xf32, #tpu.memory_space<vmem>>, %arg8: memref<1x4x1280xf32, #tpu.memory_space<vmem>>, %arg9: memref<8x1536xf32, #tpu.memory_space<vmem>>, %arg10: memref<8x1536xf32, #tpu.memory_space<vmem>>) attributes {dimension_semantics = [#tpu.dimension_semantics<parallel>], iteration_bounds = array<i64: 2>, scalar_prefetch = 0 : i64, scratch_operands = 2 : i64, tpu.core_type = #tpu.core_type<tc>, window_params = [{transform_indices = @transform_0, window_bounds = array<i64: 1, 8, 256>}, {pipeline_mode = #tpu.pipeline_mode<synchronous>, transform_indices = @transform_1, window_bounds = array<i64: 256, 1280>}, {pipeline_mode = #tpu.pipeline_mode<synchronous>, transform_indices = @transform_2, window_bounds = array<i64: 9, 8, 8>}, {pipeline_mode = #tpu.pipeline_mode<synchronous>, transform_indices = @transform_3, window_bounds = array<i64: 8, 1>}, {pipeline_mode = #tpu.pipeline_mode<synchronous>, transform_indices = @transform_4, window_bounds = array<i64: 9, 4, 8>}, {pipeline_mode = #tpu.pipeline_mode<synchronous>, transform_indices = @transform_5, window_bounds = array<i64: 4, 1>}, {pipeline_mode = #tpu.pipeline_mode<synchronous>, transform_indices = @transform_6, window_bounds = array<i64: 1, 1280>}, {transform_indices = @transform_7, window_bounds = array<i64: 1, 4, 1280>}]} {
    %cst = arith.constant 0.000000e+00 : f32
    %0 = vector.broadcast %cst : f32 to vector<8x128xf32>
    %c0 = arith.constant 0 : index
    %c0_0 = arith.constant 0 : index
    %1 = vector.load %arg9[%c0, %c0_0] : memref<8x1536xf32, #tpu.memory_space<vmem>>, vector<8x128xf32>
    tpu.vector_store %arg9[%c0, %c0_0], %0 {strides = array<i32>} : memref<8x1536xf32, #tpu.memory_space<vmem>>, vector<8x128xf32>,
    %cst_1 = arith.constant 0.000000e+00 : f32
    %2 = vector.broadcast %cst_1 : f32 to vector<8x128xf32>
    %c0_2 = arith.constant 0 : index
    %c1408 = arith.constant 1408 : index
    %3 = vector.load %arg9[%c0_2, %c1408] : memref<8x1536xf32, #tpu.memory_space<vmem>>, vector<8x128xf32>
    tpu.vector_store %arg9[%c0_2, %c1408], %2 {strides = array<i32>} : memref<8x1536xf32, #tpu.memory_space<vmem>>, vector<8x128xf32>,
    %cst_3 = arith.constant 0.000000e+00 : f32
    %4 = vector.broadcast %cst_3 : f32 to vector<8x128xf32>
    %c0_4 = arith.constant 0 : index
    %c0_5 = arith.constant 0 : index
    %5 = vector.load %arg10[%c0_4, %c0_5] : memref<8x1536xf32, #tpu.memory_space<vmem>>, vector<8x128xf32>
    tpu.vector_store %arg10[%c0_4, %c0_5], %4 {strides = array<i32>} : memref<8x1536xf32, #tpu.memory_space<vmem>>, vector<8x128xf32>,
    %cst_6 = arith.constant 0.000000e+00 : f32
    %6 = vector.broadcast %cst_6 : f32 to vector<8x128xf32>
    %c0_7 = arith.constant 0 : index
    %c1408_8 = arith.constant 1408 : index
    %7 = vector.load %arg10[%c0_7, %c1408_8] : memref<8x1536xf32, #tpu.memory_space<vmem>>, vector<8x128xf32>
    tpu.vector_store %arg10[%c0_7, %c1408_8], %6 {strides = array<i32>} : memref<8x1536xf32, #tpu.memory_space<vmem>>, vector<8x128xf32>,
    %c0_9 = arith.constant 0 : index
    %c0_10 = arith.constant 0 : index
    %c0_11 = arith.constant 0 : index
    %8 = vector.load %arg1[%c0_9, %c0_10, %c0_11] : memref<1x8x256xf32, #tpu.memory_space<vmem>>, vector<1x8x256xf32>
    %9 = vector.shape_cast %8 : vector<1x8x256xf32> to vector<8x256xf32>
    %c0_12 = arith.constant 0 : index
    %c0_13 = arith.constant 0 : index
    %10 = vector.load %arg2[%c0_12, %c0_13] : memref<256x1280xf32, #tpu.memory_space<vmem>>, vector<256x1280xf32>
    %cst_14 = arith.constant dense<0.000000e+00> : vector<8x1280xf32>
    %11 = tpu.matmul %9, %10, %cst_14 {dimension_numbers = #tpu.dot_dimension_numbers<[1], [0], [0], [1], [0, 0, 1, 1], [], []>} : vector<8x256xf32>, vector<256x1280xf32>, vector<8x1280xf32> -> vector<8x1280xf32>
    %c0_15 = arith.constant 0 : index
    %c128 = arith.constant 128 : index
    %12 = vector.load %arg9[%c0_15, %c128] : memref<8x1536xf32, #tpu.memory_space<vmem>>, vector<8x1280xf32>
    tpu.vector_store %arg9[%c0_15, %c128], %11 {strides = array<i32>} : memref<8x1536xf32, #tpu.memory_space<vmem>>, vector<8x1280xf32>,
    %c0_16 = arith.constant 0 : index
    %c0_17 = arith.constant 0 : index
    %c0_18 = arith.constant 0 : index
    %13 = vector.load %arg3[%c0_16, %c0_17, %c0_18] : memref<9x8x8xf32, #tpu.memory_space<vmem>>, vector<1x8x8xf32>
    %14 = vector.shape_cast %13 : vector<1x8x8xf32> to vector<8x8xf32>
    %c0_19 = arith.constant 0 : index
    %c93 = arith.constant 93 : index
    %15 = vector.load %arg9[%c0_19, %c93] : memref<8x1536xf32, #tpu.memory_space<vmem>>, vector<8x1280xf32>
    %cst_20 = arith.constant dense<0.000000e+00> : vector<8x1280xf32>
    %16 = tpu.matmul %14, %15, %cst_20 {dimension_numbers = #tpu.dot_dimension_numbers<[1], [0], [0], [1], [0, 0, 1, 1], [], []>} : vector<8x8xf32>, vector<8x1280xf32>, vector<8x1280xf32> -> vector<8x1280xf32>
    %c1 = arith.constant 1 : index
    %c0_21 = arith.constant 0 : index
    %c0_22 = arith.constant 0 : index
    %17 = vector.load %arg3[%c1, %c0_21, %c0_22] : memref<9x8x8xf32, #tpu.memory_space<vmem>>, vector<1x8x8xf32>
    %18 = vector.shape_cast %17 : vector<1x8x8xf32> to vector<8x8xf32>
    %c0_23 = arith.constant 0 : index
    %c94 = arith.constant 94 : index
    %19 = vector.load %arg9[%c0_23, %c94] : memref<8x1536xf32, #tpu.memory_space<vmem>>, vector<8x1280xf32>
    %cst_24 = arith.constant dense<0.000000e+00> : vector<8x1280xf32>
    %20 = tpu.matmul %18, %19, %cst_24 {dimension_numbers = #tpu.dot_dimension_numbers<[1], [0], [0], [1], [0, 0, 1, 1], [], []>} : vector<8x8xf32>, vector<8x1280xf32>, vector<8x1280xf32> -> vector<8x1280xf32>
    %21 = arith.addf %16, %20 : vector<8x1280xf32>
    %c2 = arith.constant 2 : index
    %c0_25 = arith.constant 0 : index
    %c0_26 = arith.constant 0 : index
    %22 = vector.load %arg3[%c2, %c0_25, %c0_26] : memref<9x8x8xf32, #tpu.memory_space<vmem>>, vector<1x8x8xf32>
    %23 = vector.shape_cast %22 : vector<1x8x8xf32> to vector<8x8xf32>
    %c0_27 = arith.constant 0 : index
    %c95 = arith.constant 95 : index
    %24 = vector.load %arg9[%c0_27, %c95] : memref<8x1536xf32, #tpu.memory_space<vmem>>, vector<8x1280xf32>
    %cst_28 = arith.constant dense<0.000000e+00> : vector<8x1280xf32>
    %25 = tpu.matmul %23, %24, %cst_28 {dimension_numbers = #tpu.dot_dimension_numbers<[1], [0], [0], [1], [0, 0, 1, 1], [], []>} : vector<8x8xf32>, vector<8x1280xf32>, vector<8x1280xf32> -> vector<8x1280xf32>
    %26 = arith.addf %21, %25 : vector<8x1280xf32>
    %c3 = arith.constant 3 : index
    %c0_29 = arith.constant 0 : index
    %c0_30 = arith.constant 0 : index
    %27 = vector.load %arg3[%c3, %c0_29, %c0_30] : memref<9x8x8xf32, #tpu.memory_space<vmem>>, vector<1x8x8xf32>
    %28 = vector.shape_cast %27 : vector<1x8x8xf32> to vector<8x8xf32>
    %c0_31 = arith.constant 0 : index
    %c127 = arith.constant 127 : index
    %29 = vector.load %arg9[%c0_31, %c127] : memref<8x1536xf32, #tpu.memory_space<vmem>>, vector<8x1280xf32>
    %cst_32 = arith.constant dense<0.000000e+00> : vector<8x1280xf32>
    %30 = tpu.matmul %28, %29, %cst_32 {dimension_numbers = #tpu.dot_dimension_numbers<[1], [0], [0], [1], [0, 0, 1, 1], [], []>} : vector<8x8xf32>, vector<8x1280xf32>, vector<8x1280xf32> -> vector<8x1280xf32>
    %31 = arith.addf %26, %30 : vector<8x1280xf32>
    %c4 = arith.constant 4 : index
    %c0_33 = arith.constant 0 : index
    %c0_34 = arith.constant 0 : index
    %32 = vector.load %arg3[%c4, %c0_33, %c0_34] : memref<9x8x8xf32, #tpu.memory_space<vmem>>, vector<1x8x8xf32>
    %33 = vector.shape_cast %32 : vector<1x8x8xf32> to vector<8x8xf32>
    %c0_35 = arith.constant 0 : index
    %c128_36 = arith.constant 128 : index
    %34 = vector.load %arg9[%c0_35, %c128_36] : memref<8x1536xf32, #tpu.memory_space<vmem>>, vector<8x1280xf32>
    %cst_37 = arith.constant dense<0.000000e+00> : vector<8x1280xf32>
    %35 = tpu.matmul %33, %34, %cst_37 {dimension_numbers = #tpu.dot_dimension_numbers<[1], [0], [0], [1], [0, 0, 1, 1], [], []>} : vector<8x8xf32>, vector<8x1280xf32>, vector<8x1280xf32> -> vector<8x1280xf32>
    %36 = arith.addf %31, %35 : vector<8x1280xf32>
    %c5 = arith.constant 5 : index
    %c0_38 = arith.constant 0 : index
    %c0_39 = arith.constant 0 : index
    %37 = vector.load %arg3[%c5, %c0_38, %c0_39] : memref<9x8x8xf32, #tpu.memory_space<vmem>>, vector<1x8x8xf32>
    %38 = vector.shape_cast %37 : vector<1x8x8xf32> to vector<8x8xf32>
    %c0_40 = arith.constant 0 : index
    %c129 = arith.constant 129 : index
    %39 = vector.load %arg9[%c0_40, %c129] : memref<8x1536xf32, #tpu.memory_space<vmem>>, vector<8x1280xf32>
    %cst_41 = arith.constant dense<0.000000e+00> : vector<8x1280xf32>
    %40 = tpu.matmul %38, %39, %cst_41 {dimension_numbers = #tpu.dot_dimension_numbers<[1], [0], [0], [1], [0, 0, 1, 1], [], []>} : vector<8x8xf32>, vector<8x1280xf32>, vector<8x1280xf32> -> vector<8x1280xf32>
    %41 = arith.addf %36, %40 : vector<8x1280xf32>
    %c6 = arith.constant 6 : index
    %c0_42 = arith.constant 0 : index
    %c0_43 = arith.constant 0 : index
    %42 = vector.load %arg3[%c6, %c0_42, %c0_43] : memref<9x8x8xf32, #tpu.memory_space<vmem>>, vector<1x8x8xf32>
    %43 = vector.shape_cast %42 : vector<1x8x8xf32> to vector<8x8xf32>
    %c0_44 = arith.constant 0 : index
    %c161 = arith.constant 161 : index
    %44 = vector.load %arg9[%c0_44, %c161] : memref<8x1536xf32, #tpu.memory_space<vmem>>, vector<8x1280xf32>
    %cst_45 = arith.constant dense<0.000000e+00> : vector<8x1280xf32>
    %45 = tpu.matmul %43, %44, %cst_45 {dimension_numbers = #tpu.dot_dimension_numbers<[1], [0], [0], [1], [0, 0, 1, 1], [], []>} : vector<8x8xf32>, vector<8x1280xf32>, vector<8x1280xf32> -> vector<8x1280xf32>
    %46 = arith.addf %41, %45 : vector<8x1280xf32>
    %c7 = arith.constant 7 : index
    %c0_46 = arith.constant 0 : index
    %c0_47 = arith.constant 0 : index
    %47 = vector.load %arg3[%c7, %c0_46, %c0_47] : memref<9x8x8xf32, #tpu.memory_space<vmem>>, vector<1x8x8xf32>
    %48 = vector.shape_cast %47 : vector<1x8x8xf32> to vector<8x8xf32>
    %c0_48 = arith.constant 0 : index
    %c162 = arith.constant 162 : index
    %49 = vector.load %arg9[%c0_48, %c162] : memref<8x1536xf32, #tpu.memory_space<vmem>>, vector<8x1280xf32>
    %cst_49 = arith.constant dense<0.000000e+00> : vector<8x1280xf32>
    %50 = tpu.matmul %48, %49, %cst_49 {dimension_numbers = #tpu.dot_dimension_numbers<[1], [0], [0], [1], [0, 0, 1, 1], [], []>} : vector<8x8xf32>, vector<8x1280xf32>, vector<8x1280xf32> -> vector<8x1280xf32>
    %51 = arith.addf %46, %50 : vector<8x1280xf32>
    %c8 = arith.constant 8 : index
    %c0_50 = arith.constant 0 : index
    %c0_51 = arith.constant 0 : index
    %52 = vector.load %arg3[%c8, %c0_50, %c0_51] : memref<9x8x8xf32, #tpu.memory_space<vmem>>, vector<1x8x8xf32>
    %53 = vector.shape_cast %52 : vector<1x8x8xf32> to vector<8x8xf32>
    %c0_52 = arith.constant 0 : index
    %c163 = arith.constant 163 : index
    %54 = vector.load %arg9[%c0_52, %c163] : memref<8x1536xf32, #tpu.memory_space<vmem>>, vector<8x1280xf32>
    %cst_53 = arith.constant dense<0.000000e+00> : vector<8x1280xf32>
    %55 = tpu.matmul %53, %54, %cst_53 {dimension_numbers = #tpu.dot_dimension_numbers<[1], [0], [0], [1], [0, 0, 1, 1], [], []>} : vector<8x8xf32>, vector<8x1280xf32>, vector<8x1280xf32> -> vector<8x1280xf32>
    %56 = arith.addf %51, %55 : vector<8x1280xf32>
    %c0_54 = arith.constant 0 : index
    %c0_55 = arith.constant 0 : index
    %57 = vector.load %arg4[%c0_54, %c0_55] : memref<8x1xf32, #tpu.memory_space<vmem>>, vector<8x1xf32>
    %58 = vector.broadcast %57 : vector<8x1xf32> to vector<8x1280xf32>
    %59 = arith.addf %56, %58 : vector<8x1280xf32>
    %cst_56 = arith.constant 0.000000e+00 : f32
    %60 = vector.broadcast %cst_56 : f32 to vector<8x1280xf32>
    %61 = arith.maximumf %59, %60 : vector<8x1280xf32>
    %c0_57 = arith.constant 0 : index
    %c0_58 = arith.constant 0 : index
    %62 = vector.load %arg7[%c0_57, %c0_58] : memref<1x1280xf32, #tpu.memory_space<vmem>>, vector<1x1280xf32>
    %63 = vector.broadcast %62 : vector<1x1280xf32> to vector<8x1280xf32>
    %64 = arith.mulf %61, %63 : vector<8x1280xf32>
    %c0_59 = arith.constant 0 : index
    %c128_60 = arith.constant 128 : index
    %65 = vector.load %arg10[%c0_59, %c128_60] : memref<8x1536xf32, #tpu.memory_space<vmem>>, vector<8x1280xf32>
    tpu.vector_store %arg10[%c0_59, %c128_60], %64 {strides = array<i32>} : memref<8x1536xf32, #tpu.memory_space<vmem>>, vector<8x1280xf32>,
    %c0_61 = arith.constant 0 : index
    %c0_62 = arith.constant 0 : index
    %c0_63 = arith.constant 0 : index
    %66 = vector.load %arg5[%c0_61, %c0_62, %c0_63] : memref<9x4x8xf32, #tpu.memory_space<vmem>>, vector<1x4x8xf32>
    %67 = vector.shape_cast %66 : vector<1x4x8xf32> to vector<4x8xf32>
    %c0_64 = arith.constant 0 : index
    %c93_65 = arith.constant 93 : index
    %68 = vector.load %arg10[%c0_64, %c93_65] : memref<8x1536xf32, #tpu.memory_space<vmem>>, vector<8x1280xf32>
    %cst_66 = arith.constant dense<0.000000e+00> : vector<4x1280xf32>
    %69 = tpu.matmul %67, %68, %cst_66 {dimension_numbers = #tpu.dot_dimension_numbers<[1], [0], [0], [1], [0, 0, 1, 1], [], []>} : vector<4x8xf32>, vector<8x1280xf32>, vector<4x1280xf32> -> vector<4x1280xf32>
    %c1_67 = arith.constant 1 : index
    %c0_68 = arith.constant 0 : index
    %c0_69 = arith.constant 0 : index
    %70 = vector.load %arg5[%c1_67, %c0_68, %c0_69] : memref<9x4x8xf32, #tpu.memory_space<vmem>>, vector<1x4x8xf32>
    %71 = vector.shape_cast %70 : vector<1x4x8xf32> to vector<4x8xf32>
    %c0_70 = arith.constant 0 : index
    %c94_71 = arith.constant 94 : index
    %72 = vector.load %arg10[%c0_70, %c94_71] : memref<8x1536xf32, #tpu.memory_space<vmem>>, vector<8x1280xf32>
    %cst_72 = arith.constant dense<0.000000e+00> : vector<4x1280xf32>
    %73 = tpu.matmul %71, %72, %cst_72 {dimension_numbers = #tpu.dot_dimension_numbers<[1], [0], [0], [1], [0, 0, 1, 1], [], []>} : vector<4x8xf32>, vector<8x1280xf32>, vector<4x1280xf32> -> vector<4x1280xf32>
    %74 = arith.addf %69, %73 : vector<4x1280xf32>
    %c2_73 = arith.constant 2 : index
    %c0_74 = arith.constant 0 : index
    %c0_75 = arith.constant 0 : index
    %75 = vector.load %arg5[%c2_73, %c0_74, %c0_75] : memref<9x4x8xf32, #tpu.memory_space<vmem>>, vector<1x4x8xf32>
    %76 = vector.shape_cast %75 : vector<1x4x8xf32> to vector<4x8xf32>
    %c0_76 = arith.constant 0 : index
    %c95_77 = arith.constant 95 : index
    %77 = vector.load %arg10[%c0_76, %c95_77] : memref<8x1536xf32, #tpu.memory_space<vmem>>, vector<8x1280xf32>
    %cst_78 = arith.constant dense<0.000000e+00> : vector<4x1280xf32>
    %78 = tpu.matmul %76, %77, %cst_78 {dimension_numbers = #tpu.dot_dimension_numbers<[1], [0], [0], [1], [0, 0, 1, 1], [], []>} : vector<4x8xf32>, vector<8x1280xf32>, vector<4x1280xf32> -> vector<4x1280xf32>
    %79 = arith.addf %74, %78 : vector<4x1280xf32>
    %c3_79 = arith.constant 3 : index
    %c0_80 = arith.constant 0 : index
    %c0_81 = arith.constant 0 : index
    %80 = vector.load %arg5[%c3_79, %c0_80, %c0_81] : memref<9x4x8xf32, #tpu.memory_space<vmem>>, vector<1x4x8xf32>
    %81 = vector.shape_cast %80 : vector<1x4x8xf32> to vector<4x8xf32>
    %c0_82 = arith.constant 0 : index
    %c127_83 = arith.constant 127 : index
    %82 = vector.load %arg10[%c0_82, %c127_83] : memref<8x1536xf32, #tpu.memory_space<vmem>>, vector<8x1280xf32>
    %cst_84 = arith.constant dense<0.000000e+00> : vector<4x1280xf32>
    %83 = tpu.matmul %81, %82, %cst_84 {dimension_numbers = #tpu.dot_dimension_numbers<[1], [0], [0], [1], [0, 0, 1, 1], [], []>} : vector<4x8xf32>, vector<8x1280xf32>, vector<4x1280xf32> -> vector<4x1280xf32>
    %84 = arith.addf %79, %83 : vector<4x1280xf32>
    %c4_85 = arith.constant 4 : index
    %c0_86 = arith.constant 0 : index
    %c0_87 = arith.constant 0 : index
    %85 = vector.load %arg5[%c4_85, %c0_86, %c0_87] : memref<9x4x8xf32, #tpu.memory_space<vmem>>, vector<1x4x8xf32>
    %86 = vector.shape_cast %85 : vector<1x4x8xf32> to vector<4x8xf32>
    %c0_88 = arith.constant 0 : index
    %c128_89 = arith.constant 128 : index
    %87 = vector.load %arg10[%c0_88, %c128_89] : memref<8x1536xf32, #tpu.memory_space<vmem>>, vector<8x1280xf32>
    %cst_90 = arith.constant dense<0.000000e+00> : vector<4x1280xf32>
    %88 = tpu.matmul %86, %87, %cst_90 {dimension_numbers = #tpu.dot_dimension_numbers<[1], [0], [0], [1], [0, 0, 1, 1], [], []>} : vector<4x8xf32>, vector<8x1280xf32>, vector<4x1280xf32> -> vector<4x1280xf32>
    %89 = arith.addf %84, %88 : vector<4x1280xf32>
    %c5_91 = arith.constant 5 : index
    %c0_92 = arith.constant 0 : index
    %c0_93 = arith.constant 0 : index
    %90 = vector.load %arg5[%c5_91, %c0_92, %c0_93] : memref<9x4x8xf32, #tpu.memory_space<vmem>>, vector<1x4x8xf32>
    %91 = vector.shape_cast %90 : vector<1x4x8xf32> to vector<4x8xf32>
    %c0_94 = arith.constant 0 : index
    %c129_95 = arith.constant 129 : index
    %92 = vector.load %arg10[%c0_94, %c129_95] : memref<8x1536xf32, #tpu.memory_space<vmem>>, vector<8x1280xf32>
    %cst_96 = arith.constant dense<0.000000e+00> : vector<4x1280xf32>
    %93 = tpu.matmul %91, %92, %cst_96 {dimension_numbers = #tpu.dot_dimension_numbers<[1], [0], [0], [1], [0, 0, 1, 1], [], []>} : vector<4x8xf32>, vector<8x1280xf32>, vector<4x1280xf32> -> vector<4x1280xf32>
    %94 = arith.addf %89, %93 : vector<4x1280xf32>
    %c6_97 = arith.constant 6 : index
    %c0_98 = arith.constant 0 : index
    %c0_99 = arith.constant 0 : index
    %95 = vector.load %arg5[%c6_97, %c0_98, %c0_99] : memref<9x4x8xf32, #tpu.memory_space<vmem>>, vector<1x4x8xf32>
    %96 = vector.shape_cast %95 : vector<1x4x8xf32> to vector<4x8xf32>
    %c0_100 = arith.constant 0 : index
    %c161_101 = arith.constant 161 : index
    %97 = vector.load %arg10[%c0_100, %c161_101] : memref<8x1536xf32, #tpu.memory_space<vmem>>, vector<8x1280xf32>
    %cst_102 = arith.constant dense<0.000000e+00> : vector<4x1280xf32>
    %98 = tpu.matmul %96, %97, %cst_102 {dimension_numbers = #tpu.dot_dimension_numbers<[1], [0], [0], [1], [0, 0, 1, 1], [], []>} : vector<4x8xf32>, vector<8x1280xf32>, vector<4x1280xf32> -> vector<4x1280xf32>
    %99 = arith.addf %94, %98 : vector<4x1280xf32>
    %c7_103 = arith.constant 7 : index
    %c0_104 = arith.constant 0 : index
    %c0_105 = arith.constant 0 : index
    %100 = vector.load %arg5[%c7_103, %c0_104, %c0_105] : memref<9x4x8xf32, #tpu.memory_space<vmem>>, vector<1x4x8xf32>
    %101 = vector.shape_cast %100 : vector<1x4x8xf32> to vector<4x8xf32>
    %c0_106 = arith.constant 0 : index
    %c162_107 = arith.constant 162 : index
    %102 = vector.load %arg10[%c0_106, %c162_107] : memref<8x1536xf32, #tpu.memory_space<vmem>>, vector<8x1280xf32>
    %cst_108 = arith.constant dense<0.000000e+00> : vector<4x1280xf32>
    %103 = tpu.matmul %101, %102, %cst_108 {dimension_numbers = #tpu.dot_dimension_numbers<[1], [0], [0], [1], [0, 0, 1, 1], [], []>} : vector<4x8xf32>, vector<8x1280xf32>, vector<4x1280xf32> -> vector<4x1280xf32>
    %104 = arith.addf %99, %103 : vector<4x1280xf32>
    %c8_109 = arith.constant 8 : index
    %c0_110 = arith.constant 0 : index
    %c0_111 = arith.constant 0 : index
    %105 = vector.load %arg5[%c8_109, %c0_110, %c0_111] : memref<9x4x8xf32, #tpu.memory_space<vmem>>, vector<1x4x8xf32>
    %106 = vector.shape_cast %105 : vector<1x4x8xf32> to vector<4x8xf32>
    %c0_112 = arith.constant 0 : index
    %c163_113 = arith.constant 163 : index
    %107 = vector.load %arg10[%c0_112, %c163_113] : memref<8x1536xf32, #tpu.memory_space<vmem>>, vector<8x1280xf32>
    %cst_114 = arith.constant dense<0.000000e+00> : vector<4x1280xf32>
    %108 = tpu.matmul %106, %107, %cst_114 {dimension_numbers = #tpu.dot_dimension_numbers<[1], [0], [0], [1], [0, 0, 1, 1], [], []>} : vector<4x8xf32>, vector<8x1280xf32>, vector<4x1280xf32> -> vector<4x1280xf32>
    %109 = arith.addf %104, %108 : vector<4x1280xf32>
    %c0_115 = arith.constant 0 : index
    %c0_116 = arith.constant 0 : index
    %110 = vector.load %arg6[%c0_115, %c0_116] : memref<4x1xf32, #tpu.memory_space<vmem>>, vector<4x1xf32>
    %111 = vector.broadcast %110 : vector<4x1xf32> to vector<4x1280xf32>
    %112 = arith.addf %109, %111 : vector<4x1280xf32>
    %cst_117 = arith.constant 0.000000e+00 : f32
    %113 = vector.broadcast %cst_117 : f32 to vector<4x1280xf32>
    %114 = arith.maximumf %112, %113 : vector<4x1280xf32>
    %c0_118 = arith.constant 0 : index
    %c0_119 = arith.constant 0 : index
    %c0_120 = arith.constant 0 : index
    %115 = vector.load %arg8[%c0_118, %c0_119, %c0_120] : memref<1x4x1280xf32, #tpu.memory_space<vmem>>, vector<1x4x1280xf32>
    %116 = vector.shape_cast %115 : vector<1x4x1280xf32> to vector<4x1280xf32>
    %117 = vector.shape_cast %114 : vector<4x1280xf32> to vector<1x4x1280xf32>
    tpu.vector_store %arg8[%c0_118, %c0_119, %c0_120], %117 {strides = array<i32>} : memref<1x4x1280xf32, #tpu.memory_space<vmem>>, vector<1x4x1280xf32>,
    return
  }
  func.func @transform_0(%arg0: i32) -> (i32, i32, i32) {
    %c0_i32 = arith.constant 0 : i32
    %c0_i32_0 = arith.constant 0 : i32
    %c0_i32_1 = arith.constant 0 : i32
    return %arg0, %c0_i32, %c0_i32_0 : i32, i32, i32
  }
  func.func @transform_1(%arg0: i32) -> (i32, i32) {
    %c0_i32 = arith.constant 0 : i32
    %c0_i32_0 = arith.constant 0 : i32
    %c0_i32_1 = arith.constant 0 : i32
    return %c0_i32, %c0_i32_0 : i32, i32
  }
  func.func @transform_2(%arg0: i32) -> (i32, i32, i32) {
    %c0_i32 = arith.constant 0 : i32
    %c0_i32_0 = arith.constant 0 : i32
    %c0_i32_1 = arith.constant 0 : i32
    %c0_i32_2 = arith.constant 0 : i32
    return %c0_i32, %c0_i32_0, %c0_i32_1 : i32, i32, i32
  }
  func.func @transform_3(%arg0: i32) -> (i32, i32) {
    %c0_i32 = arith.constant 0 : i32
    %c0_i32_0 = arith.constant 0 : i32
    %c0_i32_1 = arith.constant 0 : i32
    return %c0_i32, %c0_i32_0 : i32, i32
  }
  func.func @transform_4(%arg0: i32) -> (i32, i32, i32) {
    %c0_i32 = arith.constant 0 : i32
    %c0_i32_0 = arith.constant 0 : i32
    %c0_i32_1 = arith.constant 0 : i32
    %c0_i32_2 = arith.constant 0 : i32
    return %c0_i32, %c0_i32_0, %c0_i32_1 : i32, i32, i32
  }
  func.func @transform_5(%arg0: i32) -> (i32, i32) {
    %c0_i32 = arith.constant 0 : i32
    %c0_i32_0 = arith.constant 0 : i32
    %c0_i32_1 = arith.constant 0 : i32
    return %c0_i32, %c0_i32_0 : i32, i32
  }
  func.func @transform_6(%arg0: i32) -> (i32, i32) {
    %c0_i32 = arith.constant 0 : i32
    %c0_i32_0 = arith.constant 0 : i32
    %c0_i32_1 = arith.constant 0 : i32
    return %c0_i32, %c0_i32_0 : i32, i32
  }
  func.func @transform_7(%arg0: i32) -> (i32, i32, i32) {
    %c0_i32 = arith.constant 0 : i32
    %c0_i32_0 = arith.constant 0 : i32
    %c0_i32_1 = arith.constant 0 : i32
    return %arg0, %c0_i32, %c0_i32_0 : i32, i32, i32
  }
}

</mosaic_0001>

<llo_original>
// kernel: tpu_custom_call.1
$region0: #{tpu_custom_call.1}
  #allocation0 [shape = 'u32[]', space=smem, size = 0x4, offset = 0x4, fixed_abs, tag = 'smem constant byte address 0x4 - core index']
  #allocation1 [shape = 'u32[72,128]{1,0:T(1,128)}', space=vmem, size = 0x9000, scoped, tag = 'internal scratch']
  #allocation2 [shape = 'f32[8,1536]{1,0:T(8,128)}', space=vmem, size = 0xc000, scoped, tag = 'scratch operand']
  #allocation3 [shape = 'f32[8,1536]{1,0:T(8,128)}', space=vmem, size = 0xc000, scoped, tag = 'scratch operand']
  %s0 = inlined_call_operand.hbm [shape: f32[2,8,256], index: 0, kind: input, shape index: {}]
  %s1 = inlined_call_operand.hbm [shape: f32[256,1280], index: 1, kind: input, shape index: {}]
  %s2 = inlined_call_operand.vmem [shape: f32[9,8,8], index: 2, kind: input, shape index: {}]
  %s3 = inlined_call_operand.vmem [shape: f32[8,1], index: 3, kind: input, shape index: {}]
  %s4 = inlined_call_operand.vmem [shape: f32[9,4,8], index: 4, kind: input, shape index: {}]
  %s5 = inlined_call_operand.vmem [shape: f32[4,1], index: 5, kind: input, shape index: {}]
  %s6 = inlined_call_operand.hbm [shape: f32[1,1280], index: 6, kind: input, shape index: {}]
  %s7 = inlined_call_operand.hbm [shape: f32[2,4,1280], index: 7, kind: output, shape index: {}]
  %s8 = sld [smem:[#allocation0]]
  $region73: #{tpu_custom_call.1} parent=0
    _
  %s10 = ssub.s32 1, %s8
  %s11 = scalar_select 0, %s10, %s8
  $region1: #{tpu_custom_call.1} parent=0
    #allocation4 [shape = 'u8[16384]{0}', space=vmem, size = 0x4000, scoped, tag = 'input window, operand 0']
    #allocation5 [shape = 's32[2]{0}', space=sflag, size = 0x8, scoped, tag = 'scoped memory for tpu_custom_call.1']
    #allocation6 [shape = 's32[2]{0}', space=sflag, size = 0x8, scoped, tag = 'scoped memory for tpu_custom_call.1']
    #allocation7 [shape = 'u8[1310720]{0}', space=vmem, size = 0x140000, scoped, tag = 'input window, operand 1, single buffered']
    #allocation8 [shape = 's32[1]{0}', space=sflag, size = 0x4, scoped, tag = 'scoped memory for tpu_custom_call.1']
    #allocation9 [shape = 'u8[5120]{0}', space=vmem, size = 0x1400, scoped, tag = 'input window, operand 6, single buffered']
    #allocation10 [shape = 'u8[40960]{0}', space=vmem, size = 0xa000, scoped, tag = 'output window, operand 0']
    %12 = vsyncpa [#allocation5], 0
    %s13 = scalar_lea.sflag [#allocation5], 1
    %14 = vsyncpa %s13, 0
    %15 = vsyncpa [#allocation8], 0
    %16 = vsyncpa [#allocation6], 0
    %s17 = scalar_lea.sflag [#allocation6], 1
    %18 = vsyncpa %s17, 0
    loop: start=0, step=1, limit=4
    $region2: #{tpu_custom_call.1} parent=1 // loop_pre_header
      _
    $region3: #{tpu_custom_call.1} parent=1 // loop_header
      %s20 = sphi 0, %s24
      %p21 = scmp.ge.s32.totalorder %s20, 4
      %s30 = sphi 0, %s32
      %s33 = sphi 0, %s30
      %s34 = sphi 0, %s33
      %s50 = sphi 0, %s34
      %s54 = sphi 0, %s54
      %s56 = sphi 0, %s54
      %s57 = sphi 0, %s56
      %s71 = sphi 0, %s57
      %s75 = sphi 0, %s75
      %s77 = sphi 0, %s75
      %s78 = sphi 0, %s77
      %s92 = sphi 0, %s78
      %s96 = sphi 0, %s96
      %s98 = sphi 0, %s96
      %s99 = sphi 0, %s98
      %s113 = sphi 0, %s99
      %s117 = sphi 0, %s117
      %s119 = sphi 0, %s117
      %s120 = sphi 0, %s119
      %s134 = sphi 0, %s120
      %s138 = sphi 0, %s138
      %s140 = sphi 0, %s138
      %s141 = sphi 0, %s140
      %s155 = sphi 0, %s141
      %s159 = sphi 0, %s159
      %s161 = sphi 0, %s159
      %s162 = sphi 0, %s161
      %s176 = sphi 0, %s162
      %s182 = sphi 0, %s184
      %s185 = sphi 0, %s182
      %s186 = sphi 0, %s185
      %s202 = sphi 0, %s186
    $region4: #{tpu_custom_call.1} parent=1 // loop_header_branch
      %23 = sbr.rel (%p21) target = $region8
    $region5: #{tpu_custom_call.1} parent=1 // loop_body
      %s25 = ssub.s32 %s20, 1
      %s26 = ssub.s32 %s20, 2
      %s27 = sadd.s32 %s20, 1
      %s28 = ssub.s32 %s20, %s27
      %p29 = scmp.eq.s32.totalorder %s28, 0
      %s31 = sadd.s32 %s30, 1
      %s32 = scalar_select %p29, %s30, %s31
      %p35 = pneg %p29
      %p36 = scmp.eq.s32.totalorder %s20, 1
      %p37 = por %p35, %p36
      %p38 = scmp.ne.s32.totalorder %s30, %s33
      %p39 = scmp.eq.s32.totalorder %s20, 0
      %p40 = por %p38, %p39
      %p41 = scmp.ne.s32.totalorder %s30, %s33
      %p42 = scmp.eq.s32.totalorder %s25, 1
      %p43 = por %p41, %p42
      %p44 = scmp.ne.s32.totalorder %s33, %s34
      %p45 = scmp.eq.s32.totalorder %s25, 0
      %p46 = por %p44, %p45
      %p47 = scmp.ne.s32.totalorder %s33, %s34
      %p48 = scmp.eq.s32.totalorder %s26, 1
      %p49 = por %p47, %p48
      %p51 = scmp.ne.s32.totalorder %s34, %s50
      %p52 = scmp.eq.s32.totalorder %s26, 0
      %p53 = por %p51, %p52
      %s55 = sadd.s32 %s54, 1
      %p58 = scmp.eq.s32.totalorder %s20, 1
      %p59 = scmp.ne.s32.totalorder %s54, %s56
      %p60 = scmp.eq.s32.totalorder %s20, 0
      %p61 = por %p59, %p60
      %p62 = scmp.ne.s32.totalorder %s54, %s56
      %p63 = scmp.eq.s32.totalorder %s25, 1
      %p64 = por %p62, %p63
      %p65 = scmp.ne.s32.totalorder %s56, %s57
      %p66 = scmp.eq.s32.totalorder %s25, 0
      %p67 = por %p65, %p66
      %p68 = scmp.ne.s32.totalorder %s56, %s57
      %p69 = scmp.eq.s32.totalorder %s26, 1
      %p70 = por %p68, %p69
      %p72 = scmp.ne.s32.totalorder %s57, %s71
      %p73 = scmp.eq.s32.totalorder %s26, 0
      %p74 = por %p72, %p73
      %s76 = sadd.s32 %s75, 1
      %p79 = scmp.eq.s32.totalorder %s20, 1
      %p80 = scmp.ne.s32.totalorder %s75, %s77
      %p81 = scmp.eq.s32.totalorder %s20, 0
      %p82 = por %p80, %p81
      %p83 = scmp.ne.s32.totalorder %s75, %s77
      %p84 = scmp.eq.s32.totalorder %s25, 1
      %p85 = por %p83, %p84
      %p86 = scmp.ne.s32.totalorder %s77, %s78
      %p87 = scmp.eq.s32.totalorder %s25, 0
      %p88 = por %p86, %p87
      %p89 = scmp.ne.s32.totalorder %s77, %s78
      %p90 = scmp.eq.s32.totalorder %s26, 1
      %p91 = por %p89, %p90
      %p93 = scmp.ne.s32.totalorder %s78, %s92
      %p94 = scmp.eq.s32.totalorder %s26, 0
      %p95 = por %p93, %p94
      %s97 = sadd.s32 %s96, 1
      %p100 = scmp.eq.s32.totalorder %s20, 1
      %p101 = scmp.ne.s32.totalorder %s96, %s98
      %p102 = scmp.eq.s32.totalorder %s20, 0
      %p103 = por %p101, %p102
      %p104 = scmp.ne.s32.totalorder %s96, %s98
      %p105 = scmp.eq.s32.totalorder %s25, 1
      %p106 = por %p104, %p105
      %p107 = scmp.ne.s32.totalorder %s98, %s99
      %p108 = scmp.eq.s32.totalorder %s25, 0
      %p109 = por %p107, %p108
      %p110 = scmp.ne.s32.totalorder %s98, %s99
      %p111 = scmp.eq.s32.totalorder %s26, 1
      %p112 = por %p110, %p111
      %p114 = scmp.ne.s32.totalorder %s99, %s113
      %p115 = scmp.eq.s32.totalorder %s26, 0
      %p116 = por %p114, %p115
      %s118 = sadd.s32 %s117, 1
      %p121 = scmp.eq.s32.totalorder %s20, 1
      %p122 = scmp.ne.s32.totalorder %s117, %s119
      %p123 = scmp.eq.s32.totalorder %s20, 0
      %p124 = por %p122, %p123
      %p125 = scmp.ne.s32.totalorder %s117, %s119
      %p126 = scmp.eq.s32.totalorder %s25, 1
      %p127 = por %p125, %p126
      %p128 = scmp.ne.s32.totalorder %s119, %s120
      %p129 = scmp.eq.s32.totalorder %s25, 0
      %p130 = por %p128, %p129
      %p131 = scmp.ne.s32.totalorder %s119, %s120
      %p132 = scmp.eq.s32.totalorder %s26, 1
      %p133 = por %p131, %p132
      %p135 = scmp.ne.s32.totalorder %s120, %s134
      %p136 = scmp.eq.s32.totalorder %s26, 0
      %p137 = por %p135, %p136
      %s139 = sadd.s32 %s138, 1
      %p142 = scmp.eq.s32.totalorder %s20, 1
      %p143 = scmp.ne.s32.totalorder %s138, %s140
      %p144 = scmp.eq.s32.totalorder %s20, 0
      %p145 = por %p143, %p144
      %p146 = scmp.ne.s32.totalorder %s138, %s140
      %p147 = scmp.eq.s32.totalorder %s25, 1
      %p148 = por %p146, %p147
      %p149 = scmp.ne.s32.totalorder %s140, %s141
      %p150 = scmp.eq.s32.totalorder %s25, 0
      %p151 = por %p149, %p150
      %p152 = scmp.ne.s32.totalorder %s140, %s141
      %p153 = scmp.eq.s32.totalorder %s26, 1
      %p154 = por %p152, %p153
      %p156 = scmp.ne.s32.totalorder %s141, %s155
      %p157 = scmp.eq.s32.totalorder %s26, 0
      %p158 = por %p156, %p157
      %s160 = sadd.s32 %s159, 1
      %p163 = scmp.eq.s32.totalorder %s20, 1
      %p164 = scmp.ne.s32.totalorder %s159, %s161
      %p165 = scmp.eq.s32.totalorder %s20, 0
      %p166 = por %p164, %p165
      %p167 = scmp.ne.s32.totalorder %s159, %s161
      %p168 = scmp.eq.s32.totalorder %s25, 1
      %p169 = por %p167, %p168
      %p170 = scmp.ne.s32.totalorder %s161, %s162
      %p171 = scmp.eq.s32.totalorder %s25, 0
      %p172 = por %p170, %p171
      %p173 = scmp.ne.s32.totalorder %s161, %s162
      %p174 = scmp.eq.s32.totalorder %s26, 1
      %p175 = por %p173, %p174
      %p177 = scmp.ne.s32.totalorder %s162, %s176
      %p178 = scmp.eq.s32.totalorder %s26, 0
      %p179 = por %p177, %p178
      %s180 = ssub.s32 %s20, %s27
      %p181 = scmp.eq.s32.totalorder %s180, 0
      %s183 = sadd.s32 %s182, 1
      %s184 = scalar_select %p181, %s182, %s183
      %p187 = pneg %p181
      %p188 = scmp.eq.s32.totalorder %s20, 1
      %p189 = por %p187, %p188
      %p190 = scmp.ne.s32.totalorder %s182, %s185
      %p191 = scmp.eq.s32.totalorder %s20, 0
      %p192 = por %p190, %p191
      %p193 = scmp.ne.s32.totalorder %s182, %s185
      %p194 = scmp.eq.s32.totalorder %s25, 1
      %p195 = por %p193, %p194
      %p196 = scmp.ne.s32.totalorder %s185, %s186
      %p197 = scmp.eq.s32.totalorder %s25, 0
      %p198 = por %p196, %p197
      %p199 = scmp.ne.s32.totalorder %s185, %s186
      %p200 = scmp.eq.s32.totalorder %s26, 1
      %p201 = por %p199, %p200
      %p203 = scmp.ne.s32.totalorder %s186, %s202
      %p204 = scmp.eq.s32.totalorder %s26, 0
      %p205 = por %p203, %p204
      %p206 = scmp.le.s32.totalorder 1, %s20
      %p207 = scmp.lt.s32.totalorder %s20, 3
      %p208 = pnand %p206, %p207
      %p209 = pneg %p208
      // Predicated region
      $region9: #{tpu_custom_call.1} parent=5 // pred_check
        _
      $region10: #{tpu_custom_call.1} parent=5 // pred_check_branch
        %211 = sbr.rel (%p208) target = $region12
      $region11: #{tpu_custom_call.1} parent=5 // pred_region
        %s212 = ssub.s32 %s20, 1
        // Predicated region
        $region13: #{tpu_custom_call.1} parent=11 // pred_check
          %p213 = pneg %p67
        $region14: #{tpu_custom_call.1} parent=11 // pred_check_branch
          %215 = sbr.rel (%p213) target = $region16
        $region15: #{tpu_custom_call.1} parent=11 // pred_region
          %217 = vsyncadd [#allocation8], 0
          %s218 = sshll.u32 %s1, 4
          %s219 = int_to_ptr.hbm [resolvable:$true] %s218
          %s220 = sshll.u32 [#allocation7], 4
          %s221 = int_to_ptr.vmem [resolvable:$true] %s220
          %226 = dma.hbm_to_vmem [thread:$0]  %s219, 40960, %s221, [#allocation8], 1280, 1280, 80
        $region16: #{tpu_custom_call.1} parent=11 // pred_fallthru
          _
        // Predicated region
        $region17: #{tpu_custom_call.1} parent=11 // pred_check
          %p227 = pneg %p88
        $region18: #{tpu_custom_call.1} parent=11 // pred_check_branch
          %229 = sbr.rel (%p227) target = $region20
        $region19: #{tpu_custom_call.1} parent=11 // pred_region
          _
        $region20: #{tpu_custom_call.1} parent=11 // pred_fallthru
          _
        // Predicated region
        $region21: #{tpu_custom_call.1} parent=11 // pred_check
          %p230 = pneg %p109
        $region22: #{tpu_custom_call.1} parent=11 // pred_check_branch
          %232 = sbr.rel (%p230) target = $region24
        $region23: #{tpu_custom_call.1} parent=11 // pred_region
          _
        $region24: #{tpu_custom_call.1} parent=11 // pred_fallthru
          _
        // Predicated region
        $region25: #{tpu_custom_call.1} parent=11 // pred_check
          %p233 = pneg %p130
        $region26: #{tpu_custom_call.1} parent=11 // pred_check_branch
          %235 = sbr.rel (%p233) target = $region28
        $region27: #{tpu_custom_call.1} parent=11 // pred_region
          _
        $region28: #{tpu_custom_call.1} parent=11 // pred_fallthru
          _
        // Predicated region
        $region29: #{tpu_custom_call.1} parent=11 // pred_check
          %p236 = pneg %p151
        $region30: #{tpu_custom_call.1} parent=11 // pred_check_branch
          %238 = sbr.rel (%p236) target = $region32
        $region31: #{tpu_custom_call.1} parent=11 // pred_region
          _
        $region32: #{tpu_custom_call.1} parent=11 // pred_fallthru
          _
        // Predicated region
        $region33: #{tpu_custom_call.1} parent=11 // pred_check
          %p239 = pneg %p172
        $region34: #{tpu_custom_call.1} parent=11 // pred_check_branch
          %241 = sbr.rel (%p239) target = $region36
        $region35: #{tpu_custom_call.1} parent=11 // pred_region
          %243 = vsyncadd [#allocation8], 0
          %s245 = sshll.u32 %s6, 4
          %s246 = int_to_ptr.hbm [resolvable:$true] %s245
          %s247 = sshll.u32 [#allocation9], 4
          %s248 = int_to_ptr.vmem [resolvable:$true] %s247
          %250 = dma.hbm_to_vmem [thread:$0]  %s246, 160, %s248, [#allocation8]
        $region36: #{tpu_custom_call.1} parent=11 // pred_fallthru
          _
      $region12: #{tpu_custom_call.1} parent=5 // pred_fallthru
        _
      %p251 = scmp.lt.s32.totalorder %s20, 2
      // Predicated region
      $region37: #{tpu_custom_call.1} parent=5 // pred_check
        %p252 = pneg %p251
      $region38: #{tpu_custom_call.1} parent=5 // pred_check_branch
        %254 = sbr.rel (%p252) target = $region40
      $region39: #{tpu_custom_call.1} parent=5 // pred_region
        // Predicated region
        $region41: #{tpu_custom_call.1} parent=39 // pred_check
          %p255 = pneg %p40
        $region42: #{tpu_custom_call.1} parent=39 // pred_check_branch
          %257 = sbr.rel (%p255) target = $region44
        $region43: #{tpu_custom_call.1} parent=39 // pred_region
          %s258 = sand.u32 %s30, 1
          %s259 = scalar_lea.sflag [#allocation5], %s258
          %s260 = sand.u32 %s30, 1
          %s261 = smul.addr %s260, 16
          %s262 = scalar_lea.vmem [#allocation4], %s261
          %264 = vsyncadd %s259, 0
          %s265 = smul.addr %s20, 2
          %s266 = smul.addr %s265, 8
          %s267 = scalar_lea.hbm %s0, %s266
          %s269 = sshll.u32 %s267, 4
          %s270 = int_to_ptr.hbm [resolvable:$true] %s269
          %s271 = sshll.u32 %s262, 4
          %s272 = int_to_ptr.vmem [resolvable:$true] %s271
          %274 = dma.hbm_to_vmem [thread:$0]  %s270, 256, %s272, %s259
        $region44: #{tpu_custom_call.1} parent=39 // pred_fallthru
          _
      $region40: #{tpu_custom_call.1} parent=5 // pred_fallthru
        _
      %p275 = scmp.le.s32.totalorder 1, %s20
      %p276 = scmp.lt.s32.totalorder %s20, 3
      %p277 = pnand %p275, %p276
      %p278 = pneg %p277
      // Predicated region
      $region45: #{tpu_custom_call.1} parent=5 // pred_check
        _
      $region46: #{tpu_custom_call.1} parent=5 // pred_check_branch
        %280 = sbr.rel (%p277) target = $region48
      $region47: #{tpu_custom_call.1} parent=5 // pred_region
        %s281 = ssub.s32 %s20, 1
        %s282 = sand.u32 %s33, 1
        %s283 = scalar_lea.sflag [#allocation5], %s282
        %s284 = sand.u32 %s33, 1
        %s285 = smul.addr %s284, 16
        %s286 = scalar_lea.vmem [#allocation4], %s285
        // Predicated region
        $region49: #{tpu_custom_call.1} parent=47 // pred_check
          %p287 = pneg %p46
        $region50: #{tpu_custom_call.1} parent=47 // pred_check_branch
          %289 = sbr.rel (%p287) target = $region52
        $region51: #{tpu_custom_call.1} parent=47 // pred_region
          %291 = dma.done %s283, 256
        $region52: #{tpu_custom_call.1} parent=47 // pred_fallthru
          _
        // Predicated region
        $region53: #{tpu_custom_call.1} parent=47 // pred_check
          %p292 = pneg %p67
        $region54: #{tpu_custom_call.1} parent=47 // pred_check_branch
          %294 = sbr.rel (%p292) target = $region56
        $region55: #{tpu_custom_call.1} parent=47 // pred_region
          %296 = dma.done [#allocation8], 40960
        $region56: #{tpu_custom_call.1} parent=47 // pred_fallthru
          _
        // Predicated region
        $region57: #{tpu_custom_call.1} parent=47 // pred_check
          %p297 = pneg %p172
        $region58: #{tpu_custom_call.1} parent=47 // pred_check_branch
          %299 = sbr.rel (%p297) target = $region60
        $region59: #{tpu_custom_call.1} parent=47 // pred_region
          %301 = dma.done [#allocation8], 160
        $region60: #{tpu_custom_call.1} parent=47 // pred_fallthru
          _
        %s302 = sand.u32 %s33, 1
        %s303 = scalar_lea.sflag [#allocation5], %s302
        %s304 = sand.u32 %s33, 1
        %s305 = smul.addr %s304, 16
        %s306 = scalar_lea.vmem [#allocation4], %s305
        %p307 = pneg %p46
        %p308 = pneg %p43
        %p309 = pneg %p67
        %p310 = pneg %p64
        %p311 = pneg %p88
        %p312 = pneg %p85
        %p313 = pneg %p109
        %p314 = pneg %p106
        %p315 = pneg %p130
        %p316 = pneg %p127
        %p317 = pneg %p151
        %p318 = pneg %p148
        %p319 = pneg %p172
        %p320 = pneg %p169
        %p321 = pneg %p198
        %p322 = pneg %p195
        %s323 = sand.u32 %s185, 1
        %s324 = scalar_lea.sflag [#allocation6], %s323
        %s325 = sand.u32 %s185, 1
        %s326 = smul.addr %s325, 40
        %s327 = scalar_lea.vmem [#allocation10], %s326
        %328 = vst [vmem:[#allocation2] sm:$0xff] 0.0
        %329 = vst [vmem:[#allocation2 + $0x58] sm:$0xff] 0.0
        %330 = vst [vmem:[#allocation3] sm:$0xff] 0.0
        %331 = vst [vmem:[#allocation3 + $0x58] sm:$0xff] 0.0
        %v332 = vld [vmem:[%s286] sm:$0xff]
        %v333 = vld [vmem:[%s286 + $0x8] sm:$0xff]
        %v334 = vld [vmem:[#allocation7] sm:$0xff]
        %v335 = vld [vmem:[#allocation7 + $0x8] sm:$0xff]
        %v336 = vld [vmem:[#allocation7 + $0x10] sm:$0xff]
        %v337 = vld [vmem:[#allocation7 + $0x18] sm:$0xff]
        %v338 = vld [vmem:[#allocation7 + $0x20] sm:$0xff]
        %v339 = vld [vmem:[#allocation7 + $0x28] sm:$0xff]
        %v340 = vld [vmem:[#allocation7 + $0x30] sm:$0xff]
        %v341 = vld [vmem:[#allocation7 + $0x38] sm:$0xff]
        %v342 = vld [vmem:[#allocation7 + $0x40] sm:$0xff]
        %v343 = vld [vmem:[#allocation7 + $0x48] sm:$0xff]
        %v344 = vld [vmem:[#allocation7 + $0x50] sm:$0xff]
        %v345 = vld [vmem:[#allocation7 + $0x58] sm:$0xff]
        %v346 = vld [vmem:[#allocation7 + $0x60] sm:$0xff]
        %v347 = vld [vmem:[#allocation7 + $0x68] sm:$0xff]
        %v348 = vld [vmem:[#allocation7 + $0x70] sm:$0xff]
        %v349 = vld [vmem:[#allocation7 + $0x78] sm:$0xff]
        %v350 = vld [vmem:[#allocation7 + $0x80] sm:$0xff]
        %v351 = vld [vmem:[#allocation7 + $0x88] sm:$0xff]
        %v352 = vld [vmem:[#allocation7 + $0x90] sm:$0xff]
        %v353 = vld [vmem:[#allocation7 + $0x98] sm:$0xff]
        %v354 = vld [vmem:[#allocation7 + $0xa0] sm:$0xff]
        %v355 = vld [vmem:[#allocation7 + $0xa8] sm:$0xff]
        %v356 = vld [vmem:[#allocation7 + $0xb0] sm:$0xff]
        %v357 = vld [vmem:[#allocation7 + $0xb8] sm:$0xff]
        %v358 = vld [vmem:[#allocation7 + $0xc0] sm:$0xff]
        %v359 = vld [vmem:[#allocation7 + $0xc8] sm:$0xff]
        %v360 = vld [vmem:[#allocation7 + $0xd0] sm:$0xff]
        %v361 = vld [vmem:[#allocation7 + $0xd8] sm:$0xff]
        %v362 = vld [vmem:[#allocation7 + $0xe0] sm:$0xff]
        %v363 = vld [vmem:[#allocation7 + $0xe8] sm:$0xff]
        %v364 = vld [vmem:[#allocation7 + $0xf0] sm:$0xff]
        %v365 = vld [vmem:[#allocation7 + $0xf8] sm:$0xff]
        %v366 = vld [vmem:[#allocation7 + $0x100] sm:$0xff]
        %v367 = vld [vmem:[#allocation7 + $0x108] sm:$0xff]
        %v368 = vld [vmem:[#allocation7 + $0x110] sm:$0xff]
        %v369 = vld [vmem:[#allocation7 + $0x118] sm:$0xff]
        %v370 = vld [vmem:[#allocation7 + $0x120] sm:$0xff]
        %v371 = vld [vmem:[#allocation7 + $0x128] sm:$0xff]
        %v372 = vld [vmem:[#allocation7 + $0x130] sm:$0xff]
        %v373 = vld [vmem:[#allocation7 + $0x138] sm:$0xff]
        %v374 = vld [vmem:[#allocation7 + $0x140] sm:$0xff]
        %v375 = vld [vmem:[#allocation7 + $0x148] sm:$0xff]
        %v376 = vld [vmem:[#allocation7 + $0x150] sm:$0xff]
        %v377 = vld [vmem:[#allocation7 + $0x158] sm:$0xff]
        %v378 = vld [vmem:[#allocation7 + $0x160] sm:$0xff]
        %v379 = vld [vmem:[#allocation7 + $0x168] sm:$0xff]
        %v380 = vld [vmem:[#allocation7 + $0x170] sm:$0xff]
        %v381 = vld [vmem:[#allocation7 + $0x178] sm:$0xff]
        %v382 = vld [vmem:[#allocation7 + $0x180] sm:$0xff]
        %v383 = vld [vmem:[#allocation7 + $0x188] sm:$0xff]
        %v384 = vld [vmem:[#allocation7 + $0x190] sm:$0xff]
        %v385 = vld [vmem:[#allocation7 + $0x198] sm:$0xff]
        %v386 = vld [vmem:[#allocation7 + $0x1a0] sm:$0xff]
        %v387 = vld [vmem:[#allocation7 + $0x1a8] sm:$0xff]
        %v388 = vld [vmem:[#allocation7 + $0x1b0] sm:$0xff]
        %v389 = vld [vmem:[#allocation7 + $0x1b8] sm:$0xff]
        %v390 = vld [vmem:[#allocation7 + $0x1c0] sm:$0xff]
        %v391 = vld [vmem:[#allocation7 + $0x1c8] sm:$0xff]
        %v392 = vld [vmem:[#allocation7 + $0x1d0] sm:$0xff]
        %v393 = vld [vmem:[#allocation7 + $0x1d8] sm:$0xff]
        %v394 = vld [vmem:[#allocation7 + $0x1e0] sm:$0xff]
        %v395 = vld [vmem:[#allocation7 + $0x1e8] sm:$0xff]
        %v396 = vld [vmem:[#allocation7 + $0x1f0] sm:$0xff]
        %v397 = vld [vmem:[#allocation7 + $0x1f8] sm:$0xff]
        %v398 = vld [vmem:[#allocation7 + $0x200] sm:$0xff]
        %v399 = vld [vmem:[#allocation7 + $0x208] sm:$0xff]
        %v400 = vld [vmem:[#allocation7 + $0x210] sm:$0xff]
        %v401 = vld [vmem:[#allocation7 + $0x218] sm:$0xff]
        %v402 = vld [vmem:[#allocation7 + $0x220] sm:$0xff]
        %v403 = vld [vmem:[#allocation7 + $0x228] sm:$0xff]
        %v404 = vld [vmem:[#allocation7 + $0x230] sm:$0xff]
        %v405 = vld [vmem:[#allocation7 + $0x238] sm:$0xff]
        %v406 = vld [vmem:[#allocation7 + $0x240] sm:$0xff]
        %v407 = vld [vmem:[#allocation7 + $0x248] sm:$0xff]
        %v408 = vld [vmem:[#allocation7 + $0x250] sm:$0xff]
        %v409 = vld [vmem:[#allocation7 + $0x258] sm:$0xff]
        %v410 = vld [vmem:[#allocation7 + $0x260] sm:$0xff]
        %v411 = vld [vmem:[#allocation7 + $0x268] sm:$0xff]
        %v412 = vld [vmem:[#allocation7 + $0x270] sm:$0xff]
        %v413 = vld [vmem:[#allocation7 + $0x278] sm:$0xff]
        %v414 = vld [vmem:[#allocation7 + $0x280] sm:$0xff]
        %v415 = vld [vmem:[#allocation7 + $0x288] sm:$0xff]
        %v416 = vld [vmem:[#allocation7 + $0x290] sm:$0xff]
        %v417 = vld [vmem:[#allocation7 + $0x298] sm:$0xff]
        %v418 = vld [vmem:[#allocation7 + $0x2a0] sm:$0xff]
        %v419 = vld [vmem:[#allocation7 + $0x2a8] sm:$0xff]
        %v420 = vld [vmem:[#allocation7 + $0x2b0] sm:$0xff]
        %v421 = vld [vmem:[#allocation7 + $0x2b8] sm:$0xff]
        %v422 = vld [vmem:[#allocation7 + $0x2c0] sm:$0xff]
        %v423 = vld [vmem:[#allocation7 + $0x2c8] sm:$0xff]
        %v424 = vld [vmem:[#allocation7 + $0x2d0] sm:$0xff]
        %v425 = vld [vmem:[#allocation7 + $0x2d8] sm:$0xff]
        %v426 = vld [vmem:[#allocation7 + $0x2e0] sm:$0xff]
        %v427 = vld [vmem:[#allocation7 + $0x2e8] sm:$0xff]
        %v428 = vld [vmem:[#allocation7 + $0x2f0] sm:$0xff]
        %v429 = vld [vmem:[#allocation7 + $0x2f8] sm:$0xff]
        %v430 = vld [vmem:[#allocation7 + $0x300] sm:$0xff]
        %v431 = vld [vmem:[#allocation7 + $0x308] sm:$0xff]
        %v432 = vld [vmem:[#allocation7 + $0x310] sm:$0xff]
        %v433 = vld [vmem:[#allocation7 + $0x318] sm:$0xff]
        %v434 = vld [vmem:[#allocation7 + $0x320] sm:$0xff]
        %v435 = vld [vmem:[#allocation7 + $0x328] sm:$0xff]
        %v436 = vld [vmem:[#allocation7 + $0x330] sm:$0xff]
        %v437 = vld [vmem:[#allocation7 + $0x338] sm:$0xff]
        %v438 = vld [vmem:[#allocation7 + $0x340] sm:$0xff]
        %v439 = vld [vmem:[#allocation7 + $0x348] sm:$0xff]
        %v440 = vld [vmem:[#allocation7 + $0x350] sm:$0xff]
        %v441 = vld [vmem:[#allocation7 + $0x358] sm:$0xff]
        %v442 = vld [vmem:[#allocation7 + $0x360] sm:$0xff]
        %v443 = vld [vmem:[#allocation7 + $0x368] sm:$0xff]
        %v444 = vld [vmem:[#allocation7 + $0x370] sm:$0xff]
        %v445 = vld [vmem:[#allocation7 + $0x378] sm:$0xff]
        %v446 = vld [vmem:[#allocation7 + $0x380] sm:$0xff]
        %v447 = vld [vmem:[#allocation7 + $0x388] sm:$0xff]
        %v448 = vld [vmem:[#allocation7 + $0x390] sm:$0xff]
        %v449 = vld [vmem:[#allocation7 + $0x398] sm:$0xff]
        %v450 = vld [vmem:[#allocation7 + $0x3a0] sm:$0xff]
        %v451 = vld [vmem:[#allocation7 + $0x3a8] sm:$0xff]
        %v452 = vld [vmem:[#allocation7 + $0x3b0] sm:$0xff]
        %v453 = vld [vmem:[#allocation7 + $0x3b8] sm:$0xff]
        %v454 = vld [vmem:[#allocation7 + $0x3c0] sm:$0xff]
        %v455 = vld [vmem:[#allocation7 + $0x3c8] sm:$0xff]
        %v456 = vld [vmem:[#allocation7 + $0x3d0] sm:$0xff]
        %v457 = vld [vmem:[#allocation7 + $0x3d8] sm:$0xff]
        %v458 = vld [vmem:[#allocation7 + $0x3e0] sm:$0xff]
        %v459 = vld [vmem:[#allocation7 + $0x3e8] sm:$0xff]
        %v460 = vld [vmem:[#allocation7 + $0x3f0] sm:$0xff]
        %v461 = vld [vmem:[#allocation7 + $0x3f8] sm:$0xff]
        %v462 = vld [vmem:[#allocation7 + $0x400] sm:$0xff]
        %v463 = vld [vmem:[#allocation7 + $0x408] sm:$0xff]
        %v464 = vld [vmem:[#allocation7 + $0x410] sm:$0xff]
        %v465 = vld [vmem:[#allocation7 + $0x418] sm:$0xff]
        %v466 = vld [vmem:[#allocation7 + $0x420] sm:$0xff]
        %v467 = vld [vmem:[#allocation7 + $0x428] sm:$0xff]
        %v468 = vld [vmem:[#allocation7 + $0x430] sm:$0xff]
        %v469 = vld [vmem:[#allocation7 + $0x438] sm:$0xff]
        %v470 = vld [vmem:[#allocation7 + $0x440] sm:$0xff]
        %v471 = vld [vmem:[#allocation7 + $0x448] sm:$0xff]
        %v472 = vld [vmem:[#allocation7 + $0x450] sm:$0xff]
        %v473 = vld [vmem:[#allocation7 + $0x458] sm:$0xff]
        %v474 = vld [vmem:[#allocation7 + $0x460] sm:$0xff]
        %v475 = vld [vmem:[#allocation7 + $0x468] sm:$0xff]
        %v476 = vld [vmem:[#allocation7 + $0x470] sm:$0xff]
        %v477 = vld [vmem:[#allocation7 + $0x478] sm:$0xff]
        %v478 = vld [vmem:[#allocation7 + $0x480] sm:$0xff]
        %v479 = vld [vmem:[#allocation7 + $0x488] sm:$0xff]
        %v480 = vld [vmem:[#allocation7 + $0x490] sm:$0xff]
        %v481 = vld [vmem:[#allocation7 + $0x498] sm:$0xff]
        %v482 = vld [vmem:[#allocation7 + $0x4a0] sm:$0xff]
        %v483 = vld [vmem:[#allocation7 + $0x4a8] sm:$0xff]
        %v484 = vld [vmem:[#allocation7 + $0x4b0] sm:$0xff]
        %v485 = vld [vmem:[#allocation7 + $0x4b8] sm:$0xff]
        %v486 = vld [vmem:[#allocation7 + $0x4c0] sm:$0xff]
        %v487 = vld [vmem:[#allocation7 + $0x4c8] sm:$0xff]
        %v488 = vld [vmem:[#allocation7 + $0x4d0] sm:$0xff]
        %v489 = vld [vmem:[#allocation7 + $0x4d8] sm:$0xff]
        %v490 = vld [vmem:[#allocation7 + $0x4e0] sm:$0xff]
        %v491 = vld [vmem:[#allocation7 + $0x4e8] sm:$0xff]
        %v492 = vld [vmem:[#allocation7 + $0x4f0] sm:$0xff]
        %v493 = vld [vmem:[#allocation7 + $0x4f8] sm:$0xff]
        %v494 = vld [vmem:[#allocation7 + $0x500] sm:$0xff]
        %v495 = vld [vmem:[#allocation7 + $0x508] sm:$0xff]
        %v496 = vld [vmem:[#allocation7 + $0x510] sm:$0xff]
        %v497 = vld [vmem:[#allocation7 + $0x518] sm:$0xff]
        %v498 = vld [vmem:[#allocation7 + $0x520] sm:$0xff]
        %v499 = vld [vmem:[#allocation7 + $0x528] sm:$0xff]
        %v500 = vld [vmem:[#allocation7 + $0x530] sm:$0xff]
        %v501 = vld [vmem:[#allocation7 + $0x538] sm:$0xff]
        %v502 = vld [vmem:[#allocation7 + $0x540] sm:$0xff]
        %v503 = vld [vmem:[#allocation7 + $0x548] sm:$0xff]
        %v504 = vld [vmem:[#allocation7 + $0x550] sm:$0xff]
        %v505 = vld [vmem:[#allocation7 + $0x558] sm:$0xff]
        %v506 = vld [vmem:[#allocation7 + $0x560] sm:$0xff]
        %v507 = vld [vmem:[#allocation7 + $0x568] sm:$0xff]
        %v508 = vld [vmem:[#allocation7 + $0x570] sm:$0xff]
        %v509 = vld [vmem:[#allocation7 + $0x578] sm:$0xff]
        %v510 = vld [vmem:[#allocation7 + $0x580] sm:$0xff]
        %v511 = vld [vmem:[#allocation7 + $0x588] sm:$0xff]
        %v512 = vld [vmem:[#allocation7 + $0x590] sm:$0xff]
        %v513 = vld [vmem:[#allocation7 + $0x598] sm:$0xff]
        %v514 = vld [vmem:[#allocation7 + $0x5a0] sm:$0xff]
        %v515 = vld [vmem:[#allocation7 + $0x5a8] sm:$0xff]
        %v516 = vld [vmem:[#allocation7 + $0x5b0] sm:$0xff]
        %v517 = vld [vmem:[#allocation7 + $0x5b8] sm:$0xff]
        %v518 = vld [vmem:[#allocation7 + $0x5c0] sm:$0xff]
        %v519 = vld [vmem:[#allocation7 + $0x5c8] sm:$0xff]
        %v520 = vld [vmem:[#allocation7 + $0x5d0] sm:$0xff]
        %v521 = vld [vmem:[#allocation7 + $0x5d8] sm:$0xff]
        %v522 = vld [vmem:[#allocation7 + $0x5e0] sm:$0xff]
        %v523 = vld [vmem:[#allocation7 + $0x5e8] sm:$0xff]
        %v524 = vld [vmem:[#allocation7 + $0x5f0] sm:$0xff]
        %v525 = vld [vmem:[#allocation7 + $0x5f8] sm:$0xff]
        %v526 = vld [vmem:[#allocation7 + $0x600] sm:$0xff]
        %v527 = vld [vmem:[#allocation7 + $0x608] sm:$0xff]
        %v528 = vld [vmem:[#allocation7 + $0x610] sm:$0xff]
        %v529 = vld [vmem:[#allocation7 + $0x618] sm:$0xff]
        %v530 = vld [vmem:[#allocation7 + $0x620] sm:$0xff]
        %v531 = vld [vmem:[#allocation7 + $0x628] sm:$0xff]
        %v532 = vld [vmem:[#allocation7 + $0x630] sm:$0xff]
        %v533 = vld [vmem:[#allocation7 + $0x638] sm:$0xff]
        %v534 = vld [vmem:[#allocation7 + $0x640] sm:$0xff]
        %v535 = vld [vmem:[#allocation7 + $0x648] sm:$0xff]
        %v536 = vld [vmem:[#allocation7 + $0x650] sm:$0xff]
        %v537 = vld [vmem:[#allocation7 + $0x658] sm:$0xff]
        %v538 = vld [vmem:[#allocation7 + $0x660] sm:$0xff]
        %v539 = vld [vmem:[#allocation7 + $0x668] sm:$0xff]
        %v540 = vld [vmem:[#allocation7 + $0x670] sm:$0xff]
        %v541 = vld [vmem:[#allocation7 + $0x678] sm:$0xff]
        %v542 = vld [vmem:[#allocation7 + $0x680] sm:$0xff]
        %v543 = vld [vmem:[#allocation7 + $0x688] sm:$0xff]
        %v544 = vld [vmem:[#allocation7 + $0x690] sm:$0xff]
        %v545 = vld [vmem:[#allocation7 + $0x698] sm:$0xff]
        %v546 = vld [vmem:[#allocation7 + $0x6a0] sm:$0xff]
        %v547 = vld [vmem:[#allocation7 + $0x6a8] sm:$0xff]
        %v548 = vld [vmem:[#allocation7 + $0x6b0] sm:$0xff]
        %v549 = vld [vmem:[#allocation7 + $0x6b8] sm:$0xff]
        %v550 = vld [vmem:[#allocation7 + $0x6c0] sm:$0xff]
        %v551 = vld [vmem:[#allocation7 + $0x6c8] sm:$0xff]
        %v552 = vld [vmem:[#allocation7 + $0x6d0] sm:$0xff]
        %v553 = vld [vmem:[#allocation7 + $0x6d8] sm:$0xff]
        %v554 = vld [vmem:[#allocation7 + $0x6e0] sm:$0xff]
        %v555 = vld [vmem:[#allocation7 + $0x6e8] sm:$0xff]
        %v556 = vld [vmem:[#allocation7 + $0x6f0] sm:$0xff]
        %v557 = vld [vmem:[#allocation7 + $0x6f8] sm:$0xff]
        %v558 = vld [vmem:[#allocation7 + $0x700] sm:$0xff]
        %v559 = vld [vmem:[#allocation7 + $0x708] sm:$0xff]
        %v560 = vld [vmem:[#allocation7 + $0x710] sm:$0xff]
        %v561 = vld [vmem:[#allocation7 + $0x718] sm:$0xff]
        %v562 = vld [vmem:[#allocation7 + $0x720] sm:$0xff]
        %v563 = vld [vmem:[#allocation7 + $0x728] sm:$0xff]
        %v564 = vld [vmem:[#allocation7 + $0x730] sm:$0xff]
        %v565 = vld [vmem:[#allocation7 + $0x738] sm:$0xff]
        %v566 = vld [vmem:[#allocation7 + $0x740] sm:$0xff]
        %v567 = vld [vmem:[#allocation7 + $0x748] sm:$0xff]
        %v568 = vld [vmem:[#allocation7 + $0x750] sm:$0xff]
        %v569 = vld [vmem:[#allocation7 + $0x758] sm:$0xff]
        %v570 = vld [vmem:[#allocation7 + $0x760] sm:$0xff]
        %v571 = vld [vmem:[#allocation7 + $0x768] sm:$0xff]
        %v572 = vld [vmem:[#allocation7 + $0x770] sm:$0xff]
        %v573 = vld [vmem:[#allocation7 + $0x778] sm:$0xff]
        %v574 = vld [vmem:[#allocation7 + $0x780] sm:$0xff]
        %v575 = vld [vmem:[#allocation7 + $0x788] sm:$0xff]
        %v576 = vld [vmem:[#allocation7 + $0x790] sm:$0xff]
        %v577 = vld [vmem:[#allocation7 + $0x798] sm:$0xff]
        %v578 = vld [vmem:[#allocation7 + $0x7a0] sm:$0xff]
        %v579 = vld [vmem:[#allocation7 + $0x7a8] sm:$0xff]
        %v580 = vld [vmem:[#allocation7 + $0x7b0] sm:$0xff]
        %v581 = vld [vmem:[#allocation7 + $0x7b8] sm:$0xff]
        %v582 = vld [vmem:[#allocation7 + $0x7c0] sm:$0xff]
        %v583 = vld [vmem:[#allocation7 + $0x7c8] sm:$0xff]
        %v584 = vld [vmem:[#allocation7 + $0x7d0] sm:$0xff]
        %v585 = vld [vmem:[#allocation7 + $0x7d8] sm:$0xff]
        %v586 = vld [vmem:[#allocation7 + $0x7e0] sm:$0xff]
        %v587 = vld [vmem:[#allocation7 + $0x7e8] sm:$0xff]
        %v588 = vld [vmem:[#allocation7 + $0x7f0] sm:$0xff]
        %v589 = vld [vmem:[#allocation7 + $0x7f8] sm:$0xff]
        %v590 = vld [vmem:[#allocation7 + $0x800] sm:$0xff]
        %v591 = vld [vmem:[#allocation7 + $0x808] sm:$0xff]
        %v592 = vld [vmem:[#allocation7 + $0x810] sm:$0xff]
        %v593 = vld [vmem:[#allocation7 + $0x818] sm:$0xff]
        %v594 = vld [vmem:[#allocation7 + $0x820] sm:$0xff]
        %v595 = vld [vmem:[#allocation7 + $0x828] sm:$0xff]
        %v596 = vld [vmem:[#allocation7 + $0x830] sm:$0xff]
        %v597 = vld [vmem:[#allocation7 + $0x838] sm:$0xff]
        %v598 = vld [vmem:[#allocation7 + $0x840] sm:$0xff]
        %v599 = vld [vmem:[#allocation7 + $0x848] sm:$0xff]
        %v600 = vld [vmem:[#allocation7 + $0x850] sm:$0xff]
        %v601 = vld [vmem:[#allocation7 + $0x858] sm:$0xff]
        %v602 = vld [vmem:[#allocation7 + $0x860] sm:$0xff]
        %v603 = vld [vmem:[#allocation7 + $0x868] sm:$0xff]
        %v604 = vld [vmem:[#allocation7 + $0x870] sm:$0xff]
        %v605 = vld [vmem:[#allocation7 + $0x878] sm:$0xff]
        %v606 = vld [vmem:[#allocation7 + $0x880] sm:$0xff]
        %v607 = vld [vmem:[#allocation7 + $0x888] sm:$0xff]
        %v608 = vld [vmem:[#allocation7 + $0x890] sm:$0xff]
        %v609 = vld [vmem:[#allocation7 + $0x898] sm:$0xff]
        %v610 = vld [vmem:[#allocation7 + $0x8a0] sm:$0xff]
        %v611 = vld [vmem:[#allocation7 + $0x8a8] sm:$0xff]
        %v612 = vld [vmem:[#allocation7 + $0x8b0] sm:$0xff]
        %v613 = vld [vmem:[#allocation7 + $0x8b8] sm:$0xff]
        %v614 = vld [vmem:[#allocation7 + $0x8c0] sm:$0xff]
        %v615 = vld [vmem:[#allocation7 + $0x8c8] sm:$0xff]
        %v616 = vld [vmem:[#allocation7 + $0x8d0] sm:$0xff]
        %v617 = vld [vmem:[#allocation7 + $0x8d8] sm:$0xff]
        %v618 = vld [vmem:[#allocation7 + $0x8e0] sm:$0xff]
        %v619 = vld [vmem:[#allocation7 + $0x8e8] sm:$0xff]
        %v620 = vld [vmem:[#allocation7 + $0x8f0] sm:$0xff]
        %v621 = vld [vmem:[#allocation7 + $0x8f8] sm:$0xff]
        %v622 = vld [vmem:[#allocation7 + $0x900] sm:$0xff]
        %v623 = vld [vmem:[#allocation7 + $0x908] sm:$0xff]
        %v624 = vld [vmem:[#allocation7 + $0x910] sm:$0xff]
        %v625 = vld [vmem:[#allocation7 + $0x918] sm:$0xff]
        %v626 = vld [vmem:[#allocation7 + $0x920] sm:$0xff]
        %v627 = vld [vmem:[#allocation7 + $0x928] sm:$0xff]
        %v628 = vld [vmem:[#allocation7 + $0x930] sm:$0xff]
        %v629 = vld [vmem:[#allocation7 + $0x938] sm:$0xff]
        %v630 = vld [vmem:[#allocation7 + $0x940] sm:$0xff]
        %v631 = vld [vmem:[#allocation7 + $0x948] sm:$0xff]
        %v632 = vld [vmem:[#allocation7 + $0x950] sm:$0xff]
        %v633 = vld [vmem:[#allocation7 + $0x958] sm:$0xff]
        %v634 = vld [vmem:[#allocation7 + $0x960] sm:$0xff]
        %v635 = vld [vmem:[#allocation7 + $0x968] sm:$0xff]
        %v636 = vld [vmem:[#allocation7 + $0x970] sm:$0xff]
        %v637 = vld [vmem:[#allocation7 + $0x978] sm:$0xff]
        %v638 = vld [vmem:[#allocation7 + $0x980] sm:$0xff]
        %v639 = vld [vmem:[#allocation7 + $0x988] sm:$0xff]
        %v640 = vld [vmem:[#allocation7 + $0x990] sm:$0xff]
        %v641 = vld [vmem:[#allocation7 + $0x998] sm:$0xff]
        %v642 = vld [vmem:[#allocation7 + $0x9a0] sm:$0xff]
        %v643 = vld [vmem:[#allocation7 + $0x9a8] sm:$0xff]
        %v644 = vld [vmem:[#allocation7 + $0x9b0] sm:$0xff]
        %v645 = vld [vmem:[#allocation7 + $0x9b8] sm:$0xff]
        %v646 = vld [vmem:[#allocation7 + $0x9c0] sm:$0xff]
        %v647 = vld [vmem:[#allocation7 + $0x9c8] sm:$0xff]
        %v648 = vld [vmem:[#allocation7 + $0x9d0] sm:$0xff]
        %v649 = vld [vmem:[#allocation7 + $0x9d8] sm:$0xff]
        %v650 = vld [vmem:[#allocation7 + $0x9e0] sm:$0xff]
        %v651 = vld [vmem:[#allocation7 + $0x9e8] sm:$0xff]
        %v652 = vld [vmem:[#allocation7 + $0x9f0] sm:$0xff]
        %v653 = vld [vmem:[#allocation7 + $0x9f8] sm:$0xff]
        %654 = vmatpush.msra.mxu0 %v484
        %655 = vmatpush.msra.mxu0 %v474
        %656 = vmatpush.msra.mxu0 %v464
        %657 = vmatpush.msra.mxu0 %v454
        %658 = vmatpush.msra.mxu0 %v444
        %659 = vmatpush.msra.mxu0 %v434
        %660 = vmatpush.msra.mxu0 %v424
        %661 = vmatpush.msra.mxu0 %v414
        %662 = vmatpush.msra.mxu0 %v404
        %663 = vmatpush.msra.mxu0 %v394
        %664 = vmatpush.msra.mxu0 %v384
        %665 = vmatpush.msra.mxu0 %v374
        %666 = vmatpush.msra.mxu0 %v364
        %667 = vmatpush.msra.mxu0 %v354
        %668 = vmatpush.msra.mxu0 %v344
        %669 = vmatpush.msra.mxu0 %v334
        %670 = vmatmul.f32.gmra.mxu0 %v332
        %v671 = vpop.f32.mrf.mxu0
        %v672 = vadd.f32 0.0, %v671
        %673 = vdwg.mxu0
        %674 = vmatpush.msra.mxu0 %v644
        %675 = vmatpush.msra.mxu0 %v634
        %676 = vmatpush.msra.mxu0 %v624
        %677 = vmatpush.msra.mxu0 %v614
        %678 = vmatpush.msra.mxu0 %v604
        %679 = vmatpush.msra.mxu0 %v594
        %680 = vmatpush.msra.mxu0 %v584
        %681 = vmatpush.msra.mxu0 %v574
        %682 = vmatpush.msra.mxu0 %v564
        %683 = vmatpush.msra.mxu0 %v554
        %684 = vmatpush.msra.mxu0 %v544
        %685 = vmatpush.msra.mxu0 %v534
        %686 = vmatpush.msra.mxu0 %v524
        %687 = vmatpush.msra.mxu0 %v514
        %688 = vmatpush.msra.mxu0 %v504
        %689 = vmatpush.msra.mxu0 %v494
        %690 = vmatmul.f32.gmra.mxu0 %v333
        %v691 = vpop.f32.mrf.mxu0
        %v692 = vadd.f32 %v672, %v691
        %693 = vdwg.mxu0
        %694 = vmatpush.msra.mxu0 %v485
        %695 = vmatpush.msra.mxu0 %v475
        %696 = vmatpush.msra.mxu0 %v465
        %697 = vmatpush.msra.mxu0 %v455
        %698 = vmatpush.msra.mxu0 %v445
        %699 = vmatpush.msra.mxu0 %v435
        %700 = vmatpush.msra.mxu0 %v425
        %701 = vmatpush.msra.mxu0 %v415
        %702 = vmatpush.msra.mxu0 %v405
        %703 = vmatpush.msra.mxu0 %v395
        %704 = vmatpush.msra.mxu0 %v385
        %705 = vmatpush.msra.mxu0 %v375
        %706 = vmatpush.msra.mxu0 %v365
        %707 = vmatpush.msra.mxu0 %v355
        %708 = vmatpush.msra.mxu0 %v345
        %709 = vmatpush.msra.mxu0 %v335
        %710 = vmatmul.f32.gmra.mxu0 %v332
        %v711 = vpop.f32.mrf.mxu0
        %v712 = vadd.f32 0.0, %v711
        %713 = vdwg.mxu0
        %714 = vmatpush.msra.mxu0 %v645
        %715 = vmatpush.msra.mxu0 %v635
        %716 = vmatpush.msra.mxu0 %v625
        %717 = vmatpush.msra.mxu0 %v615
        %718 = vmatpush.msra.mxu0 %v605
        %719 = vmatpush.msra.mxu0 %v595
        %720 = vmatpush.msra.mxu0 %v585
        %721 = vmatpush.msra.mxu0 %v575
        %722 = vmatpush.msra.mxu0 %v565
        %723 = vmatpush.msra.mxu0 %v555
        %724 = vmatpush.msra.mxu0 %v545
        %725 = vmatpush.msra.mxu0 %v535
        %726 = vmatpush.msra.mxu0 %v525
        %727 = vmatpush.msra.mxu0 %v515
        %728 = vmatpush.msra.mxu0 %v505
        %729 = vmatpush.msra.mxu0 %v495
        %730 = vmatmul.f32.gmra.mxu0 %v333
        %v731 = vpop.f32.mrf.mxu0
        %v732 = vadd.f32 %v712, %v731
        %733 = vdwg.mxu0
        %734 = vmatpush.msra.mxu0 %v486
        %735 = vmatpush.msra.mxu0 %v476
        %736 = vmatpush.msra.mxu0 %v466
        %737 = vmatpush.msra.mxu0 %v456
        %738 = vmatpush.msra.mxu0 %v446
        %739 = vmatpush.msra.mxu0 %v436
        %740 = vmatpush.msra.mxu0 %v426
        %741 = vmatpush.msra.mxu0 %v416
        %742 = vmatpush.msra.mxu0 %v406
        %743 = vmatpush.msra.mxu0 %v396
        %744 = vmatpush.msra.mxu0 %v386
        %745 = vmatpush.msra.mxu0 %v376
        %746 = vmatpush.msra.mxu0 %v366
        %747 = vmatpush.msra.mxu0 %v356
        %748 = vmatpush.msra.mxu0 %v346
        %749 = vmatpush.msra.mxu0 %v336
        %750 = vmatmul.f32.gmra.mxu0 %v332
        %v751 = vpop.f32.mrf.mxu0
        %v752 = vadd.f32 0.0, %v751
        %753 = vdwg.mxu0
        %754 = vmatpush.msra.mxu0 %v646
        %755 = vmatpush.msra.mxu0 %v636
        %756 = vmatpush.msra.mxu0 %v626
        %757 = vmatpush.msra.mxu0 %v616
        %758 = vmatpush.msra.mxu0 %v606
        %759 = vmatpush.msra.mxu0 %v596
        %760 = vmatpush.msra.mxu0 %v586
        %761 = vmatpush.msra.mxu0 %v576
        %762 = vmatpush.msra.mxu0 %v566
        %763 = vmatpush.msra.mxu0 %v556
        %764 = vmatpush.msra.mxu0 %v546
        %765 = vmatpush.msra.mxu0 %v536
        %766 = vmatpush.msra.mxu0 %v526
        %767 = vmatpush.msra.mxu0 %v516
        %768 = vmatpush.msra.mxu0 %v506
        %769 = vmatpush.msra.mxu0 %v496
        %770 = vmatmul.f32.gmra.mxu0 %v333
        %v771 = vpop.f32.mrf.mxu0
        %v772 = vadd.f32 %v752, %v771
        %773 = vdwg.mxu0
        %774 = vmatpush.msra.mxu0 %v487
        %775 = vmatpush.msra.mxu0 %v477
        %776 = vmatpush.msra.mxu0 %v467
        %777 = vmatpush.msra.mxu0 %v457
        %778 = vmatpush.msra.mxu0 %v447
        %779 = vmatpush.msra.mxu0 %v437
        %780 = vmatpush.msra.mxu0 %v427
        %781 = vmatpush.msra.mxu0 %v417
        %782 = vmatpush.msra.mxu0 %v407
        %783 = vmatpush.msra.mxu0 %v397
        %784 = vmatpush.msra.mxu0 %v387
        %785 = vmatpush.msra.mxu0 %v377
        %786 = vmatpush.msra.mxu0 %v367
        %787 = vmatpush.msra.mxu0 %v357
        %788 = vmatpush.msra.mxu0 %v347
        %789 = vmatpush.msra.mxu0 %v337
        %790 = vmatmul.f32.gmra.mxu0 %v332
        %v791 = vpop.f32.mrf.mxu0
        %v792 = vadd.f32 0.0, %v791
        %793 = vdwg.mxu0
        %794 = vmatpush.msra.mxu0 %v647
        %795 = vmatpush.msra.mxu0 %v637
        %796 = vmatpush.msra.mxu0 %v627
        %797 = vmatpush.msra.mxu0 %v617
        %798 = vmatpush.msra.mxu0 %v607
        %799 = vmatpush.msra.mxu0 %v597
        %800 = vmatpush.msra.mxu0 %v587
        %801 = vmatpush.msra.mxu0 %v577
        %802 = vmatpush.msra.mxu0 %v567
        %803 = vmatpush.msra.mxu0 %v557
        %804 = vmatpush.msra.mxu0 %v547
        %805 = vmatpush.msra.mxu0 %v537
        %806 = vmatpush.msra.mxu0 %v527
        %807 = vmatpush.msra.mxu0 %v517
        %808 = vmatpush.msra.mxu0 %v507
        %809 = vmatpush.msra.mxu0 %v497
        %810 = vmatmul.f32.gmra.mxu0 %v333
        %v811 = vpop.f32.mrf.mxu0
        %v812 = vadd.f32 %v792, %v811
        %813 = vdwg.mxu0
        %814 = vmatpush.msra.mxu0 %v488
        %815 = vmatpush.msra.mxu0 %v478
        %816 = vmatpush.msra.mxu0 %v468
        %817 = vmatpush.msra.mxu0 %v458
        %818 = vmatpush.msra.mxu0 %v448
        %819 = vmatpush.msra.mxu0 %v438
        %820 = vmatpush.msra.mxu0 %v428
        %821 = vmatpush.msra.mxu0 %v418
        %822 = vmatpush.msra.mxu0 %v408
        %823 = vmatpush.msra.mxu0 %v398
        %824 = vmatpush.msra.mxu0 %v388
        %825 = vmatpush.msra.mxu0 %v378
        %826 = vmatpush.msra.mxu0 %v368
        %827 = vmatpush.msra.mxu0 %v358
        %828 = vmatpush.msra.mxu0 %v348
        %829 = vmatpush.msra.mxu0 %v338
        %830 = vmatmul.f32.gmra.mxu0 %v332
        %v831 = vpop.f32.mrf.mxu0
        %v832 = vadd.f32 0.0, %v831
        %833 = vdwg.mxu0
        %834 = vmatpush.msra.mxu0 %v648
        %835 = vmatpush.msra.mxu0 %v638
        %836 = vmatpush.msra.mxu0 %v628
        %837 = vmatpush.msra.mxu0 %v618
        %838 = vmatpush.msra.mxu0 %v608
        %839 = vmatpush.msra.mxu0 %v598
        %840 = vmatpush.msra.mxu0 %v588
        %841 = vmatpush.msra.mxu0 %v578
        %842 = vmatpush.msra.mxu0 %v568
        %843 = vmatpush.msra.mxu0 %v558
        %844 = vmatpush.msra.mxu0 %v548
        %845 = vmatpush.msra.mxu0 %v538
        %846 = vmatpush.msra.mxu0 %v528
        %847 = vmatpush.msra.mxu0 %v518
        %848 = vmatpush.msra.mxu0 %v508
        %849 = vmatpush.msra.mxu0 %v498
        %850 = vmatmul.f32.gmra.mxu0 %v333
        %v851 = vpop.f32.mrf.mxu0
        %v852 = vadd.f32 %v832, %v851
        %853 = vdwg.mxu0
        %854 = vmatpush.msra.mxu0 %v489
        %855 = vmatpush.msra.mxu0 %v479
        %856 = vmatpush.msra.mxu0 %v469
        %857 = vmatpush.msra.mxu0 %v459
        %858 = vmatpush.msra.mxu0 %v449
        %859 = vmatpush.msra.mxu0 %v439
        %860 = vmatpush.msra.mxu0 %v429
        %861 = vmatpush.msra.mxu0 %v419
        %862 = vmatpush.msra.mxu0 %v409
        %863 = vmatpush.msra.mxu0 %v399
        %864 = vmatpush.msra.mxu0 %v389
        %865 = vmatpush.msra.mxu0 %v379
        %866 = vmatpush.msra.mxu0 %v369
        %867 = vmatpush.msra.mxu0 %v359
        %868 = vmatpush.msra.mxu0 %v349
        %869 = vmatpush.msra.mxu0 %v339
        %870 = vmatmul.f32.gmra.mxu0 %v332
        %v871 = vpop.f32.mrf.mxu0
        %v872 = vadd.f32 0.0, %v871
        %873 = vdwg.mxu0
        %874 = vmatpush.msra.mxu0 %v649
        %875 = vmatpush.msra.mxu0 %v639
        %876 = vmatpush.msra.mxu0 %v629
        %877 = vmatpush.msra.mxu0 %v619
        %878 = vmatpush.msra.mxu0 %v609
        %879 = vmatpush.msra.mxu0 %v599
        %880 = vmatpush.msra.mxu0 %v589
        %881 = vmatpush.msra.mxu0 %v579
        %882 = vmatpush.msra.mxu0 %v569
        %883 = vmatpush.msra.mxu0 %v559
        %884 = vmatpush.msra.mxu0 %v549
        %885 = vmatpush.msra.mxu0 %v539
        %886 = vmatpush.msra.mxu0 %v529
        %887 = vmatpush.msra.mxu0 %v519
        %888 = vmatpush.msra.mxu0 %v509
        %889 = vmatpush.msra.mxu0 %v499
        %890 = vmatmul.f32.gmra.mxu0 %v333
        %v891 = vpop.f32.mrf.mxu0
        %v892 = vadd.f32 %v872, %v891
        %893 = vdwg.mxu0
        %894 = vmatpush.msra.mxu0 %v490
        %895 = vmatpush.msra.mxu0 %v480
        %896 = vmatpush.msra.mxu0 %v470
        %897 = vmatpush.msra.mxu0 %v460
        %898 = vmatpush.msra.mxu0 %v450
        %899 = vmatpush.msra.mxu0 %v440
        %900 = vmatpush.msra.mxu0 %v430
        %901 = vmatpush.msra.mxu0 %v420
        %902 = vmatpush.msra.mxu0 %v410
        %903 = vmatpush.msra.mxu0 %v400
        %904 = vmatpush.msra.mxu0 %v390
        %905 = vmatpush.msra.mxu0 %v380
        %906 = vmatpush.msra.mxu0 %v370
        %907 = vmatpush.msra.mxu0 %v360
        %908 = vmatpush.msra.mxu0 %v350
        %909 = vmatpush.msra.mxu0 %v340
        %910 = vmatmul.f32.gmra.mxu0 %v332
        %v911 = vpop.f32.mrf.mxu0
        %v912 = vadd.f32 0.0, %v911
        %913 = vdwg.mxu0
        %914 = vmatpush.msra.mxu0 %v650
        %915 = vmatpush.msra.mxu0 %v640
        %916 = vmatpush.msra.mxu0 %v630
        %917 = vmatpush.msra.mxu0 %v620
        %918 = vmatpush.msra.mxu0 %v610
        %919 = vmatpush.msra.mxu0 %v600
        %920 = vmatpush.msra.mxu0 %v590
        %921 = vmatpush.msra.mxu0 %v580
        %922 = vmatpush.msra.mxu0 %v570
        %923 = vmatpush.msra.mxu0 %v560
        %924 = vmatpush.msra.mxu0 %v550
        %925 = vmatpush.msra.mxu0 %v540
        %926 = vmatpush.msra.mxu0 %v530
        %927 = vmatpush.msra.mxu0 %v520
        %928 = vmatpush.msra.mxu0 %v510
        %929 = vmatpush.msra.mxu0 %v500
        %930 = vmatmul.f32.gmra.mxu0 %v333
        %v931 = vpop.f32.mrf.mxu0
        %v932 = vadd.f32 %v912, %v931
        %933 = vdwg.mxu0
        %934 = vmatpush.msra.mxu0 %v491
        %935 = vmatpush.msra.mxu0 %v481
        %936 = vmatpush.msra.mxu0 %v471
        %937 = vmatpush.msra.mxu0 %v461
        %938 = vmatpush.msra.mxu0 %v451
        %939 = vmatpush.msra.mxu0 %v441
        %940 = vmatpush.msra.mxu0 %v431
        %941 = vmatpush.msra.mxu0 %v421
        %942 = vmatpush.msra.mxu0 %v411
        %943 = vmatpush.msra.mxu0 %v401
        %944 = vmatpush.msra.mxu0 %v391
        %945 = vmatpush.msra.mxu0 %v381
        %946 = vmatpush.msra.mxu0 %v371
        %947 = vmatpush.msra.mxu0 %v361
        %948 = vmatpush.msra.mxu0 %v351
        %949 = vmatpush.msra.mxu0 %v341
        %950 = vmatmul.f32.gmra.mxu0 %v332
        %v951 = vpop.f32.mrf.mxu0
        %v952 = vadd.f32 0.0, %v951
        %953 = vdwg.mxu0
        %954 = vmatpush.msra.mxu0 %v651
        %955 = vmatpush.msra.mxu0 %v641
        %956 = vmatpush.msra.mxu0 %v631
        %957 = vmatpush.msra.mxu0 %v621
        %958 = vmatpush.msra.mxu0 %v611
        %959 = vmatpush.msra.mxu0 %v601
        %960 = vmatpush.msra.mxu0 %v591
        %961 = vmatpush.msra.mxu0 %v581
        %962 = vmatpush.msra.mxu0 %v571
        %963 = vmatpush.msra.mxu0 %v561
        %964 = vmatpush.msra.mxu0 %v551
        %965 = vmatpush.msra.mxu0 %v541
        %966 = vmatpush.msra.mxu0 %v531
        %967 = vmatpush.msra.mxu0 %v521
        %968 = vmatpush.msra.mxu0 %v511
        %969 = vmatpush.msra.mxu0 %v501
        %970 = vmatmul.f32.gmra.mxu0 %v333
        %v971 = vpop.f32.mrf.mxu0
        %v972 = vadd.f32 %v952, %v971
        %973 = vdwg.mxu0
        %974 = vmatpush.msra.mxu0 %v492
        %975 = vmatpush.msra.mxu0 %v482
        %976 = vmatpush.msra.mxu0 %v472
        %977 = vmatpush.msra.mxu0 %v462
        %978 = vmatpush.msra.mxu0 %v452
        %979 = vmatpush.msra.mxu0 %v442
        %980 = vmatpush.msra.mxu0 %v432
        %981 = vmatpush.msra.mxu0 %v422
        %982 = vmatpush.msra.mxu0 %v412
        %983 = vmatpush.msra.mxu0 %v402
        %984 = vmatpush.msra.mxu0 %v392
        %985 = vmatpush.msra.mxu0 %v382
        %986 = vmatpush.msra.mxu0 %v372
        %987 = vmatpush.msra.mxu0 %v362
        %988 = vmatpush.msra.mxu0 %v352
        %989 = vmatpush.msra.mxu0 %v342
        %990 = vmatmul.f32.gmra.mxu0 %v332
        %v991 = vpop.f32.mrf.mxu0
        %v992 = vadd.f32 0.0, %v991
        %993 = vdwg.mxu0
        %994 = vmatpush.msra.mxu0 %v652
        %995 = vmatpush.msra.mxu0 %v642
        %996 = vmatpush.msra.mxu0 %v632
        %997 = vmatpush.msra.mxu0 %v622
        %998 = vmatpush.msra.mxu0 %v612
        %999 = vmatpush.msra.mxu0 %v602
        %1000 = vmatpush.msra.mxu0 %v592
        %1001 = vmatpush.msra.mxu0 %v582
        %1002 = vmatpush.msra.mxu0 %v572
        %1003 = vmatpush.msra.mxu0 %v562
        %1004 = vmatpush.msra.mxu0 %v552
        %1005 = vmatpush.msra.mxu0 %v542
        %1006 = vmatpush.msra.mxu0 %v532
        %1007 = vmatpush.msra.mxu0 %v522
        %1008 = vmatpush.msra.mxu0 %v512
        %1009 = vmatpush.msra.mxu0 %v502
        %1010 = vmatmul.f32.gmra.mxu0 %v333
        %v1011 = vpop.f32.mrf.mxu0
        %v1012 = vadd.f32 %v992, %v1011
        %1013 = vdwg.mxu0
        %1014 = vmatpush.msra.mxu0 %v493
        %1015 = vmatpush.msra.mxu0 %v483
        %1016 = vmatpush.msra.mxu0 %v473
        %1017 = vmatpush.msra.mxu0 %v463
        %1018 = vmatpush.msra.mxu0 %v453
        %1019 = vmatpush.msra.mxu0 %v443
        %1020 = vmatpush.msra.mxu0 %v433
        %1021 = vmatpush.msra.mxu0 %v423
        %1022 = vmatpush.msra.mxu0 %v413
        %1023 = vmatpush.msra.mxu0 %v403
        %1024 = vmatpush.msra.mxu0 %v393
        %1025 = vmatpush.msra.mxu0 %v383
        %1026 = vmatpush.msra.mxu0 %v373
        %1027 = vmatpush.msra.mxu0 %v363
        %1028 = vmatpush.msra.mxu0 %v353
        %1029 = vmatpush.msra.mxu0 %v343
        %1030 = vmatmul.f32.gmra.mxu0 %v332
        %v1031 = vpop.f32.mrf.mxu0
        %v1032 = vadd.f32 0.0, %v1031
        %1033 = vdwg.mxu0
        %1034 = vmatpush.msra.mxu0 %v653
        %1035 = vmatpush.msra.mxu0 %v643
        %1036 = vmatpush.msra.mxu0 %v633
        %1037 = vmatpush.msra.mxu0 %v623
        %1038 = vmatpush.msra.mxu0 %v613
        %1039 = vmatpush.msra.mxu0 %v603
        %1040 = vmatpush.msra.mxu0 %v593
        %1041 = vmatpush.msra.mxu0 %v583
        %1042 = vmatpush.msra.mxu0 %v573
        %1043 = vmatpush.msra.mxu0 %v563
        %1044 = vmatpush.msra.mxu0 %v553
        %1045 = vmatpush.msra.mxu0 %v543
        %1046 = vmatpush.msra.mxu0 %v533
        %1047 = vmatpush.msra.mxu0 %v523
        %1048 = vmatpush.msra.mxu0 %v513
        %1049 = vmatpush.msra.mxu0 %v503
        %1050 = vmatmul.f32.gmra.mxu0 %v333
        %v1051 = vpop.f32.mrf.mxu0
        %v1052 = vadd.f32 %v1032, %v1051
        %1053 = vdwg.mxu0
        %1054 = vst [vmem:[#allocation2 + $0x8] sm:$0xff] %v692
        %1055 = vst [vmem:[#allocation2 + $0x10] sm:$0xff] %v732
        %1056 = vst [vmem:[#allocation2 + $0x18] sm:$0xff] %v772
        %1057 = vst [vmem:[#allocation2 + $0x20] sm:$0xff] %v812
        %1058 = vst [vmem:[#allocation2 + $0x28] sm:$0xff] %v852
        %1059 = vst [vmem:[#allocation2 + $0x30] sm:$0xff] %v892
        %1060 = vst [vmem:[#allocation2 + $0x38] sm:$0xff] %v932
        %1061 = vst [vmem:[#allocation2 + $0x40] sm:$0xff] %v972
        %1062 = vst [vmem:[#allocation2 + $0x48] sm:$0xff] %v1012
        %1063 = vst [vmem:[#allocation2 + $0x50] sm:$0xff] %v1052
        %v1064 = vld [vmem:[%s2] sm:$0xff]
        %v1065 = vld [vmem:[#allocation2] sm:$0xff]
        %v1066 = vld [vmem:[#allocation2 + $0x8] sm:$0xff]
        %v1067 = vld [vmem:[#allocation2 + $0x10] sm:$0xff]
        %v1068 = vld [vmem:[#allocation2 + $0x18] sm:$0xff]
        %v1069 = vld [vmem:[#allocation2 + $0x20] sm:$0xff]
        %v1070 = vld [vmem:[#allocation2 + $0x28] sm:$0xff]
        %v1071 = vld [vmem:[#allocation2 + $0x30] sm:$0xff]
        %v1072 = vld [vmem:[#allocation2 + $0x38] sm:$0xff]
        %v1073 = vld [vmem:[#allocation2 + $0x40] sm:$0xff]
        %v1074 = vld [vmem:[#allocation2 + $0x48] sm:$0xff]
        %v1075 = vld [vmem:[#allocation2 + $0x50] sm:$0xff]
        %s1076 = scalar_lea.vmem %s2, 8
        %v1077 = vld [vmem:[%s1076] sm:$0xff]
        %1089 = vrot.lane.b32.xlu0 %v1065, 34
        %v1090 = vpop.permute.xlu0 %1089
        %1091 = vrot.lane.b32.xlu0 %v1066, 34
        %v1092 = vpop.permute.xlu0 %1091
        %1093 = vrot.lane.b32.xlu0 %v1067, 34
        %v1094 = vpop.permute.xlu0 %1093
        %1095 = vrot.lane.b32.xlu0 %v1068, 34
        %v1096 = vpop.permute.xlu0 %1095
        %1097 = vrot.lane.b32.xlu0 %v1069, 34
        %v1098 = vpop.permute.xlu0 %1097
        %1099 = vrot.lane.b32.xlu0 %v1070, 34
        %v1100 = vpop.permute.xlu0 %1099
        %1101 = vrot.lane.b32.xlu0 %v1071, 34
        %v1102 = vpop.permute.xlu0 %1101
        %1103 = vrot.lane.b32.xlu0 %v1072, 34
        %v1104 = vpop.permute.xlu0 %1103
        %1105 = vrot.lane.b32.xlu0 %v1073, 34
        %v1106 = vpop.permute.xlu0 %1105
        %1107 = vrot.lane.b32.xlu0 %v1074, 34
        %v1108 = vpop.permute.xlu0 %1107
        %1109 = vrot.lane.b32.xlu0 %v1075, 34
        %v1110 = vpop.permute.xlu0 %1109
        %vm1111 = vcmask 277504
        %v1112 = vsel %vm1111, %v1090, %v1092
        %v1113 = vsel %vm1111, %v1092, %v1094
        %v1114 = vsel %vm1111, %v1094, %v1096
        %v1115 = vsel %vm1111, %v1096, %v1098
        %v1116 = vsel %vm1111, %v1098, %v1100
        %v1117 = vsel %vm1111, %v1100, %v1102
        %v1118 = vsel %vm1111, %v1102, %v1104
        %v1119 = vsel %vm1111, %v1104, %v1106
        %v1120 = vsel %vm1111, %v1106, %v1108
        %v1121 = vsel %vm1111, %v1108, %v1110
        %vm1132 = vcmask 64512
        %v1134 = vsel %vm1132, %v1077, 0
        %1136 = vmatpush.msra.mxu0 0.0
        %1137 = vmatpush.msra.mxu0 0.0
        %1138 = vmatpush.msra.mxu0 0.0
        %1139 = vmatpush.msra.mxu0 0.0
        %1140 = vmatpush.msra.mxu0 0.0
        %1141 = vmatpush.msra.mxu0 0.0
        %1142 = vmatpush.msra.mxu0 0.0
        %1143 = vmatpush.msra.mxu0 0.0
        %1144 = vmatpush.msra.mxu0 0.0
        %1145 = vmatpush.msra.mxu0 0.0
        %1146 = vmatpush.msra.mxu0 0.0
        %1147 = vmatpush.msra.mxu0 0.0
        %1148 = vmatpush.msra.mxu0 0.0
        %1149 = vmatpush.msra.mxu0 0.0
        %1150 = vmatpush.msra.mxu0 0.0
        %1151 = vmatpush.msra.mxu0 %v1112
        %1152 = vmatmul.f32.gmra.mxu0 %v1134
        %v1153 = vpop.f32.mrf.mxu0
        %v1154 = vadd.f32 0.0, %v1153
        %1155 = vdwg.mxu0
        %1156 = vmatpush.msra.mxu0 0.0
        %1157 = vmatpush.msra.mxu0 0.0
        %1158 = vmatpush.msra.mxu0 0.0
        %1159 = vmatpush.msra.mxu0 0.0
        %1160 = vmatpush.msra.mxu0 0.0
        %1161 = vmatpush.msra.mxu0 0.0
        %1162 = vmatpush.msra.mxu0 0.0
        %1163 = vmatpush.msra.mxu0 0.0
        %1164 = vmatpush.msra.mxu0 0.0
        %1165 = vmatpush.msra.mxu0 0.0
        %1166 = vmatpush.msra.mxu0 0.0
        %1167 = vmatpush.msra.mxu0 0.0
        %1168 = vmatpush.msra.mxu0 0.0
        %1169 = vmatpush.msra.mxu0 0.0
        %1170 = vmatpush.msra.mxu0 0.0
        %1171 = vmatpush.msra.mxu0 %v1113
        %1172 = vmatmul.f32.gmra.mxu0 %v1134
        %v1173 = vpop.f32.mrf.mxu0
        %v1174 = vadd.f32 0.0, %v1173
        %1175 = vdwg.mxu0
        %1176 = vmatpush.msra.mxu0 0.0
        %1177 = vmatpush.msra.mxu0 0.0
        %1178 = vmatpush.msra.mxu0 0.0
        %1179 = vmatpush.msra.mxu0 0.0
        %1180 = vmatpush.msra.mxu0 0.0
        %1181 = vmatpush.msra.mxu0 0.0
        %1182 = vmatpush.msra.mxu0 0.0
        %1183 = vmatpush.msra.mxu0 0.0
        %1184 = vmatpush.msra.mxu0 0.0
        %1185 = vmatpush.msra.mxu0 0.0
        %1186 = vmatpush.msra.mxu0 0.0
        %1187 = vmatpush.msra.mxu0 0.0
        %1188 = vmatpush.msra.mxu0 0.0
        %1189 = vmatpush.msra.mxu0 0.0
        %1190 = vmatpush.msra.mxu0 0.0
        %1191 = vmatpush.msra.mxu0 %v1114
        %1192 = vmatmul.f32.gmra.mxu0 %v1134
        %v1193 = vpop.f32.mrf.mxu0
        %v1194 = vadd.f32 0.0, %v1193
        %1195 = vdwg.mxu0
        %1196 = vmatpush.msra.mxu0 0.0
        %1197 = vmatpush.msra.mxu0 0.0
        %1198 = vmatpush.msra.mxu0 0.0
        %1199 = vmatpush.msra.mxu0 0.0
        %1200 = vmatpush.msra.mxu0 0.0
        %1201 = vmatpush.msra.mxu0 0.0
        %1202 = vmatpush.msra.mxu0 0.0
        %1203 = vmatpush.msra.mxu0 0.0
        %1204 = vmatpush.msra.mxu0 0.0
        %1205 = vmatpush.msra.mxu0 0.0
        %1206 = vmatpush.msra.mxu0 0.0
        %1207 = vmatpush.msra.mxu0 0.0
        %1208 = vmatpush.msra.mxu0 0.0
        %1209 = vmatpush.msra.mxu0 0.0
        %1210 = vmatpush.msra.mxu0 0.0
        %1211 = vmatpush.msra.mxu0 %v1115
        %1212 = vmatmul.f32.gmra.mxu0 %v1134
        %v1213 = vpop.f32.mrf.mxu0
        %v1214 = vadd.f32 0.0, %v1213
        %1215 = vdwg.mxu0
        %1216 = vmatpush.msra.mxu0 0.0
        %1217 = vmatpush.msra.mxu0 0.0
        %1218 = vmatpush.msra.mxu0 0.0
        %1219 = vmatpush.msra.mxu0 0.0
        %1220 = vmatpush.msra.mxu0 0.0
        %1221 = vmatpush.msra.mxu0 0.0
        %1222 = vmatpush.msra.mxu0 0.0
        %1223 = vmatpush.msra.mxu0 0.0
        %1224 = vmatpush.msra.mxu0 0.0
        %1225 = vmatpush.msra.mxu0 0.0
        %1226 = vmatpush.msra.mxu0 0.0
        %1227 = vmatpush.msra.mxu0 0.0
        %1228 = vmatpush.msra.mxu0 0.0
        %1229 = vmatpush.msra.mxu0 0.0
        %1230 = vmatpush.msra.mxu0 0.0
        %1231 = vmatpush.msra.mxu0 %v1116
        %1232 = vmatmul.f32.gmra.mxu0 %v1134
        %v1233 = vpop.f32.mrf.mxu0
        %v1234 = vadd.f32 0.0, %v1233
        %1235 = vdwg.mxu0
        %1236 = vmatpush.msra.mxu0 0.0
        %1237 = vmatpush.msra.mxu0 0.0
        %1238 = vmatpush.msra.mxu0 0.0
        %1239 = vmatpush.msra.mxu0 0.0
        %1240 = vmatpush.msra.mxu0 0.0
        %1241 = vmatpush.msra.mxu0 0.0
        %1242 = vmatpush.msra.mxu0 0.0
        %1243 = vmatpush.msra.mxu0 0.0
        %1244 = vmatpush.msra.mxu0 0.0
        %1245 = vmatpush.msra.mxu0 0.0
        %1246 = vmatpush.msra.mxu0 0.0
        %1247 = vmatpush.msra.mxu0 0.0
        %1248 = vmatpush.msra.mxu0 0.0
        %1249 = vmatpush.msra.mxu0 0.0
        %1250 = vmatpush.msra.mxu0 0.0
        %1251 = vmatpush.msra.mxu0 %v1117
        %1252 = vmatmul.f32.gmra.mxu0 %v1134
        %v1253 = vpop.f32.mrf.mxu0
        %v1254 = vadd.f32 0.0, %v1253
        %1255 = vdwg.mxu0
        %1256 = vmatpush.msra.mxu0 0.0
        %1257 = vmatpush.msra.mxu0 0.0
        %1258 = vmatpush.msra.mxu0 0.0
        %1259 = vmatpush.msra.mxu0 0.0
        %1260 = vmatpush.msra.mxu0 0.0
        %1261 = vmatpush.msra.mxu0 0.0
        %1262 = vmatpush.msra.mxu0 0.0
        %1263 = vmatpush.msra.mxu0 0.0
        %1264 = vmatpush.msra.mxu0 0.0
        %1265 = vmatpush.msra.mxu0 0.0
        %1266 = vmatpush.msra.mxu0 0.0
        %1267 = vmatpush.msra.mxu0 0.0
        %1268 = vmatpush.msra.mxu0 0.0
        %1269 = vmatpush.msra.mxu0 0.0
        %1270 = vmatpush.msra.mxu0 0.0
        %1271 = vmatpush.msra.mxu0 %v1118
        %1272 = vmatmul.f32.gmra.mxu0 %v1134
        %v1273 = vpop.f32.mrf.mxu0
        %v1274 = vadd.f32 0.0, %v1273
        %1275 = vdwg.mxu0
        %1276 = vmatpush.msra.mxu0 0.0
        %1277 = vmatpush.msra.mxu0 0.0
        %1278 = vmatpush.msra.mxu0 0.0
        %1279 = vmatpush.msra.mxu0 0.0
        %1280 = vmatpush.msra.mxu0 0.0
        %1281 = vmatpush.msra.mxu0 0.0
        %1282 = vmatpush.msra.mxu0 0.0
        %1283 = vmatpush.msra.mxu0 0.0
        %1284 = vmatpush.msra.mxu0 0.0
        %1285 = vmatpush.msra.mxu0 0.0
        %1286 = vmatpush.msra.mxu0 0.0
        %1287 = vmatpush.msra.mxu0 0.0
        %1288 = vmatpush.msra.mxu0 0.0
        %1289 = vmatpush.msra.mxu0 0.0
        %1290 = vmatpush.msra.mxu0 0.0
        %1291 = vmatpush.msra.mxu0 %v1119
        %1292 = vmatmul.f32.gmra.mxu0 %v1134
        %v1293 = vpop.f32.mrf.mxu0
        %v1294 = vadd.f32 0.0, %v1293
        %1295 = vdwg.mxu0
        %1296 = vmatpush.msra.mxu0 0.0
        %1297 = vmatpush.msra.mxu0 0.0
        %1298 = vmatpush.msra.mxu0 0.0
        %1299 = vmatpush.msra.mxu0 0.0
        %1300 = vmatpush.msra.mxu0 0.0
        %1301 = vmatpush.msra.mxu0 0.0
        %1302 = vmatpush.msra.mxu0 0.0
        %1303 = vmatpush.msra.mxu0 0.0
        %1304 = vmatpush.msra.mxu0 0.0
        %1305 = vmatpush.msra.mxu0 0.0
        %1306 = vmatpush.msra.mxu0 0.0
        %1307 = vmatpush.msra.mxu0 0.0
        %1308 = vmatpush.msra.mxu0 0.0
        %1309 = vmatpush.msra.mxu0 0.0
        %1310 = vmatpush.msra.mxu0 0.0
        %1311 = vmatpush.msra.mxu0 %v1120
        %1312 = vmatmul.f32.gmra.mxu0 %v1134
        %v1313 = vpop.f32.mrf.mxu0
        %v1314 = vadd.f32 0.0, %v1313
        %1315 = vdwg.mxu0
        %1316 = vmatpush.msra.mxu0 0.0
        %1317 = vmatpush.msra.mxu0 0.0
        %1318 = vmatpush.msra.mxu0 0.0
        %1319 = vmatpush.msra.mxu0 0.0
        %1320 = vmatpush.msra.mxu0 0.0
        %1321 = vmatpush.msra.mxu0 0.0
        %1322 = vmatpush.msra.mxu0 0.0
        %1323 = vmatpush.msra.mxu0 0.0
        %1324 = vmatpush.msra.mxu0 0.0
        %1325 = vmatpush.msra.mxu0 0.0
        %1326 = vmatpush.msra.mxu0 0.0
        %1327 = vmatpush.msra.mxu0 0.0
        %1328 = vmatpush.msra.mxu0 0.0
        %1329 = vmatpush.msra.mxu0 0.0
        %1330 = vmatpush.msra.mxu0 0.0
        %1331 = vmatpush.msra.mxu0 %v1121
        %1332 = vmatmul.f32.gmra.mxu0 %v1134
        %v1333 = vpop.f32.mrf.mxu0
        %v1334 = vadd.f32 0.0, %v1333
        %1335 = vdwg.mxu0
        %1336 = vrot.lane.b32.xlu0 %v1065, 35
        %v1337 = vpop.permute.xlu0 %1336
        %1338 = vrot.lane.b32.xlu0 %v1066, 35
        %v1339 = vpop.permute.xlu0 %1338
        %1340 = vrot.lane.b32.xlu0 %v1067, 35
        %v1341 = vpop.permute.xlu0 %1340
        %1342 = vrot.lane.b32.xlu0 %v1068, 35
        %v1343 = vpop.permute.xlu0 %1342
        %1344 = vrot.lane.b32.xlu0 %v1069, 35
        %v1345 = vpop.permute.xlu0 %1344
        %1346 = vrot.lane.b32.xlu0 %v1070, 35
        %v1347 = vpop.permute.xlu0 %1346
        %1348 = vrot.lane.b32.xlu0 %v1071, 35
        %v1349 = vpop.permute.xlu0 %1348
        %1350 = vrot.lane.b32.xlu0 %v1072, 35
        %v1351 = vpop.permute.xlu0 %1350
        %1352 = vrot.lane.b32.xlu0 %v1073, 35
        %v1353 = vpop.permute.xlu0 %1352
        %1354 = vrot.lane.b32.xlu0 %v1074, 35
        %v1355 = vpop.permute.xlu0 %1354
        %1356 = vrot.lane.b32.xlu0 %v1075, 35
        %v1357 = vpop.permute.xlu0 %1356
        %vm1358 = vcmask 285696
        %v1359 = vsel %vm1358, %v1337, %v1339
        %v1360 = vsel %vm1358, %v1339, %v1341
        %v1361 = vsel %vm1358, %v1341, %v1343
        %v1362 = vsel %vm1358, %v1343, %v1345
        %v1363 = vsel %vm1358, %v1345, %v1347
        %v1364 = vsel %vm1358, %v1347, %v1349
        %v1365 = vsel %vm1358, %v1349, %v1351
        %v1366 = vsel %vm1358, %v1351, %v1353
        %v1367 = vsel %vm1358, %v1353, %v1355
        %v1368 = vsel %vm1358, %v1355, %v1357
        %v1380 = vsel %vm1132, %v1064, 0
        %1382 = vmatpush.msra.mxu0 0.0
        %1383 = vmatpush.msra.mxu0 0.0
        %1384 = vmatpush.msra.mxu0 0.0
        %1385 = vmatpush.msra.mxu0 0.0
        %1386 = vmatpush.msra.mxu0 0.0
        %1387 = vmatpush.msra.mxu0 0.0
        %1388 = vmatpush.msra.mxu0 0.0
        %1389 = vmatpush.msra.mxu0 0.0
        %1390 = vmatpush.msra.mxu0 0.0
        %1391 = vmatpush.msra.mxu0 0.0
        %1392 = vmatpush.msra.mxu0 0.0
        %1393 = vmatpush.msra.mxu0 0.0
        %1394 = vmatpush.msra.mxu0 0.0
        %1395 = vmatpush.msra.mxu0 0.0
        %1396 = vmatpush.msra.mxu0 0.0
        %1397 = vmatpush.msra.mxu0 %v1359
        %1398 = vmatmul.f32.gmra.mxu0 %v1380
        %v1399 = vpop.f32.mrf.mxu0
        %v1400 = vadd.f32 %v1154, %v1399
        %1401 = vdwg.mxu0
        %1402 = vmatpush.msra.mxu0 0.0
        %1403 = vmatpush.msra.mxu0 0.0
        %1404 = vmatpush.msra.mxu0 0.0
        %1405 = vmatpush.msra.mxu0 0.0
        %1406 = vmatpush.msra.mxu0 0.0
        %1407 = vmatpush.msra.mxu0 0.0
        %1408 = vmatpush.msra.mxu0 0.0
        %1409 = vmatpush.msra.mxu0 0.0
        %1410 = vmatpush.msra.mxu0 0.0
        %1411 = vmatpush.msra.mxu0 0.0
        %1412 = vmatpush.msra.mxu0 0.0
        %1413 = vmatpush.msra.mxu0 0.0
        %1414 = vmatpush.msra.mxu0 0.0
        %1415 = vmatpush.msra.mxu0 0.0
        %1416 = vmatpush.msra.mxu0 0.0
        %1417 = vmatpush.msra.mxu0 %v1360
        %1418 = vmatmul.f32.gmra.mxu0 %v1380
        %v1419 = vpop.f32.mrf.mxu0
        %v1420 = vadd.f32 %v1174, %v1419
        %1421 = vdwg.mxu0
        %1422 = vmatpush.msra.mxu0 0.0
        %1423 = vmatpush.msra.mxu0 0.0
        %1424 = vmatpush.msra.mxu0 0.0
        %1425 = vmatpush.msra.mxu0 0.0
        %1426 = vmatpush.msra.mxu0 0.0
        %1427 = vmatpush.msra.mxu0 0.0
        %1428 = vmatpush.msra.mxu0 0.0
        %1429 = vmatpush.msra.mxu0 0.0
        %1430 = vmatpush.msra.mxu0 0.0
        %1431 = vmatpush.msra.mxu0 0.0
        %1432 = vmatpush.msra.mxu0 0.0
        %1433 = vmatpush.msra.mxu0 0.0
        %1434 = vmatpush.msra.mxu0 0.0
        %1435 = vmatpush.msra.mxu0 0.0
        %1436 = vmatpush.msra.mxu0 0.0
        %1437 = vmatpush.msra.mxu0 %v1361
        %1438 = vmatmul.f32.gmra.mxu0 %v1380
        %v1439 = vpop.f32.mrf.mxu0
        %v1440 = vadd.f32 %v1194, %v1439
        %1441 = vdwg.mxu0
        %1442 = vmatpush.msra.mxu0 0.0
        %1443 = vmatpush.msra.mxu0 0.0
        %1444 = vmatpush.msra.mxu0 0.0
        %1445 = vmatpush.msra.mxu0 0.0
        %1446 = vmatpush.msra.mxu0 0.0
        %1447 = vmatpush.msra.mxu0 0.0
        %1448 = vmatpush.msra.mxu0 0.0
        %1449 = vmatpush.msra.mxu0 0.0
        %1450 = vmatpush.msra.mxu0 0.0
        %1451 = vmatpush.msra.mxu0 0.0
        %1452 = vmatpush.msra.mxu0 0.0
        %1453 = vmatpush.msra.mxu0 0.0
        %1454 = vmatpush.msra.mxu0 0.0
        %1455 = vmatpush.msra.mxu0 0.0
        %1456 = vmatpush.msra.mxu0 0.0
        %1457 = vmatpush.msra.mxu0 %v1362
        %1458 = vmatmul.f32.gmra.mxu0 %v1380
        %v1459 = vpop.f32.mrf.mxu0
        %v1460 = vadd.f32 %v1214, %v1459
        %1461 = vdwg.mxu0
        %1462 = vmatpush.msra.mxu0 0.0
        %1463 = vmatpush.msra.mxu0 0.0
        %1464 = vmatpush.msra.mxu0 0.0
        %1465 = vmatpush.msra.mxu0 0.0
        %1466 = vmatpush.msra.mxu0 0.0
        %1467 = vmatpush.msra.mxu0 0.0
        %1468 = vmatpush.msra.mxu0 0.0
        %1469 = vmatpush.msra.mxu0 0.0
        %1470 = vmatpush.msra.mxu0 0.0
        %1471 = vmatpush.msra.mxu0 0.0
        %1472 = vmatpush.msra.mxu0 0.0
        %1473 = vmatpush.msra.mxu0 0.0
        %1474 = vmatpush.msra.mxu0 0.0
        %1475 = vmatpush.msra.mxu0 0.0
        %1476 = vmatpush.msra.mxu0 0.0
        %1477 = vmatpush.msra.mxu0 %v1363
        %1478 = vmatmul.f32.gmra.mxu0 %v1380
        %v1479 = vpop.f32.mrf.mxu0
        %v1480 = vadd.f32 %v1234, %v1479
        %1481 = vdwg.mxu0
        %1482 = vmatpush.msra.mxu0 0.0
        %1483 = vmatpush.msra.mxu0 0.0
        %1484 = vmatpush.msra.mxu0 0.0
        %1485 = vmatpush.msra.mxu0 0.0
        %1486 = vmatpush.msra.mxu0 0.0
        %1487 = vmatpush.msra.mxu0 0.0
        %1488 = vmatpush.msra.mxu0 0.0
        %1489 = vmatpush.msra.mxu0 0.0
        %1490 = vmatpush.msra.mxu0 0.0
        %1491 = vmatpush.msra.mxu0 0.0
        %1492 = vmatpush.msra.mxu0 0.0
        %1493 = vmatpush.msra.mxu0 0.0
        %1494 = vmatpush.msra.mxu0 0.0
        %1495 = vmatpush.msra.mxu0 0.0
        %1496 = vmatpush.msra.mxu0 0.0
        %1497 = vmatpush.msra.mxu0 %v1364
        %1498 = vmatmul.f32.gmra.mxu0 %v1380
        %v1499 = vpop.f32.mrf.mxu0
        %v1500 = vadd.f32 %v1254, %v1499
        %1501 = vdwg.mxu0
        %1502 = vmatpush.msra.mxu0 0.0
        %1503 = vmatpush.msra.mxu0 0.0
        %1504 = vmatpush.msra.mxu0 0.0
        %1505 = vmatpush.msra.mxu0 0.0
        %1506 = vmatpush.msra.mxu0 0.0
        %1507 = vmatpush.msra.mxu0 0.0
        %1508 = vmatpush.msra.mxu0 0.0
        %1509 = vmatpush.msra.mxu0 0.0
        %1510 = vmatpush.msra.mxu0 0.0
        %1511 = vmatpush.msra.mxu0 0.0
        %1512 = vmatpush.msra.mxu0 0.0
        %1513 = vmatpush.msra.mxu0 0.0
        %1514 = vmatpush.msra.mxu0 0.0
        %1515 = vmatpush.msra.mxu0 0.0
        %1516 = vmatpush.msra.mxu0 0.0
        %1517 = vmatpush.msra.mxu0 %v1365
        %1518 = vmatmul.f32.gmra.mxu0 %v1380
        %v1519 = vpop.f32.mrf.mxu0
        %v1520 = vadd.f32 %v1274, %v1519
        %1521 = vdwg.mxu0
        %1522 = vmatpush.msra.mxu0 0.0
        %1523 = vmatpush.msra.mxu0 0.0
        %1524 = vmatpush.msra.mxu0 0.0
        %1525 = vmatpush.msra.mxu0 0.0
        %1526 = vmatpush.msra.mxu0 0.0
        %1527 = vmatpush.msra.mxu0 0.0
        %1528 = vmatpush.msra.mxu0 0.0
        %1529 = vmatpush.msra.mxu0 0.0
        %1530 = vmatpush.msra.mxu0 0.0
        %1531 = vmatpush.msra.mxu0 0.0
        %1532 = vmatpush.msra.mxu0 0.0
        %1533 = vmatpush.msra.mxu0 0.0
        %1534 = vmatpush.msra.mxu0 0.0
        %1535 = vmatpush.msra.mxu0 0.0
        %1536 = vmatpush.msra.mxu0 0.0
        %1537 = vmatpush.msra.mxu0 %v1366
        %1538 = vmatmul.f32.gmra.mxu0 %v1380
        %v1539 = vpop.f32.mrf.mxu0
        %v1540 = vadd.f32 %v1294, %v1539
        %1541 = vdwg.mxu0
        %1542 = vmatpush.msra.mxu0 0.0
        %1543 = vmatpush.msra.mxu0 0.0
        %1544 = vmatpush.msra.mxu0 0.0
        %1545 = vmatpush.msra.mxu0 0.0
        %1546 = vmatpush.msra.mxu0 0.0
        %1547 = vmatpush.msra.mxu0 0.0
        %1548 = vmatpush.msra.mxu0 0.0
        %1549 = vmatpush.msra.mxu0 0.0
        %1550 = vmatpush.msra.mxu0 0.0
        %1551 = vmatpush.msra.mxu0 0.0
        %1552 = vmatpush.msra.mxu0 0.0
        %1553 = vmatpush.msra.mxu0 0.0
        %1554 = vmatpush.msra.mxu0 0.0
        %1555 = vmatpush.msra.mxu0 0.0
        %1556 = vmatpush.msra.mxu0 0.0
        %1557 = vmatpush.msra.mxu0 %v1367
        %1558 = vmatmul.f32.gmra.mxu0 %v1380
        %v1559 = vpop.f32.mrf.mxu0
        %v1560 = vadd.f32 %v1314, %v1559
        %1561 = vdwg.mxu0
        %1562 = vmatpush.msra.mxu0 0.0
        %1563 = vmatpush.msra.mxu0 0.0
        %1564 = vmatpush.msra.mxu0 0.0
        %1565 = vmatpush.msra.mxu0 0.0
        %1566 = vmatpush.msra.mxu0 0.0
        %1567 = vmatpush.msra.mxu0 0.0
        %1568 = vmatpush.msra.mxu0 0.0
        %1569 = vmatpush.msra.mxu0 0.0
        %1570 = vmatpush.msra.mxu0 0.0
        %1571 = vmatpush.msra.mxu0 0.0
        %1572 = vmatpush.msra.mxu0 0.0
        %1573 = vmatpush.msra.mxu0 0.0
        %1574 = vmatpush.msra.mxu0 0.0
        %1575 = vmatpush.msra.mxu0 0.0
        %1576 = vmatpush.msra.mxu0 0.0
        %1577 = vmatpush.msra.mxu0 %v1368
        %1578 = vmatmul.f32.gmra.mxu0 %v1380
        %v1579 = vpop.f32.mrf.mxu0
        %v1580 = vadd.f32 %v1334, %v1579
        %1581 = vdwg.mxu0
        %s1582 = scalar_lea.vmem %s2, 16
        %v1583 = vld [vmem:[%s1582] sm:$0xff]
        %1584 = vrot.lane.b32.xlu0 %v1065, 33
        %v1585 = vpop.permute.xlu0 %1584
        %1586 = vrot.lane.b32.xlu0 %v1066, 33
        %v1587 = vpop.permute.xlu0 %1586
        %1588 = vrot.lane.b32.xlu0 %v1067, 33
        %v1589 = vpop.permute.xlu0 %1588
        %1590 = vrot.lane.b32.xlu0 %v1068, 33
        %v1591 = vpop.permute.xlu0 %1590
        %1592 = vrot.lane.b32.xlu0 %v1069, 33
        %v1593 = vpop.permute.xlu0 %1592
        %1594 = vrot.lane.b32.xlu0 %v1070, 33
        %v1595 = vpop.permute.xlu0 %1594
        %1596 = vrot.lane.b32.xlu0 %v1071, 33
        %v1597 = vpop.permute.xlu0 %1596
        %1598 = vrot.lane.b32.xlu0 %v1072, 33
        %v1599 = vpop.permute.xlu0 %1598
        %1600 = vrot.lane.b32.xlu0 %v1073, 33
        %v1601 = vpop.permute.xlu0 %1600
        %1602 = vrot.lane.b32.xlu0 %v1074, 33
        %v1603 = vpop.permute.xlu0 %1602
        %1604 = vrot.lane.b32.xlu0 %v1075, 33
        %v1605 = vpop.permute.xlu0 %1604
        %vm1606 = vcmask 269312
        %v1607 = vsel %vm1606, %v1585, %v1587
        %v1608 = vsel %vm1606, %v1587, %v1589
        %v1609 = vsel %vm1606, %v1589, %v1591
        %v1610 = vsel %vm1606, %v1591, %v1593
        %v1611 = vsel %vm1606, %v1593, %v1595
        %v1612 = vsel %vm1606, %v1595, %v1597
        %v1613 = vsel %vm1606, %v1597, %v1599
        %v1614 = vsel %vm1606, %v1599, %v1601
        %v1615 = vsel %vm1606, %v1601, %v1603
        %v1616 = vsel %vm1606, %v1603, %v1605
        %v1628 = vsel %vm1132, %v1583, 0
        %1630 = vmatpush.msra.mxu0 0.0
        %1631 = vmatpush.msra.mxu0 0.0
        %1632 = vmatpush.msra.mxu0 0.0
        %1633 = vmatpush.msra.mxu0 0.0
        %1634 = vmatpush.msra.mxu0 0.0
        %1635 = vmatpush.msra.mxu0 0.0
        %1636 = vmatpush.msra.mxu0 0.0
        %1637 = vmatpush.msra.mxu0 0.0
        %1638 = vmatpush.msra.mxu0 0.0
        %1639 = vmatpush.msra.mxu0 0.0
        %1640 = vmatpush.msra.mxu0 0.0
        %1641 = vmatpush.msra.mxu0 0.0
        %1642 = vmatpush.msra.mxu0 0.0
        %1643 = vmatpush.msra.mxu0 0.0
        %1644 = vmatpush.msra.mxu0 0.0
        %1645 = vmatpush.msra.mxu0 %v1607
        %1646 = vmatmul.f32.gmra.mxu0 %v1628
        %v1647 = vpop.f32.mrf.mxu0
        %v1648 = vadd.f32 0.0, %v1647
        %1649 = vdwg.mxu0
        %1650 = vmatpush.msra.mxu0 0.0
        %1651 = vmatpush.msra.mxu0 0.0
        %1652 = vmatpush.msra.mxu0 0.0
        %1653 = vmatpush.msra.mxu0 0.0
        %1654 = vmatpush.msra.mxu0 0.0
        %1655 = vmatpush.msra.mxu0 0.0
        %1656 = vmatpush.msra.mxu0 0.0
        %1657 = vmatpush.msra.mxu0 0.0
        %1658 = vmatpush.msra.mxu0 0.0
        %1659 = vmatpush.msra.mxu0 0.0
        %1660 = vmatpush.msra.mxu0 0.0
        %1661 = vmatpush.msra.mxu0 0.0
        %1662 = vmatpush.msra.mxu0 0.0
        %1663 = vmatpush.msra.mxu0 0.0
        %1664 = vmatpush.msra.mxu0 0.0
        %1665 = vmatpush.msra.mxu0 %v1608
        %1666 = vmatmul.f32.gmra.mxu0 %v1628
        %v1667 = vpop.f32.mrf.mxu0
        %v1668 = vadd.f32 0.0, %v1667
        %1669 = vdwg.mxu0
        %1670 = vmatpush.msra.mxu0 0.0
        %1671 = vmatpush.msra.mxu0 0.0
        %1672 = vmatpush.msra.mxu0 0.0
        %1673 = vmatpush.msra.mxu0 0.0
        %1674 = vmatpush.msra.mxu0 0.0
        %1675 = vmatpush.msra.mxu0 0.0
        %1676 = vmatpush.msra.mxu0 0.0
        %1677 = vmatpush.msra.mxu0 0.0
        %1678 = vmatpush.msra.mxu0 0.0
        %1679 = vmatpush.msra.mxu0 0.0
        %1680 = vmatpush.msra.mxu0 0.0
        %1681 = vmatpush.msra.mxu0 0.0
        %1682 = vmatpush.msra.mxu0 0.0
        %1683 = vmatpush.msra.mxu0 0.0
        %1684 = vmatpush.msra.mxu0 0.0
        %1685 = vmatpush.msra.mxu0 %v1609
        %1686 = vmatmul.f32.gmra.mxu0 %v1628
        %v1687 = vpop.f32.mrf.mxu0
        %v1688 = vadd.f32 0.0, %v1687
        %1689 = vdwg.mxu0
        %1690 = vmatpush.msra.mxu0 0.0
        %1691 = vmatpush.msra.mxu0 0.0
        %1692 = vmatpush.msra.mxu0 0.0
        %1693 = vmatpush.msra.mxu0 0.0
        %1694 = vmatpush.msra.mxu0 0.0
        %1695 = vmatpush.msra.mxu0 0.0
        %1696 = vmatpush.msra.mxu0 0.0
        %1697 = vmatpush.msra.mxu0 0.0
        %1698 = vmatpush.msra.mxu0 0.0
        %1699 = vmatpush.msra.mxu0 0.0
        %1700 = vmatpush.msra.mxu0 0.0
        %1701 = vmatpush.msra.mxu0 0.0
        %1702 = vmatpush.msra.mxu0 0.0
        %1703 = vmatpush.msra.mxu0 0.0
        %1704 = vmatpush.msra.mxu0 0.0
        %1705 = vmatpush.msra.mxu0 %v1610
        %1706 = vmatmul.f32.gmra.mxu0 %v1628
        %v1707 = vpop.f32.mrf.mxu0
        %v1708 = vadd.f32 0.0, %v1707
        %1709 = vdwg.mxu0
        %1710 = vmatpush.msra.mxu0 0.0
        %1711 = vmatpush.msra.mxu0 0.0
        %1712 = vmatpush.msra.mxu0 0.0
        %1713 = vmatpush.msra.mxu0 0.0
        %1714 = vmatpush.msra.mxu0 0.0
        %1715 = vmatpush.msra.mxu0 0.0
        %1716 = vmatpush.msra.mxu0 0.0
        %1717 = vmatpush.msra.mxu0 0.0
        %1718 = vmatpush.msra.mxu0 0.0
        %1719 = vmatpush.msra.mxu0 0.0
        %1720 = vmatpush.msra.mxu0 0.0
        %1721 = vmatpush.msra.mxu0 0.0
        %1722 = vmatpush.msra.mxu0 0.0
        %1723 = vmatpush.msra.mxu0 0.0
        %1724 = vmatpush.msra.mxu0 0.0
        %1725 = vmatpush.msra.mxu0 %v1611
        %1726 = vmatmul.f32.gmra.mxu0 %v1628
        %v1727 = vpop.f32.mrf.mxu0
        %v1728 = vadd.f32 0.0, %v1727
        %1729 = vdwg.mxu0
        %1730 = vmatpush.msra.mxu0 0.0
        %1731 = vmatpush.msra.mxu0 0.0
        %1732 = vmatpush.msra.mxu0 0.0
        %1733 = vmatpush.msra.mxu0 0.0
        %1734 = vmatpush.msra.mxu0 0.0
        %1735 = vmatpush.msra.mxu0 0.0
        %1736 = vmatpush.msra.mxu0 0.0
        %1737 = vmatpush.msra.mxu0 0.0
        %1738 = vmatpush.msra.mxu0 0.0
        %1739 = vmatpush.msra.mxu0 0.0
        %1740 = vmatpush.msra.mxu0 0.0
        %1741 = vmatpush.msra.mxu0 0.0
        %1742 = vmatpush.msra.mxu0 0.0
        %1743 = vmatpush.msra.mxu0 0.0
        %1744 = vmatpush.msra.mxu0 0.0
        %1745 = vmatpush.msra.mxu0 %v1612
        %1746 = vmatmul.f32.gmra.mxu0 %v1628
        %v1747 = vpop.f32.mrf.mxu0
        %v1748 = vadd.f32 0.0, %v1747
        %1749 = vdwg.mxu0
        %1750 = vmatpush.msra.mxu0 0.0
        %1751 = vmatpush.msra.mxu0 0.0
        %1752 = vmatpush.msra.mxu0 0.0
        %1753 = vmatpush.msra.mxu0 0.0
        %1754 = vmatpush.msra.mxu0 0.0
        %1755 = vmatpush.msra.mxu0 0.0
        %1756 = vmatpush.msra.mxu0 0.0
        %1757 = vmatpush.msra.mxu0 0.0
        %1758 = vmatpush.msra.mxu0 0.0
        %1759 = vmatpush.msra.mxu0 0.0
        %1760 = vmatpush.msra.mxu0 0.0
        %1761 = vmatpush.msra.mxu0 0.0
        %1762 = vmatpush.msra.mxu0 0.0
        %1763 = vmatpush.msra.mxu0 0.0
        %1764 = vmatpush.msra.mxu0 0.0
        %1765 = vmatpush.msra.mxu0 %v1613
        %1766 = vmatmul.f32.gmra.mxu0 %v1628
        %v1767 = vpop.f32.mrf.mxu0
        %v1768 = vadd.f32 0.0, %v1767
        %1769 = vdwg.mxu0
        %1770 = vmatpush.msra.mxu0 0.0
        %1771 = vmatpush.msra.mxu0 0.0
        %1772 = vmatpush.msra.mxu0 0.0
        %1773 = vmatpush.msra.mxu0 0.0
        %1774 = vmatpush.msra.mxu0 0.0
        %1775 = vmatpush.msra.mxu0 0.0
        %1776 = vmatpush.msra.mxu0 0.0
        %1777 = vmatpush.msra.mxu0 0.0
        %1778 = vmatpush.msra.mxu0 0.0
        %1779 = vmatpush.msra.mxu0 0.0
        %1780 = vmatpush.msra.mxu0 0.0
        %1781 = vmatpush.msra.mxu0 0.0
        %1782 = vmatpush.msra.mxu0 0.0
        %1783 = vmatpush.msra.mxu0 0.0
        %1784 = vmatpush.msra.mxu0 0.0
        %1785 = vmatpush.msra.mxu0 %v1614
        %1786 = vmatmul.f32.gmra.mxu0 %v1628
        %v1787 = vpop.f32.mrf.mxu0
        %v1788 = vadd.f32 0.0, %v1787
        %1789 = vdwg.mxu0
        %1790 = vmatpush.msra.mxu0 0.0
        %1791 = vmatpush.msra.mxu0 0.0
        %1792 = vmatpush.msra.mxu0 0.0
        %1793 = vmatpush.msra.mxu0 0.0
        %1794 = vmatpush.msra.mxu0 0.0
        %1795 = vmatpush.msra.mxu0 0.0
        %1796 = vmatpush.msra.mxu0 0.0
        %1797 = vmatpush.msra.mxu0 0.0
        %1798 = vmatpush.msra.mxu0 0.0
        %1799 = vmatpush.msra.mxu0 0.0
        %1800 = vmatpush.msra.mxu0 0.0
        %1801 = vmatpush.msra.mxu0 0.0
        %1802 = vmatpush.msra.mxu0 0.0
        %1803 = vmatpush.msra.mxu0 0.0
        %1804 = vmatpush.msra.mxu0 0.0
        %1805 = vmatpush.msra.mxu0 %v1615
        %1806 = vmatmul.f32.gmra.mxu0 %v1628
        %v1807 = vpop.f32.mrf.mxu0
        %v1808 = vadd.f32 0.0, %v1807
        %1809 = vdwg.mxu0
        %1810 = vmatpush.msra.mxu0 0.0
        %1811 = vmatpush.msra.mxu0 0.0
        %1812 = vmatpush.msra.mxu0 0.0
        %1813 = vmatpush.msra.mxu0 0.0
        %1814 = vmatpush.msra.mxu0 0.0
        %1815 = vmatpush.msra.mxu0 0.0
        %1816 = vmatpush.msra.mxu0 0.0
        %1817 = vmatpush.msra.mxu0 0.0
        %1818 = vmatpush.msra.mxu0 0.0
        %1819 = vmatpush.msra.mxu0 0.0
        %1820 = vmatpush.msra.mxu0 0.0
        %1821 = vmatpush.msra.mxu0 0.0
        %1822 = vmatpush.msra.mxu0 0.0
        %1823 = vmatpush.msra.mxu0 0.0
        %1824 = vmatpush.msra.mxu0 0.0
        %1825 = vmatpush.msra.mxu0 %v1616
        %1826 = vmatmul.f32.gmra.mxu0 %v1628
        %v1827 = vpop.f32.mrf.mxu0
        %v1828 = vadd.f32 0.0, %v1827
        %1829 = vdwg.mxu0
        %v1830 = vadd.f32 %v1400, %v1648
        %v1831 = vadd.f32 %v1420, %v1668
        %v1832 = vadd.f32 %v1440, %v1688
        %v1833 = vadd.f32 %v1460, %v1708
        %v1834 = vadd.f32 %v1480, %v1728
        %v1835 = vadd.f32 %v1500, %v1748
        %v1836 = vadd.f32 %v1520, %v1768
        %v1837 = vadd.f32 %v1540, %v1788
        %v1838 = vadd.f32 %v1560, %v1808
        %v1839 = vadd.f32 %v1580, %v1828
        %s1840 = scalar_lea.vmem %s2, 24
        %v1841 = vld [vmem:[%s1840] sm:$0xff]
        %1842 = vrot.lane.b32.xlu0 %v1065, 1
        %v1843 = vpop.permute.xlu0 %1842
        %1844 = vrot.lane.b32.xlu0 %v1066, 1
        %v1845 = vpop.permute.xlu0 %1844
        %1846 = vrot.lane.b32.xlu0 %v1067, 1
        %v1847 = vpop.permute.xlu0 %1846
        %1848 = vrot.lane.b32.xlu0 %v1068, 1
        %v1849 = vpop.permute.xlu0 %1848
        %1850 = vrot.lane.b32.xlu0 %v1069, 1
        %v1851 = vpop.permute.xlu0 %1850
        %1852 = vrot.lane.b32.xlu0 %v1070, 1
        %v1853 = vpop.permute.xlu0 %1852
        %1854 = vrot.lane.b32.xlu0 %v1071, 1
        %v1855 = vpop.permute.xlu0 %1854
        %1856 = vrot.lane.b32.xlu0 %v1072, 1
        %v1857 = vpop.permute.xlu0 %1856
        %1858 = vrot.lane.b32.xlu0 %v1073, 1
        %v1859 = vpop.permute.xlu0 %1858
        %1860 = vrot.lane.b32.xlu0 %v1074, 1
        %v1861 = vpop.permute.xlu0 %1860
        %1862 = vrot.lane.b32.xlu0 %v1075, 1
        %v1863 = vpop.permute.xlu0 %1862
        %vm1864 = vcmask 7168
        %v1865 = vsel %vm1864, %v1843, %v1845
        %v1866 = vsel %vm1864, %v1845, %v1847
        %v1867 = vsel %vm1864, %v1847, %v1849
        %v1868 = vsel %vm1864, %v1849, %v1851
        %v1869 = vsel %vm1864, %v1851, %v1853
        %v1870 = vsel %vm1864, %v1853, %v1855
        %v1871 = vsel %vm1864, %v1855, %v1857
        %v1872 = vsel %vm1864, %v1857, %v1859
        %v1873 = vsel %vm1864, %v1859, %v1861
        %v1874 = vsel %vm1864, %v1861, %v1863
        %v1886 = vsel %vm1132, %v1841, 0
        %1888 = vmatpush.msra.mxu0 0.0
        %1889 = vmatpush.msra.mxu0 0.0
        %1890 = vmatpush.msra.mxu0 0.0
        %1891 = vmatpush.msra.mxu0 0.0
        %1892 = vmatpush.msra.mxu0 0.0
        %1893 = vmatpush.msra.mxu0 0.0
        %1894 = vmatpush.msra.mxu0 0.0
        %1895 = vmatpush.msra.mxu0 0.0
        %1896 = vmatpush.msra.mxu0 0.0
        %1897 = vmatpush.msra.mxu0 0.0
        %1898 = vmatpush.msra.mxu0 0.0
        %1899 = vmatpush.msra.mxu0 0.0
        %1900 = vmatpush.msra.mxu0 0.0
        %1901 = vmatpush.msra.mxu0 0.0
        %1902 = vmatpush.msra.mxu0 0.0
        %1903 = vmatpush.msra.mxu0 %v1865
        %1904 = vmatmul.f32.gmra.mxu0 %v1886
        %v1905 = vpop.f32.mrf.mxu0
        %v1906 = vadd.f32 0.0, %v1905
        %1907 = vdwg.mxu0
        %1908 = vmatpush.msra.mxu0 0.0
        %1909 = vmatpush.msra.mxu0 0.0
        %1910 = vmatpush.msra.mxu0 0.0
        %1911 = vmatpush.msra.mxu0 0.0
        %1912 = vmatpush.msra.mxu0 0.0
        %1913 = vmatpush.msra.mxu0 0.0
        %1914 = vmatpush.msra.mxu0 0.0
        %1915 = vmatpush.msra.mxu0 0.0
        %1916 = vmatpush.msra.mxu0 0.0
        %1917 = vmatpush.msra.mxu0 0.0
        %1918 = vmatpush.msra.mxu0 0.0
        %1919 = vmatpush.msra.mxu0 0.0
        %1920 = vmatpush.msra.mxu0 0.0
        %1921 = vmatpush.msra.mxu0 0.0
        %1922 = vmatpush.msra.mxu0 0.0
        %1923 = vmatpush.msra.mxu0 %v1866
        %1924 = vmatmul.f32.gmra.mxu0 %v1886
        %v1925 = vpop.f32.mrf.mxu0
        %v1926 = vadd.f32 0.0, %v1925
        %1927 = vdwg.mxu0
        %1928 = vmatpush.msra.mxu0 0.0
        %1929 = vmatpush.msra.mxu0 0.0
        %1930 = vmatpush.msra.mxu0 0.0
        %1931 = vmatpush.msra.mxu0 0.0
        %1932 = vmatpush.msra.mxu0 0.0
        %1933 = vmatpush.msra.mxu0 0.0
        %1934 = vmatpush.msra.mxu0 0.0
        %1935 = vmatpush.msra.mxu0 0.0
        %1936 = vmatpush.msra.mxu0 0.0
        %1937 = vmatpush.msra.mxu0 0.0
        %1938 = vmatpush.msra.mxu0 0.0
        %1939 = vmatpush.msra.mxu0 0.0
        %1940 = vmatpush.msra.mxu0 0.0
        %1941 = vmatpush.msra.mxu0 0.0
        %1942 = vmatpush.msra.mxu0 0.0
        %1943 = vmatpush.msra.mxu0 %v1867
        %1944 = vmatmul.f32.gmra.mxu0 %v1886
        %v1945 = vpop.f32.mrf.mxu0
        %v1946 = vadd.f32 0.0, %v1945
        %1947 = vdwg.mxu0
        %1948 = vmatpush.msra.mxu0 0.0
        %1949 = vmatpush.msra.mxu0 0.0
        %1950 = vmatpush.msra.mxu0 0.0
        %1951 = vmatpush.msra.mxu0 0.0
        %1952 = vmatpush.msra.mxu0 0.0
        %1953 = vmatpush.msra.mxu0 0.0
        %1954 = vmatpush.msra.mxu0 0.0
        %1955 = vmatpush.msra.mxu0 0.0
        %1956 = vmatpush.msra.mxu0 0.0
        %1957 = vmatpush.msra.mxu0 0.0
        %1958 = vmatpush.msra.mxu0 0.0
        %1959 = vmatpush.msra.mxu0 0.0
        %1960 = vmatpush.msra.mxu0 0.0
        %1961 = vmatpush.msra.mxu0 0.0
        %1962 = vmatpush.msra.mxu0 0.0
        %1963 = vmatpush.msra.mxu0 %v1868
        %1964 = vmatmul.f32.gmra.mxu0 %v1886
        %v1965 = vpop.f32.mrf.mxu0
        %v1966 = vadd.f32 0.0, %v1965
        %1967 = vdwg.mxu0
        %1968 = vmatpush.msra.mxu0 0.0
        %1969 = vmatpush.msra.mxu0 0.0
        %1970 = vmatpush.msra.mxu0 0.0
        %1971 = vmatpush.msra.mxu0 0.0
        %1972 = vmatpush.msra.mxu0 0.0
        %1973 = vmatpush.msra.mxu0 0.0
        %1974 = vmatpush.msra.mxu0 0.0
        %1975 = vmatpush.msra.mxu0 0.0
        %1976 = vmatpush.msra.mxu0 0.0
        %1977 = vmatpush.msra.mxu0 0.0
        %1978 = vmatpush.msra.mxu0 0.0
        %1979 = vmatpush.msra.mxu0 0.0
        %1980 = vmatpush.msra.mxu0 0.0
        %1981 = vmatpush.msra.mxu0 0.0
        %1982 = vmatpush.msra.mxu0 0.0
        %1983 = vmatpush.msra.mxu0 %v1869
        %1984 = vmatmul.f32.gmra.mxu0 %v1886
        %v1985 = vpop.f32.mrf.mxu0
        %v1986 = vadd.f32 0.0, %v1985
        %1987 = vdwg.mxu0
        %1988 = vmatpush.msra.mxu0 0.0
        %1989 = vmatpush.msra.mxu0 0.0
        %1990 = vmatpush.msra.mxu0 0.0
        %1991 = vmatpush.msra.mxu0 0.0
        %1992 = vmatpush.msra.mxu0 0.0
        %1993 = vmatpush.msra.mxu0 0.0
        %1994 = vmatpush.msra.mxu0 0.0
        %1995 = vmatpush.msra.mxu0 0.0
        %1996 = vmatpush.msra.mxu0 0.0
        %1997 = vmatpush.msra.mxu0 0.0
        %1998 = vmatpush.msra.mxu0 0.0
        %1999 = vmatpush.msra.mxu0 0.0
        %2000 = vmatpush.msra.mxu0 0.0
        %2001 = vmatpush.msra.mxu0 0.0
        %2002 = vmatpush.msra.mxu0 0.0
        %2003 = vmatpush.msra.mxu0 %v1870
        %2004 = vmatmul.f32.gmra.mxu0 %v1886
        %v2005 = vpop.f32.mrf.mxu0
        %v2006 = vadd.f32 0.0, %v2005
        %2007 = vdwg.mxu0
        %2008 = vmatpush.msra.mxu0 0.0
        %2009 = vmatpush.msra.mxu0 0.0
        %2010 = vmatpush.msra.mxu0 0.0
        %2011 = vmatpush.msra.mxu0 0.0
        %2012 = vmatpush.msra.mxu0 0.0
        %2013 = vmatpush.msra.mxu0 0.0
        %2014 = vmatpush.msra.mxu0 0.0
        %2015 = vmatpush.msra.mxu0 0.0
        %2016 = vmatpush.msra.mxu0 0.0
        %2017 = vmatpush.msra.mxu0 0.0
        %2018 = vmatpush.msra.mxu0 0.0
        %2019 = vmatpush.msra.mxu0 0.0
        %2020 = vmatpush.msra.mxu0 0.0
        %2021 = vmatpush.msra.mxu0 0.0
        %2022 = vmatpush.msra.mxu0 0.0
        %2023 = vmatpush.msra.mxu0 %v1871
        %2024 = vmatmul.f32.gmra.mxu0 %v1886
        %v2025 = vpop.f32.mrf.mxu0
        %v2026 = vadd.f32 0.0, %v2025
        %2027 = vdwg.mxu0
        %2028 = vmatpush.msra.mxu0 0.0
        %2029 = vmatpush.msra.mxu0 0.0
        %2030 = vmatpush.msra.mxu0 0.0
        %2031 = vmatpush.msra.mxu0 0.0
        %2032 = vmatpush.msra.mxu0 0.0
        %2033 = vmatpush.msra.mxu0 0.0
        %2034 = vmatpush.msra.mxu0 0.0
        %2035 = vmatpush.msra.mxu0 0.0
        %2036 = vmatpush.msra.mxu0 0.0
        %2037 = vmatpush.msra.mxu0 0.0
        %2038 = vmatpush.msra.mxu0 0.0
        %2039 = vmatpush.msra.mxu0 0.0
        %2040 = vmatpush.msra.mxu0 0.0
        %2041 = vmatpush.msra.mxu0 0.0
        %2042 = vmatpush.msra.mxu0 0.0
        %2043 = vmatpush.msra.mxu0 %v1872
        %2044 = vmatmul.f32.gmra.mxu0 %v1886
        %v2045 = vpop.f32.mrf.mxu0
        %v2046 = vadd.f32 0.0, %v2045
        %2047 = vdwg.mxu0
        %2048 = vmatpush.msra.mxu0 0.0
        %2049 = vmatpush.msra.mxu0 0.0
        %2050 = vmatpush.msra.mxu0 0.0
        %2051 = vmatpush.msra.mxu0 0.0
        %2052 = vmatpush.msra.mxu0 0.0
        %2053 = vmatpush.msra.mxu0 0.0
        %2054 = vmatpush.msra.mxu0 0.0
        %2055 = vmatpush.msra.mxu0 0.0
        %2056 = vmatpush.msra.mxu0 0.0
        %2057 = vmatpush.msra.mxu0 0.0
        %2058 = vmatpush.msra.mxu0 0.0
        %2059 = vmatpush.msra.mxu0 0.0
        %2060 = vmatpush.msra.mxu0 0.0
        %2061 = vmatpush.msra.mxu0 0.0
        %2062 = vmatpush.msra.mxu0 0.0
        %2063 = vmatpush.msra.mxu0 %v1873
        %2064 = vmatmul.f32.gmra.mxu0 %v1886
        %v2065 = vpop.f32.mrf.mxu0
        %v2066 = vadd.f32 0.0, %v2065
        %2067 = vdwg.mxu0
        %2068 = vmatpush.msra.mxu0 0.0
        %2069 = vmatpush.msra.mxu0 0.0
        %2070 = vmatpush.msra.mxu0 0.0
        %2071 = vmatpush.msra.mxu0 0.0
        %2072 = vmatpush.msra.mxu0 0.0
        %2073 = vmatpush.msra.mxu0 0.0
        %2074 = vmatpush.msra.mxu0 0.0
        %2075 = vmatpush.msra.mxu0 0.0
        %2076 = vmatpush.msra.mxu0 0.0
        %2077 = vmatpush.msra.mxu0 0.0
        %2078 = vmatpush.msra.mxu0 0.0
        %2079 = vmatpush.msra.mxu0 0.0
        %2080 = vmatpush.msra.mxu0 0.0
        %2081 = vmatpush.msra.mxu0 0.0
        %2082 = vmatpush.msra.mxu0 0.0
        %2083 = vmatpush.msra.mxu0 %v1874
        %2084 = vmatmul.f32.gmra.mxu0 %v1886
        %v2085 = vpop.f32.mrf.mxu0
        %v2086 = vadd.f32 0.0, %v2085
        %2087 = vdwg.mxu0
        %v2088 = vadd.f32 %v1830, %v1906
        %v2089 = vadd.f32 %v1831, %v1926
        %v2090 = vadd.f32 %v1832, %v1946
        %v2091 = vadd.f32 %v1833, %v1966
        %v2092 = vadd.f32 %v1834, %v1986
        %v2093 = vadd.f32 %v1835, %v2006
        %v2094 = vadd.f32 %v1836, %v2026
        %v2095 = vadd.f32 %v1837, %v2046
        %v2096 = vadd.f32 %v1838, %v2066
        %v2097 = vadd.f32 %v1839, %v2086
        %s2098 = scalar_lea.vmem %s2, 32
        %v2099 = vld [vmem:[%s2098] sm:$0xff]
        %v2101 = vsel %vm1132, %v2099, 0
        %2103 = vmatpush.msra.mxu0 0.0
        %2104 = vmatpush.msra.mxu0 0.0
        %2105 = vmatpush.msra.mxu0 0.0
        %2106 = vmatpush.msra.mxu0 0.0
        %2107 = vmatpush.msra.mxu0 0.0
        %2108 = vmatpush.msra.mxu0 0.0
        %2109 = vmatpush.msra.mxu0 0.0
        %2110 = vmatpush.msra.mxu0 0.0
        %2111 = vmatpush.msra.mxu0 0.0
        %2112 = vmatpush.msra.mxu0 0.0
        %2113 = vmatpush.msra.mxu0 0.0
        %2114 = vmatpush.msra.mxu0 0.0
        %2115 = vmatpush.msra.mxu0 0.0
        %2116 = vmatpush.msra.mxu0 0.0
        %2117 = vmatpush.msra.mxu0 0.0
        %2118 = vmatpush.msra.mxu0 %v1066
        %2119 = vmatmul.f32.gmra.mxu0 %v2101
        %v2120 = vpop.f32.mrf.mxu0
        %v2121 = vadd.f32 0.0, %v2120
        %2122 = vdwg.mxu0
        %2123 = vmatpush.msra.mxu0 0.0
        %2124 = vmatpush.msra.mxu0 0.0
        %2125 = vmatpush.msra.mxu0 0.0
        %2126 = vmatpush.msra.mxu0 0.0
        %2127 = vmatpush.msra.mxu0 0.0
        %2128 = vmatpush.msra.mxu0 0.0
        %2129 = vmatpush.msra.mxu0 0.0
        %2130 = vmatpush.msra.mxu0 0.0
        %2131 = vmatpush.msra.mxu0 0.0
        %2132 = vmatpush.msra.mxu0 0.0
        %2133 = vmatpush.msra.mxu0 0.0
        %2134 = vmatpush.msra.mxu0 0.0
        %2135 = vmatpush.msra.mxu0 0.0
        %2136 = vmatpush.msra.mxu0 0.0
        %2137 = vmatpush.msra.mxu0 0.0
        %2138 = vmatpush.msra.mxu0 %v1067
        %2139 = vmatmul.f32.gmra.mxu0 %v2101
        %v2140 = vpop.f32.mrf.mxu0
        %v2141 = vadd.f32 0.0, %v2140
        %2142 = vdwg.mxu0
        %2143 = vmatpush.msra.mxu0 0.0
        %2144 = vmatpush.msra.mxu0 0.0
        %2145 = vmatpush.msra.mxu0 0.0
        %2146 = vmatpush.msra.mxu0 0.0
        %2147 = vmatpush.msra.mxu0 0.0
        %2148 = vmatpush.msra.mxu0 0.0
        %2149 = vmatpush.msra.mxu0 0.0
        %2150 = vmatpush.msra.mxu0 0.0
        %2151 = vmatpush.msra.mxu0 0.0
        %2152 = vmatpush.msra.mxu0 0.0
        %2153 = vmatpush.msra.mxu0 0.0
        %2154 = vmatpush.msra.mxu0 0.0
        %2155 = vmatpush.msra.mxu0 0.0
        %2156 = vmatpush.msra.mxu0 0.0
        %2157 = vmatpush.msra.mxu0 0.0
        %2158 = vmatpush.msra.mxu0 %v1068
        %2159 = vmatmul.f32.gmra.mxu0 %v2101
        %v2160 = vpop.f32.mrf.mxu0
        %v2161 = vadd.f32 0.0, %v2160
        %2162 = vdwg.mxu0
        %2163 = vmatpush.msra.mxu0 0.0
        %2164 = vmatpush.msra.mxu0 0.0
        %2165 = vmatpush.msra.mxu0 0.0
        %2166 = vmatpush.msra.mxu0 0.0
        %2167 = vmatpush.msra.mxu0 0.0
        %2168 = vmatpush.msra.mxu0 0.0
        %2169 = vmatpush.msra.mxu0 0.0
        %2170 = vmatpush.msra.mxu0 0.0
        %2171 = vmatpush.msra.mxu0 0.0
        %2172 = vmatpush.msra.mxu0 0.0
        %2173 = vmatpush.msra.mxu0 0.0
        %2174 = vmatpush.msra.mxu0 0.0
        %2175 = vmatpush.msra.mxu0 0.0
        %2176 = vmatpush.msra.mxu0 0.0
        %2177 = vmatpush.msra.mxu0 0.0
        %2178 = vmatpush.msra.mxu0 %v1069
        %2179 = vmatmul.f32.gmra.mxu0 %v2101
        %v2180 = vpop.f32.mrf.mxu0
        %v2181 = vadd.f32 0.0, %v2180
        %2182 = vdwg.mxu0
        %2183 = vmatpush.msra.mxu0 0.0
        %2184 = vmatpush.msra.mxu0 0.0
        %2185 = vmatpush.msra.mxu0 0.0
        %2186 = vmatpush.msra.mxu0 0.0
        %2187 = vmatpush.msra.mxu0 0.0
        %2188 = vmatpush.msra.mxu0 0.0
        %2189 = vmatpush.msra.mxu0 0.0
        %2190 = vmatpush.msra.mxu0 0.0
        %2191 = vmatpush.msra.mxu0 0.0
        %2192 = vmatpush.msra.mxu0 0.0
        %2193 = vmatpush.msra.mxu0 0.0
        %2194 = vmatpush.msra.mxu0 0.0
        %2195 = vmatpush.msra.mxu0 0.0
        %2196 = vmatpush.msra.mxu0 0.0
        %2197 = vmatpush.msra.mxu0 0.0
        %2198 = vmatpush.msra.mxu0 %v1070
        %2199 = vmatmul.f32.gmra.mxu0 %v2101
        %v2200 = vpop.f32.mrf.mxu0
        %v2201 = vadd.f32 0.0, %v2200
        %2202 = vdwg.mxu0
        %2203 = vmatpush.msra.mxu0 0.0
        %2204 = vmatpush.msra.mxu0 0.0
        %2205 = vmatpush.msra.mxu0 0.0
        %2206 = vmatpush.msra.mxu0 0.0
        %2207 = vmatpush.msra.mxu0 0.0
        %2208 = vmatpush.msra.mxu0 0.0
        %2209 = vmatpush.msra.mxu0 0.0
        %2210 = vmatpush.msra.mxu0 0.0
        %2211 = vmatpush.msra.mxu0 0.0
        %2212 = vmatpush.msra.mxu0 0.0
        %2213 = vmatpush.msra.mxu0 0.0
        %2214 = vmatpush.msra.mxu0 0.0
        %2215 = vmatpush.msra.mxu0 0.0
        %2216 = vmatpush.msra.mxu0 0.0
        %2217 = vmatpush.msra.mxu0 0.0
        %2218 = vmatpush.msra.mxu0 %v1071
        %2219 = vmatmul.f32.gmra.mxu0 %v2101
        %v2220 = vpop.f32.mrf.mxu0
        %v2221 = vadd.f32 0.0, %v2220
        %2222 = vdwg.mxu0
        %2223 = vmatpush.msra.mxu0 0.0
        %2224 = vmatpush.msra.mxu0 0.0
        %2225 = vmatpush.msra.mxu0 0.0
        %2226 = vmatpush.msra.mxu0 0.0
        %2227 = vmatpush.msra.mxu0 0.0
        %2228 = vmatpush.msra.mxu0 0.0
        %2229 = vmatpush.msra.mxu0 0.0
        %2230 = vmatpush.msra.mxu0 0.0
        %2231 = vmatpush.msra.mxu0 0.0
        %2232 = vmatpush.msra.mxu0 0.0
        %2233 = vmatpush.msra.mxu0 0.0
        %2234 = vmatpush.msra.mxu0 0.0
        %2235 = vmatpush.msra.mxu0 0.0
        %2236 = vmatpush.msra.mxu0 0.0
        %2237 = vmatpush.msra.mxu0 0.0
        %2238 = vmatpush.msra.mxu0 %v1072
        %2239 = vmatmul.f32.gmra.mxu0 %v2101
        %v2240 = vpop.f32.mrf.mxu0
        %v2241 = vadd.f32 0.0, %v2240
        %2242 = vdwg.mxu0
        %2243 = vmatpush.msra.mxu0 0.0
        %2244 = vmatpush.msra.mxu0 0.0
        %2245 = vmatpush.msra.mxu0 0.0
        %2246 = vmatpush.msra.mxu0 0.0
        %2247 = vmatpush.msra.mxu0 0.0
        %2248 = vmatpush.msra.mxu0 0.0
        %2249 = vmatpush.msra.mxu0 0.0
        %2250 = vmatpush.msra.mxu0 0.0
        %2251 = vmatpush.msra.mxu0 0.0
        %2252 = vmatpush.msra.mxu0 0.0
        %2253 = vmatpush.msra.mxu0 0.0
        %2254 = vmatpush.msra.mxu0 0.0
        %2255 = vmatpush.msra.mxu0 0.0
        %2256 = vmatpush.msra.mxu0 0.0
        %2257 = vmatpush.msra.mxu0 0.0
        %2258 = vmatpush.msra.mxu0 %v1073
        %2259 = vmatmul.f32.gmra.mxu0 %v2101
        %v2260 = vpop.f32.mrf.mxu0
        %v2261 = vadd.f32 0.0, %v2260
        %2262 = vdwg.mxu0
        %2263 = vmatpush.msra.mxu0 0.0
        %2264 = vmatpush.msra.mxu0 0.0
        %2265 = vmatpush.msra.mxu0 0.0
        %2266 = vmatpush.msra.mxu0 0.0
        %2267 = vmatpush.msra.mxu0 0.0
        %2268 = vmatpush.msra.mxu0 0.0
        %2269 = vmatpush.msra.mxu0 0.0
        %2270 = vmatpush.msra.mxu0 0.0
        %2271 = vmatpush.msra.mxu0 0.0
        %2272 = vmatpush.msra.mxu0 0.0
        %2273 = vmatpush.msra.mxu0 0.0
        %2274 = vmatpush.msra.mxu0 0.0
        %2275 = vmatpush.msra.mxu0 0.0
        %2276 = vmatpush.msra.mxu0 0.0
        %2277 = vmatpush.msra.mxu0 0.0
        %2278 = vmatpush.msra.mxu0 %v1074
        %2279 = vmatmul.f32.gmra.mxu0 %v2101
        %v2280 = vpop.f32.mrf.mxu0
        %v2281 = vadd.f32 0.0, %v2280
        %2282 = vdwg.mxu0
        %2283 = vmatpush.msra.mxu0 0.0
        %2284 = vmatpush.msra.mxu0 0.0
        %2285 = vmatpush.msra.mxu0 0.0
        %2286 = vmatpush.msra.mxu0 0.0
        %2287 = vmatpush.msra.mxu0 0.0
        %2288 = vmatpush.msra.mxu0 0.0
        %2289 = vmatpush.msra.mxu0 0.0
        %2290 = vmatpush.msra.mxu0 0.0
        %2291 = vmatpush.msra.mxu0 0.0
        %2292 = vmatpush.msra.mxu0 0.0
        %2293 = vmatpush.msra.mxu0 0.0
        %2294 = vmatpush.msra.mxu0 0.0
        %2295 = vmatpush.msra.mxu0 0.0
        %2296 = vmatpush.msra.mxu0 0.0
        %2297 = vmatpush.msra.mxu0 0.0
        %2298 = vmatpush.msra.mxu0 %v1075
        %2299 = vmatmul.f32.gmra.mxu0 %v2101
        %v2300 = vpop.f32.mrf.mxu0
        %v2301 = vadd.f32 0.0, %v2300
        %2302 = vdwg.mxu0
        %v2303 = vadd.f32 %v2088, %v2121
        %v2304 = vadd.f32 %v2089, %v2141
        %v2305 = vadd.f32 %v2090, %v2161
        %v2306 = vadd.f32 %v2091, %v2181
        %v2307 = vadd.f32 %v2092, %v2201
        %v2308 = vadd.f32 %v2093, %v2221
        %v2309 = vadd.f32 %v2094, %v2241
        %v2310 = vadd.f32 %v2095, %v2261
        %v2311 = vadd.f32 %v2096, %v2281
        %v2312 = vadd.f32 %v2097, %v2301
        %s2313 = scalar_lea.vmem %s2, 40
        %v2314 = vld [vmem:[%s2313] sm:$0xff]
        %v2315 = vld [vmem:[#allocation2 + $0x8] sm:$0xff]
        %v2316 = vld [vmem:[#allocation2 + $0x10] sm:$0xff]
        %v2317 = vld [vmem:[#allocation2 + $0x18] sm:$0xff]
        %v2318 = vld [vmem:[#allocation2 + $0x20] sm:$0xff]
        %v2319 = vld [vmem:[#allocation2 + $0x28] sm:$0xff]
        %v2320 = vld [vmem:[#allocation2 + $0x30] sm:$0xff]
        %v2321 = vld [vmem:[#allocation2 + $0x38] sm:$0xff]
        %v2322 = vld [vmem:[#allocation2 + $0x40] sm:$0xff]
        %v2323 = vld [vmem:[#allocation2 + $0x48] sm:$0xff]
        %v2324 = vld [vmem:[#allocation2 + $0x50] sm:$0xff]
        %v2325 = vld [vmem:[#allocation2 + $0x58] sm:$0xff]
        %2337 = vrot.lane.b32.xlu0 %v2315, 127
        %v2338 = vpop.permute.xlu0 %2337
        %2339 = vrot.lane.b32.xlu0 %v2316, 127
        %v2340 = vpop.permute.xlu0 %2339
        %2341 = vrot.lane.b32.xlu0 %v2317, 127
        %v2342 = vpop.permute.xlu0 %2341
        %2343 = vrot.lane.b32.xlu0 %v2318, 127
        %v2344 = vpop.permute.xlu0 %2343
        %2345 = vrot.lane.b32.xlu0 %v2319, 127
        %v2346 = vpop.permute.xlu0 %2345
        %2347 = vrot.lane.b32.xlu0 %v2320, 127
        %v2348 = vpop.permute.xlu0 %2347
        %2349 = vrot.lane.b32.xlu0 %v2321, 127
        %v2350 = vpop.permute.xlu0 %2349
        %2351 = vrot.lane.b32.xlu0 %v2322, 127
        %v2352 = vpop.permute.xlu0 %2351
        %2353 = vrot.lane.b32.xlu0 %v2323, 127
        %v2354 = vpop.permute.xlu0 %2353
        %2355 = vrot.lane.b32.xlu0 %v2324, 127
        %v2356 = vpop.permute.xlu0 %2355
        %2357 = vrot.lane.b32.xlu0 %v2325, 127
        %v2358 = vpop.permute.xlu0 %2357
        %vm2359 = vcmask 1039360
        %v2360 = vsel %vm2359, %v2338, %v2340
        %v2361 = vsel %vm2359, %v2340, %v2342
        %v2362 = vsel %vm2359, %v2342, %v2344
        %v2363 = vsel %vm2359, %v2344, %v2346
        %v2364 = vsel %vm2359, %v2346, %v2348
        %v2365 = vsel %vm2359, %v2348, %v2350
        %v2366 = vsel %vm2359, %v2350, %v2352
        %v2367 = vsel %vm2359, %v2352, %v2354
        %v2368 = vsel %vm2359, %v2354, %v2356
        %v2369 = vsel %vm2359, %v2356, %v2358
        %v2381 = vsel %vm1132, %v2314, 0
        %2383 = vmatpush.msra.mxu0 0.0
        %2384 = vmatpush.msra.mxu0 0.0
        %2385 = vmatpush.msra.mxu0 0.0
        %2386 = vmatpush.msra.mxu0 0.0
        %2387 = vmatpush.msra.mxu0 0.0
        %2388 = vmatpush.msra.mxu0 0.0
        %2389 = vmatpush.msra.mxu0 0.0
        %2390 = vmatpush.msra.mxu0 0.0
        %2391 = vmatpush.msra.mxu0 0.0
        %2392 = vmatpush.msra.mxu0 0.0
        %2393 = vmatpush.msra.mxu0 0.0
        %2394 = vmatpush.msra.mxu0 0.0
        %2395 = vmatpush.msra.mxu0 0.0
        %2396 = vmatpush.msra.mxu0 0.0
        %2397 = vmatpush.msra.mxu0 0.0
        %2398 = vmatpush.msra.mxu0 %v2360
        %2399 = vmatmul.f32.gmra.mxu0 %v2381
        %v2400 = vpop.f32.mrf.mxu0
        %v2401 = vadd.f32 0.0, %v2400
        %2402 = vdwg.mxu0
        %2403 = vmatpush.msra.mxu0 0.0
        %2404 = vmatpush.msra.mxu0 0.0
        %2405 = vmatpush.msra.mxu0 0.0
        %2406 = vmatpush.msra.mxu0 0.0
        %2407 = vmatpush.msra.mxu0 0.0
        %2408 = vmatpush.msra.mxu0 0.0
        %2409 = vmatpush.msra.mxu0 0.0
        %2410 = vmatpush.msra.mxu0 0.0
        %2411 = vmatpush.msra.mxu0 0.0
        %2412 = vmatpush.msra.mxu0 0.0
        %2413 = vmatpush.msra.mxu0 0.0
        %2414 = vmatpush.msra.mxu0 0.0
        %2415 = vmatpush.msra.mxu0 0.0
        %2416 = vmatpush.msra.mxu0 0.0
        %2417 = vmatpush.msra.mxu0 0.0
        %2418 = vmatpush.msra.mxu0 %v2361
        %2419 = vmatmul.f32.gmra.mxu0 %v2381
        %v2420 = vpop.f32.mrf.mxu0
        %v2421 = vadd.f32 0.0, %v2420
        %2422 = vdwg.mxu0
        %2423 = vmatpush.msra.mxu0 0.0
        %2424 = vmatpush.msra.mxu0 0.0
        %2425 = vmatpush.msra.mxu0 0.0
        %2426 = vmatpush.msra.mxu0 0.0
        %2427 = vmatpush.msra.mxu0 0.0
        %2428 = vmatpush.msra.mxu0 0.0
        %2429 = vmatpush.msra.mxu0 0.0
        %2430 = vmatpush.msra.mxu0 0.0
        %2431 = vmatpush.msra.mxu0 0.0
        %2432 = vmatpush.msra.mxu0 0.0
        %2433 = vmatpush.msra.mxu0 0.0
        %2434 = vmatpush.msra.mxu0 0.0
        %2435 = vmatpush.msra.mxu0 0.0
        %2436 = vmatpush.msra.mxu0 0.0
        %2437 = vmatpush.msra.mxu0 0.0
        %2438 = vmatpush.msra.mxu0 %v2362
        %2439 = vmatmul.f32.gmra.mxu0 %v2381
        %v2440 = vpop.f32.mrf.mxu0
        %v2441 = vadd.f32 0.0, %v2440
        %2442 = vdwg.mxu0
        %2443 = vmatpush.msra.mxu0 0.0
        %2444 = vmatpush.msra.mxu0 0.0
        %2445 = vmatpush.msra.mxu0 0.0
        %2446 = vmatpush.msra.mxu0 0.0
        %2447 = vmatpush.msra.mxu0 0.0
        %2448 = vmatpush.msra.mxu0 0.0
        %2449 = vmatpush.msra.mxu0 0.0
        %2450 = vmatpush.msra.mxu0 0.0
        %2451 = vmatpush.msra.mxu0 0.0
        %2452 = vmatpush.msra.mxu0 0.0
        %2453 = vmatpush.msra.mxu0 0.0
        %2454 = vmatpush.msra.mxu0 0.0
        %2455 = vmatpush.msra.mxu0 0.0
        %2456 = vmatpush.msra.mxu0 0.0
        %2457 = vmatpush.msra.mxu0 0.0
        %2458 = vmatpush.msra.mxu0 %v2363
        %2459 = vmatmul.f32.gmra.mxu0 %v2381
        %v2460 = vpop.f32.mrf.mxu0
        %v2461 = vadd.f32 0.0, %v2460
        %2462 = vdwg.mxu0
        %2463 = vmatpush.msra.mxu0 0.0
        %2464 = vmatpush.msra.mxu0 0.0
        %2465 = vmatpush.msra.mxu0 0.0
        %2466 = vmatpush.msra.mxu0 0.0
        %2467 = vmatpush.msra.mxu0 0.0
        %2468 = vmatpush.msra.mxu0 0.0
        %2469 = vmatpush.msra.mxu0 0.0
        %2470 = vmatpush.msra.mxu0 0.0
        %2471 = vmatpush.msra.mxu0 0.0
        %2472 = vmatpush.msra.mxu0 0.0
        %2473 = vmatpush.msra.mxu0 0.0
        %2474 = vmatpush.msra.mxu0 0.0
        %2475 = vmatpush.msra.mxu0 0.0
        %2476 = vmatpush.msra.mxu0 0.0
        %2477 = vmatpush.msra.mxu0 0.0
        %2478 = vmatpush.msra.mxu0 %v2364
        %2479 = vmatmul.f32.gmra.mxu0 %v2381
        %v2480 = vpop.f32.mrf.mxu0
        %v2481 = vadd.f32 0.0, %v2480
        %2482 = vdwg.mxu0
        %2483 = vmatpush.msra.mxu0 0.0
        %2484 = vmatpush.msra.mxu0 0.0
        %2485 = vmatpush.msra.mxu0 0.0
        %2486 = vmatpush.msra.mxu0 0.0
        %2487 = vmatpush.msra.mxu0 0.0
        %2488 = vmatpush.msra.mxu0 0.0
        %2489 = vmatpush.msra.mxu0 0.0
        %2490 = vmatpush.msra.mxu0 0.0
        %2491 = vmatpush.msra.mxu0 0.0
        %2492 = vmatpush.msra.mxu0 0.0
        %2493 = vmatpush.msra.mxu0 0.0
        %2494 = vmatpush.msra.mxu0 0.0
        %2495 = vmatpush.msra.mxu0 0.0
        %2496 = vmatpush.msra.mxu0 0.0
        %2497 = vmatpush.msra.mxu0 0.0
        %2498 = vmatpush.msra.mxu0 %v2365
        %2499 = vmatmul.f32.gmra.mxu0 %v2381
        %v2500 = vpop.f32.mrf.mxu0
        %v2501 = vadd.f32 0.0, %v2500
        %2502 = vdwg.mxu0
        %2503 = vmatpush.msra.mxu0 0.0
        %2504 = vmatpush.msra.mxu0 0.0
        %2505 = vmatpush.msra.mxu0 0.0
        %2506 = vmatpush.msra.mxu0 0.0
        %2507 = vmatpush.msra.mxu0 0.0
        %2508 = vmatpush.msra.mxu0 0.0
        %2509 = vmatpush.msra.mxu0 0.0
        %2510 = vmatpush.msra.mxu0 0.0
        %2511 = vmatpush.msra.mxu0 0.0
        %2512 = vmatpush.msra.mxu0 0.0
        %2513 = vmatpush.msra.mxu0 0.0
        %2514 = vmatpush.msra.mxu0 0.0
        %2515 = vmatpush.msra.mxu0 0.0
        %2516 = vmatpush.msra.mxu0 0.0
        %2517 = vmatpush.msra.mxu0 0.0
        %2518 = vmatpush.msra.mxu0 %v2366
        %2519 = vmatmul.f32.gmra.mxu0 %v2381
        %v2520 = vpop.f32.mrf.mxu0
        %v2521 = vadd.f32 0.0, %v2520
        %2522 = vdwg.mxu0
        %2523 = vmatpush.msra.mxu0 0.0
        %2524 = vmatpush.msra.mxu0 0.0
        %2525 = vmatpush.msra.mxu0 0.0
        %2526 = vmatpush.msra.mxu0 0.0
        %2527 = vmatpush.msra.mxu0 0.0
        %2528 = vmatpush.msra.mxu0 0.0
        %2529 = vmatpush.msra.mxu0 0.0
        %2530 = vmatpush.msra.mxu0 0.0
        %2531 = vmatpush.msra.mxu0 0.0
        %2532 = vmatpush.msra.mxu0 0.0
        %2533 = vmatpush.msra.mxu0 0.0
        %2534 = vmatpush.msra.mxu0 0.0
        %2535 = vmatpush.msra.mxu0 0.0
        %2536 = vmatpush.msra.mxu0 0.0
        %2537 = vmatpush.msra.mxu0 0.0
        %2538 = vmatpush.msra.mxu0 %v2367
        %2539 = vmatmul.f32.gmra.mxu0 %v2381
        %v2540 = vpop.f32.mrf.mxu0
        %v2541 = vadd.f32 0.0, %v2540
        %2542 = vdwg.mxu0
        %2543 = vmatpush.msra.mxu0 0.0
        %2544 = vmatpush.msra.mxu0 0.0
        %2545 = vmatpush.msra.mxu0 0.0
        %2546 = vmatpush.msra.mxu0 0.0
        %2547 = vmatpush.msra.mxu0 0.0
        %2548 = vmatpush.msra.mxu0 0.0
        %2549 = vmatpush.msra.mxu0 0.0
        %2550 = vmatpush.msra.mxu0 0.0
        %2551 = vmatpush.msra.mxu0 0.0
        %2552 = vmatpush.msra.mxu0 0.0
        %2553 = vmatpush.msra.mxu0 0.0
        %2554 = vmatpush.msra.mxu0 0.0
        %2555 = vmatpush.msra.mxu0 0.0
        %2556 = vmatpush.msra.mxu0 0.0
        %2557 = vmatpush.msra.mxu0 0.0
        %2558 = vmatpush.msra.mxu0 %v2368
        %2559 = vmatmul.f32.gmra.mxu0 %v2381
        %v2560 = vpop.f32.mrf.mxu0
        %v2561 = vadd.f32 0.0, %v2560
        %2562 = vdwg.mxu0
        %2563 = vmatpush.msra.mxu0 0.0
        %2564 = vmatpush.msra.mxu0 0.0
        %2565 = vmatpush.msra.mxu0 0.0
        %2566 = vmatpush.msra.mxu0 0.0
        %2567 = vmatpush.msra.mxu0 0.0
        %2568 = vmatpush.msra.mxu0 0.0
        %2569 = vmatpush.msra.mxu0 0.0
        %2570 = vmatpush.msra.mxu0 0.0
        %2571 = vmatpush.msra.mxu0 0.0
        %2572 = vmatpush.msra.mxu0 0.0
        %2573 = vmatpush.msra.mxu0 0.0
        %2574 = vmatpush.msra.mxu0 0.0
        %2575 = vmatpush.msra.mxu0 0.0
        %2576 = vmatpush.msra.mxu0 0.0
        %2577 = vmatpush.msra.mxu0 0.0
        %2578 = vmatpush.msra.mxu0 %v2369
        %2579 = vmatmul.f32.gmra.mxu0 %v2381
        %v2580 = vpop.f32.mrf.mxu0
        %v2581 = vadd.f32 0.0, %v2580
        %2582 = vdwg.mxu0
        %v2583 = vadd.f32 %v2303, %v2401
        %v2584 = vadd.f32 %v2304, %v2421
        %v2585 = vadd.f32 %v2305, %v2441
        %v2586 = vadd.f32 %v2306, %v2461
        %v2587 = vadd.f32 %v2307, %v2481
        %v2588 = vadd.f32 %v2308, %v2501
        %v2589 = vadd.f32 %v2309, %v2521
        %v2590 = vadd.f32 %v2310, %v2541
        %v2591 = vadd.f32 %v2311, %v2561
        %v2592 = vadd.f32 %v2312, %v2581
        %s2593 = scalar_lea.vmem %s2, 48
        %v2594 = vld [vmem:[%s2593] sm:$0xff]
        %2595 = vrot.lane.b32.xlu0 %v2315, 95
        %v2596 = vpop.permute.xlu0 %2595
        %2597 = vrot.lane.b32.xlu0 %v2316, 95
        %v2598 = vpop.permute.xlu0 %2597
        %2599 = vrot.lane.b32.xlu0 %v2317, 95
        %v2600 = vpop.permute.xlu0 %2599
        %2601 = vrot.lane.b32.xlu0 %v2318, 95
        %v2602 = vpop.permute.xlu0 %2601
        %2603 = vrot.lane.b32.xlu0 %v2319, 95
        %v2604 = vpop.permute.xlu0 %2603
        %2605 = vrot.lane.b32.xlu0 %v2320, 95
        %v2606 = vpop.permute.xlu0 %2605
        %2607 = vrot.lane.b32.xlu0 %v2321, 95
        %v2608 = vpop.permute.xlu0 %2607
        %2609 = vrot.lane.b32.xlu0 %v2322, 95
        %v2610 = vpop.permute.xlu0 %2609
        %2611 = vrot.lane.b32.xlu0 %v2323, 95
        %v2612 = vpop.permute.xlu0 %2611
        %2613 = vrot.lane.b32.xlu0 %v2324, 95
        %v2614 = vpop.permute.xlu0 %2613
        %2615 = vrot.lane.b32.xlu0 %v2325, 95
        %v2616 = vpop.permute.xlu0 %2615
        %vm2617 = vcmask 777216
        %v2618 = vsel %vm2617, %v2596, %v2598
        %v2619 = vsel %vm2617, %v2598, %v2600
        %v2620 = vsel %vm2617, %v2600, %v2602
        %v2621 = vsel %vm2617, %v2602, %v2604
        %v2622 = vsel %vm2617, %v2604, %v2606
        %v2623 = vsel %vm2617, %v2606, %v2608
        %v2624 = vsel %vm2617, %v2608, %v2610
        %v2625 = vsel %vm2617, %v2610, %v2612
        %v2626 = vsel %vm2617, %v2612, %v2614
        %v2627 = vsel %vm2617, %v2614, %v2616
        %v2639 = vsel %vm1132, %v2594, 0
        %2641 = vmatpush.msra.mxu0 0.0
        %2642 = vmatpush.msra.mxu0 0.0
        %2643 = vmatpush.msra.mxu0 0.0
        %2644 = vmatpush.msra.mxu0 0.0
        %2645 = vmatpush.msra.mxu0 0.0
        %2646 = vmatpush.msra.mxu0 0.0
        %2647 = vmatpush.msra.mxu0 0.0
        %2648 = vmatpush.msra.mxu0 0.0
        %2649 = vmatpush.msra.mxu0 0.0
        %2650 = vmatpush.msra.mxu0 0.0
        %2651 = vmatpush.msra.mxu0 0.0
        %2652 = vmatpush.msra.mxu0 0.0
        %2653 = vmatpush.msra.mxu0 0.0
        %2654 = vmatpush.msra.mxu0 0.0
        %2655 = vmatpush.msra.mxu0 0.0
        %2656 = vmatpush.msra.mxu0 %v2618
        %2657 = vmatmul.f32.gmra.mxu0 %v2639
        %v2658 = vpop.f32.mrf.mxu0
        %v2659 = vadd.f32 0.0, %v2658
        %2660 = vdwg.mxu0
        %2661 = vmatpush.msra.mxu0 0.0
        %2662 = vmatpush.msra.mxu0 0.0
        %2663 = vmatpush.msra.mxu0 0.0
        %2664 = vmatpush.msra.mxu0 0.0
        %2665 = vmatpush.msra.mxu0 0.0
        %2666 = vmatpush.msra.mxu0 0.0
        %2667 = vmatpush.msra.mxu0 0.0
        %2668 = vmatpush.msra.mxu0 0.0
        %2669 = vmatpush.msra.mxu0 0.0
        %2670 = vmatpush.msra.mxu0 0.0
        %2671 = vmatpush.msra.mxu0 0.0
        %2672 = vmatpush.msra.mxu0 0.0
        %2673 = vmatpush.msra.mxu0 0.0
        %2674 = vmatpush.msra.mxu0 0.0
        %2675 = vmatpush.msra.mxu0 0.0
        %2676 = vmatpush.msra.mxu0 %v2619
        %2677 = vmatmul.f32.gmra.mxu0 %v2639
        %v2678 = vpop.f32.mrf.mxu0
        %v2679 = vadd.f32 0.0, %v2678
        %2680 = vdwg.mxu0
        %2681 = vmatpush.msra.mxu0 0.0
        %2682 = vmatpush.msra.mxu0 0.0
        %2683 = vmatpush.msra.mxu0 0.0
        %2684 = vmatpush.msra.mxu0 0.0
        %2685 = vmatpush.msra.mxu0 0.0
        %2686 = vmatpush.msra.mxu0 0.0
        %2687 = vmatpush.msra.mxu0 0.0
        %2688 = vmatpush.msra.mxu0 0.0
        %2689 = vmatpush.msra.mxu0 0.0
        %2690 = vmatpush.msra.mxu0 0.0
        %2691 = vmatpush.msra.mxu0 0.0
        %2692 = vmatpush.msra.mxu0 0.0
        %2693 = vmatpush.msra.mxu0 0.0
        %2694 = vmatpush.msra.mxu0 0.0
        %2695 = vmatpush.msra.mxu0 0.0
        %2696 = vmatpush.msra.mxu0 %v2620
        %2697 = vmatmul.f32.gmra.mxu0 %v2639
        %v2698 = vpop.f32.mrf.mxu0
        %v2699 = vadd.f32 0.0, %v2698
        %2700 = vdwg.mxu0
        %2701 = vmatpush.msra.mxu0 0.0
        %2702 = vmatpush.msra.mxu0 0.0
        %2703 = vmatpush.msra.mxu0 0.0
        %2704 = vmatpush.msra.mxu0 0.0
        %2705 = vmatpush.msra.mxu0 0.0
        %2706 = vmatpush.msra.mxu0 0.0
        %2707 = vmatpush.msra.mxu0 0.0
        %2708 = vmatpush.msra.mxu0 0.0
        %2709 = vmatpush.msra.mxu0 0.0
        %2710 = vmatpush.msra.mxu0 0.0
        %2711 = vmatpush.msra.mxu0 0.0
        %2712 = vmatpush.msra.mxu0 0.0
        %2713 = vmatpush.msra.mxu0 0.0
        %2714 = vmatpush.msra.mxu0 0.0
        %2715 = vmatpush.msra.mxu0 0.0
        %2716 = vmatpush.msra.mxu0 %v2621
        %2717 = vmatmul.f32.gmra.mxu0 %v2639
        %v2718 = vpop.f32.mrf.mxu0
        %v2719 = vadd.f32 0.0, %v2718
        %2720 = vdwg.mxu0
        %2721 = vmatpush.msra.mxu0 0.0
        %2722 = vmatpush.msra.mxu0 0.0
        %2723 = vmatpush.msra.mxu0 0.0
        %2724 = vmatpush.msra.mxu0 0.0
        %2725 = vmatpush.msra.mxu0 0.0
        %2726 = vmatpush.msra.mxu0 0.0
        %2727 = vmatpush.msra.mxu0 0.0
        %2728 = vmatpush.msra.mxu0 0.0
        %2729 = vmatpush.msra.mxu0 0.0
        %2730 = vmatpush.msra.mxu0 0.0
        %2731 = vmatpush.msra.mxu0 0.0
        %2732 = vmatpush.msra.mxu0 0.0
        %2733 = vmatpush.msra.mxu0 0.0
        %2734 = vmatpush.msra.mxu0 0.0
        %2735 = vmatpush.msra.mxu0 0.0
        %2736 = vmatpush.msra.mxu0 %v2622
        %2737 = vmatmul.f32.gmra.mxu0 %v2639
        %v2738 = vpop.f32.mrf.mxu0
        %v2739 = vadd.f32 0.0, %v2738
        %2740 = vdwg.mxu0
        %2741 = vmatpush.msra.mxu0 0.0
        %2742 = vmatpush.msra.mxu0 0.0
        %2743 = vmatpush.msra.mxu0 0.0
        %2744 = vmatpush.msra.mxu0 0.0
        %2745 = vmatpush.msra.mxu0 0.0
        %2746 = vmatpush.msra.mxu0 0.0
        %2747 = vmatpush.msra.mxu0 0.0
        %2748 = vmatpush.msra.mxu0 0.0
        %2749 = vmatpush.msra.mxu0 0.0
        %2750 = vmatpush.msra.mxu0 0.0
        %2751 = vmatpush.msra.mxu0 0.0
        %2752 = vmatpush.msra.mxu0 0.0
        %2753 = vmatpush.msra.mxu0 0.0
        %2754 = vmatpush.msra.mxu0 0.0
        %2755 = vmatpush.msra.mxu0 0.0
        %2756 = vmatpush.msra.mxu0 %v2623
        %2757 = vmatmul.f32.gmra.mxu0 %v2639
        %v2758 = vpop.f32.mrf.mxu0
        %v2759 = vadd.f32 0.0, %v2758
        %2760 = vdwg.mxu0
        %2761 = vmatpush.msra.mxu0 0.0
        %2762 = vmatpush.msra.mxu0 0.0
        %2763 = vmatpush.msra.mxu0 0.0
        %2764 = vmatpush.msra.mxu0 0.0
        %2765 = vmatpush.msra.mxu0 0.0
        %2766 = vmatpush.msra.mxu0 0.0
        %2767 = vmatpush.msra.mxu0 0.0
        %2768 = vmatpush.msra.mxu0 0.0
        %2769 = vmatpush.msra.mxu0 0.0
        %2770 = vmatpush.msra.mxu0 0.0
        %2771 = vmatpush.msra.mxu0 0.0
        %2772 = vmatpush.msra.mxu0 0.0
        %2773 = vmatpush.msra.mxu0 0.0
        %2774 = vmatpush.msra.mxu0 0.0
        %2775 = vmatpush.msra.mxu0 0.0
        %2776 = vmatpush.msra.mxu0 %v2624
        %2777 = vmatmul.f32.gmra.mxu0 %v2639
        %v2778 = vpop.f32.mrf.mxu0
        %v2779 = vadd.f32 0.0, %v2778
        %2780 = vdwg.mxu0
        %2781 = vmatpush.msra.mxu0 0.0
        %2782 = vmatpush.msra.mxu0 0.0
        %2783 = vmatpush.msra.mxu0 0.0
        %2784 = vmatpush.msra.mxu0 0.0
        %2785 = vmatpush.msra.mxu0 0.0
        %2786 = vmatpush.msra.mxu0 0.0
        %2787 = vmatpush.msra.mxu0 0.0
        %2788 = vmatpush.msra.mxu0 0.0
        %2789 = vmatpush.msra.mxu0 0.0
        %2790 = vmatpush.msra.mxu0 0.0
        %2791 = vmatpush.msra.mxu0 0.0
        %2792 = vmatpush.msra.mxu0 0.0
        %2793 = vmatpush.msra.mxu0 0.0
        %2794 = vmatpush.msra.mxu0 0.0
        %2795 = vmatpush.msra.mxu0 0.0
        %2796 = vmatpush.msra.mxu0 %v2625
        %2797 = vmatmul.f32.gmra.mxu0 %v2639
        %v2798 = vpop.f32.mrf.mxu0
        %v2799 = vadd.f32 0.0, %v2798
        %2800 = vdwg.mxu0
        %2801 = vmatpush.msra.mxu0 0.0
        %2802 = vmatpush.msra.mxu0 0.0
        %2803 = vmatpush.msra.mxu0 0.0
        %2804 = vmatpush.msra.mxu0 0.0
        %2805 = vmatpush.msra.mxu0 0.0
        %2806 = vmatpush.msra.mxu0 0.0
        %2807 = vmatpush.msra.mxu0 0.0
        %2808 = vmatpush.msra.mxu0 0.0
        %2809 = vmatpush.msra.mxu0 0.0
        %2810 = vmatpush.msra.mxu0 0.0
        %2811 = vmatpush.msra.mxu0 0.0
        %2812 = vmatpush.msra.mxu0 0.0
        %2813 = vmatpush.msra.mxu0 0.0
        %2814 = vmatpush.msra.mxu0 0.0
        %2815 = vmatpush.msra.mxu0 0.0
        %2816 = vmatpush.msra.mxu0 %v2626
        %2817 = vmatmul.f32.gmra.mxu0 %v2639
        %v2818 = vpop.f32.mrf.mxu0
        %v2819 = vadd.f32 0.0, %v2818
        %2820 = vdwg.mxu0
        %2821 = vmatpush.msra.mxu0 0.0
        %2822 = vmatpush.msra.mxu0 0.0
        %2823 = vmatpush.msra.mxu0 0.0
        %2824 = vmatpush.msra.mxu0 0.0
        %2825 = vmatpush.msra.mxu0 0.0
        %2826 = vmatpush.msra.mxu0 0.0
        %2827 = vmatpush.msra.mxu0 0.0
        %2828 = vmatpush.msra.mxu0 0.0
        %2829 = vmatpush.msra.mxu0 0.0
        %2830 = vmatpush.msra.mxu0 0.0
        %2831 = vmatpush.msra.mxu0 0.0
        %2832 = vmatpush.msra.mxu0 0.0
        %2833 = vmatpush.msra.mxu0 0.0
        %2834 = vmatpush.msra.mxu0 0.0
        %2835 = vmatpush.msra.mxu0 0.0
        %2836 = vmatpush.msra.mxu0 %v2627
        %2837 = vmatmul.f32.gmra.mxu0 %v2639
        %v2838 = vpop.f32.mrf.mxu0
        %v2839 = vadd.f32 0.0, %v2838
        %2840 = vdwg.mxu0
        %v2841 = vadd.f32 %v2583, %v2659
        %v2842 = vadd.f32 %v2584, %v2679
        %v2843 = vadd.f32 %v2585, %v2699
        %v2844 = vadd.f32 %v2586, %v2719
        %v2845 = vadd.f32 %v2587, %v2739
        %v2846 = vadd.f32 %v2588, %v2759
        %v2847 = vadd.f32 %v2589, %v2779
        %v2848 = vadd.f32 %v2590, %v2799
        %v2849 = vadd.f32 %v2591, %v2819
        %v2850 = vadd.f32 %v2592, %v2839
        %s2851 = scalar_lea.vmem %s2, 56
        %v2852 = vld [vmem:[%s2851] sm:$0xff]
        %2853 = vrot.lane.b32.xlu0 %v2315, 94
        %v2854 = vpop.permute.xlu0 %2853
        %2855 = vrot.lane.b32.xlu0 %v2316, 94
        %v2856 = vpop.permute.xlu0 %2855
        %2857 = vrot.lane.b32.xlu0 %v2317, 94
        %v2858 = vpop.permute.xlu0 %2857
        %2859 = vrot.lane.b32.xlu0 %v2318, 94
        %v2860 = vpop.permute.xlu0 %2859
        %2861 = vrot.lane.b32.xlu0 %v2319, 94
        %v2862 = vpop.permute.xlu0 %2861
        %2863 = vrot.lane.b32.xlu0 %v2320, 94
        %v2864 = vpop.permute.xlu0 %2863
        %2865 = vrot.lane.b32.xlu0 %v2321, 94
        %v2866 = vpop.permute.xlu0 %2865
        %2867 = vrot.lane.b32.xlu0 %v2322, 94
        %v2868 = vpop.permute.xlu0 %2867
        %2869 = vrot.lane.b32.xlu0 %v2323, 94
        %v2870 = vpop.permute.xlu0 %2869
        %2871 = vrot.lane.b32.xlu0 %v2324, 94
        %v2872 = vpop.permute.xlu0 %2871
        %2873 = vrot.lane.b32.xlu0 %v2325, 94
        %v2874 = vpop.permute.xlu0 %2873
        %vm2875 = vcmask 769024
        %v2876 = vsel %vm2875, %v2854, %v2856
        %v2877 = vsel %vm2875, %v2856, %v2858
        %v2878 = vsel %vm2875, %v2858, %v2860
        %v2879 = vsel %vm2875, %v2860, %v2862
        %v2880 = vsel %vm2875, %v2862, %v2864
        %v2881 = vsel %vm2875, %v2864, %v2866
        %v2882 = vsel %vm2875, %v2866, %v2868
        %v2883 = vsel %vm2875, %v2868, %v2870
        %v2884 = vsel %vm2875, %v2870, %v2872
        %v2885 = vsel %vm2875, %v2872, %v2874
        %v2897 = vsel %vm1132, %v2852, 0
        %2899 = vmatpush.msra.mxu0 0.0
        %2900 = vmatpush.msra.mxu0 0.0
        %2901 = vmatpush.msra.mxu0 0.0
        %2902 = vmatpush.msra.mxu0 0.0
        %2903 = vmatpush.msra.mxu0 0.0
        %2904 = vmatpush.msra.mxu0 0.0
        %2905 = vmatpush.msra.mxu0 0.0
        %2906 = vmatpush.msra.mxu0 0.0
        %2907 = vmatpush.msra.mxu0 0.0
        %2908 = vmatpush.msra.mxu0 0.0
        %2909 = vmatpush.msra.mxu0 0.0
        %2910 = vmatpush.msra.mxu0 0.0
        %2911 = vmatpush.msra.mxu0 0.0
        %2912 = vmatpush.msra.mxu0 0.0
        %2913 = vmatpush.msra.mxu0 0.0
        %2914 = vmatpush.msra.mxu0 %v2876
        %2915 = vmatmul.f32.gmra.mxu0 %v2897
        %v2916 = vpop.f32.mrf.mxu0
        %v2917 = vadd.f32 0.0, %v2916
        %2918 = vdwg.mxu0
        %2919 = vmatpush.msra.mxu0 0.0
        %2920 = vmatpush.msra.mxu0 0.0
        %2921 = vmatpush.msra.mxu0 0.0
        %2922 = vmatpush.msra.mxu0 0.0
        %2923 = vmatpush.msra.mxu0 0.0
        %2924 = vmatpush.msra.mxu0 0.0
        %2925 = vmatpush.msra.mxu0 0.0
        %2926 = vmatpush.msra.mxu0 0.0
        %2927 = vmatpush.msra.mxu0 0.0
        %2928 = vmatpush.msra.mxu0 0.0
        %2929 = vmatpush.msra.mxu0 0.0
        %2930 = vmatpush.msra.mxu0 0.0
        %2931 = vmatpush.msra.mxu0 0.0
        %2932 = vmatpush.msra.mxu0 0.0
        %2933 = vmatpush.msra.mxu0 0.0
        %2934 = vmatpush.msra.mxu0 %v2877
        %2935 = vmatmul.f32.gmra.mxu0 %v2897
        %v2936 = vpop.f32.mrf.mxu0
        %v2937 = vadd.f32 0.0, %v2936
        %2938 = vdwg.mxu0
        %2939 = vmatpush.msra.mxu0 0.0
        %2940 = vmatpush.msra.mxu0 0.0
        %2941 = vmatpush.msra.mxu0 0.0
        %2942 = vmatpush.msra.mxu0 0.0
        %2943 = vmatpush.msra.mxu0 0.0
        %2944 = vmatpush.msra.mxu0 0.0
        %2945 = vmatpush.msra.mxu0 0.0
        %2946 = vmatpush.msra.mxu0 0.0
        %2947 = vmatpush.msra.mxu0 0.0
        %2948 = vmatpush.msra.mxu0 0.0
        %2949 = vmatpush.msra.mxu0 0.0
        %2950 = vmatpush.msra.mxu0 0.0
        %2951 = vmatpush.msra.mxu0 0.0
        %2952 = vmatpush.msra.mxu0 0.0
        %2953 = vmatpush.msra.mxu0 0.0
        %2954 = vmatpush.msra.mxu0 %v2878
        %2955 = vmatmul.f32.gmra.mxu0 %v2897
        %v2956 = vpop.f32.mrf.mxu0
        %v2957 = vadd.f32 0.0, %v2956
        %2958 = vdwg.mxu0
        %2959 = vmatpush.msra.mxu0 0.0
        %2960 = vmatpush.msra.mxu0 0.0
        %2961 = vmatpush.msra.mxu0 0.0
        %2962 = vmatpush.msra.mxu0 0.0
        %2963 = vmatpush.msra.mxu0 0.0
        %2964 = vmatpush.msra.mxu0 0.0
        %2965 = vmatpush.msra.mxu0 0.0
        %2966 = vmatpush.msra.mxu0 0.0
        %2967 = vmatpush.msra.mxu0 0.0
        %2968 = vmatpush.msra.mxu0 0.0
        %2969 = vmatpush.msra.mxu0 0.0
        %2970 = vmatpush.msra.mxu0 0.0
        %2971 = vmatpush.msra.mxu0 0.0
        %2972 = vmatpush.msra.mxu0 0.0
        %2973 = vmatpush.msra.mxu0 0.0
        %2974 = vmatpush.msra.mxu0 %v2879
        %2975 = vmatmul.f32.gmra.mxu0 %v2897
        %v2976 = vpop.f32.mrf.mxu0
        %v2977 = vadd.f32 0.0, %v2976
        %2978 = vdwg.mxu0
        %2979 = vmatpush.msra.mxu0 0.0
        %2980 = vmatpush.msra.mxu0 0.0
        %2981 = vmatpush.msra.mxu0 0.0
        %2982 = vmatpush.msra.mxu0 0.0
        %2983 = vmatpush.msra.mxu0 0.0
        %2984 = vmatpush.msra.mxu0 0.0
        %2985 = vmatpush.msra.mxu0 0.0
        %2986 = vmatpush.msra.mxu0 0.0
        %2987 = vmatpush.msra.mxu0 0.0
        %2988 = vmatpush.msra.mxu0 0.0
        %2989 = vmatpush.msra.mxu0 0.0
        %2990 = vmatpush.msra.mxu0 0.0
        %2991 = vmatpush.msra.mxu0 0.0
        %2992 = vmatpush.msra.mxu0 0.0
        %2993 = vmatpush.msra.mxu0 0.0
        %2994 = vmatpush.msra.mxu0 %v2880
        %2995 = vmatmul.f32.gmra.mxu0 %v2897
        %v2996 = vpop.f32.mrf.mxu0
        %v2997 = vadd.f32 0.0, %v2996
        %2998 = vdwg.mxu0
        %2999 = vmatpush.msra.mxu0 0.0
        %3000 = vmatpush.msra.mxu0 0.0
        %3001 = vmatpush.msra.mxu0 0.0
        %3002 = vmatpush.msra.mxu0 0.0
        %3003 = vmatpush.msra.mxu0 0.0
        %3004 = vmatpush.msra.mxu0 0.0
        %3005 = vmatpush.msra.mxu0 0.0
        %3006 = vmatpush.msra.mxu0 0.0
        %3007 = vmatpush.msra.mxu0 0.0
        %3008 = vmatpush.msra.mxu0 0.0
        %3009 = vmatpush.msra.mxu0 0.0
        %3010 = vmatpush.msra.mxu0 0.0
        %3011 = vmatpush.msra.mxu0 0.0
        %3012 = vmatpush.msra.mxu0 0.0
        %3013 = vmatpush.msra.mxu0 0.0
        %3014 = vmatpush.msra.mxu0 %v2881
        %3015 = vmatmul.f32.gmra.mxu0 %v2897
        %v3016 = vpop.f32.mrf.mxu0
        %v3017 = vadd.f32 0.0, %v3016
        %3018 = vdwg.mxu0
        %3019 = vmatpush.msra.mxu0 0.0
        %3020 = vmatpush.msra.mxu0 0.0
        %3021 = vmatpush.msra.mxu0 0.0
        %3022 = vmatpush.msra.mxu0 0.0
        %3023 = vmatpush.msra.mxu0 0.0
        %3024 = vmatpush.msra.mxu0 0.0
        %3025 = vmatpush.msra.mxu0 0.0
        %3026 = vmatpush.msra.mxu0 0.0
        %3027 = vmatpush.msra.mxu0 0.0
        %3028 = vmatpush.msra.mxu0 0.0
        %3029 = vmatpush.msra.mxu0 0.0
        %3030 = vmatpush.msra.mxu0 0.0
        %3031 = vmatpush.msra.mxu0 0.0
        %3032 = vmatpush.msra.mxu0 0.0
        %3033 = vmatpush.msra.mxu0 0.0
        %3034 = vmatpush.msra.mxu0 %v2882
        %3035 = vmatmul.f32.gmra.mxu0 %v2897
        %v3036 = vpop.f32.mrf.mxu0
        %v3037 = vadd.f32 0.0, %v3036
        %3038 = vdwg.mxu0
        %3039 = vmatpush.msra.mxu0 0.0
        %3040 = vmatpush.msra.mxu0 0.0
        %3041 = vmatpush.msra.mxu0 0.0
        %3042 = vmatpush.msra.mxu0 0.0
        %3043 = vmatpush.msra.mxu0 0.0
        %3044 = vmatpush.msra.mxu0 0.0
        %3045 = vmatpush.msra.mxu0 0.0
        %3046 = vmatpush.msra.mxu0 0.0
        %3047 = vmatpush.msra.mxu0 0.0
        %3048 = vmatpush.msra.mxu0 0.0
        %3049 = vmatpush.msra.mxu0 0.0
        %3050 = vmatpush.msra.mxu0 0.0
        %3051 = vmatpush.msra.mxu0 0.0
        %3052 = vmatpush.msra.mxu0 0.0
        %3053 = vmatpush.msra.mxu0 0.0
        %3054 = vmatpush.msra.mxu0 %v2883
        %3055 = vmatmul.f32.gmra.mxu0 %v2897
        %v3056 = vpop.f32.mrf.mxu0
        %v3057 = vadd.f32 0.0, %v3056
        %3058 = vdwg.mxu0
        %3059 = vmatpush.msra.mxu0 0.0
        %3060 = vmatpush.msra.mxu0 0.0
        %3061 = vmatpush.msra.mxu0 0.0
        %3062 = vmatpush.msra.mxu0 0.0
        %3063 = vmatpush.msra.mxu0 0.0
        %3064 = vmatpush.msra.mxu0 0.0
        %3065 = vmatpush.msra.mxu0 0.0
        %3066 = vmatpush.msra.mxu0 0.0
        %3067 = vmatpush.msra.mxu0 0.0
        %3068 = vmatpush.msra.mxu0 0.0
        %3069 = vmatpush.msra.mxu0 0.0
        %3070 = vmatpush.msra.mxu0 0.0
        %3071 = vmatpush.msra.mxu0 0.0
        %3072 = vmatpush.msra.mxu0 0.0
        %3073 = vmatpush.msra.mxu0 0.0
        %3074 = vmatpush.msra.mxu0 %v2884
        %3075 = vmatmul.f32.gmra.mxu0 %v2897
        %v3076 = vpop.f32.mrf.mxu0
        %v3077 = vadd.f32 0.0, %v3076
        %3078 = vdwg.mxu0
        %3079 = vmatpush.msra.mxu0 0.0
        %3080 = vmatpush.msra.mxu0 0.0
        %3081 = vmatpush.msra.mxu0 0.0
        %3082 = vmatpush.msra.mxu0 0.0
        %3083 = vmatpush.msra.mxu0 0.0
        %3084 = vmatpush.msra.mxu0 0.0
        %3085 = vmatpush.msra.mxu0 0.0
        %3086 = vmatpush.msra.mxu0 0.0
        %3087 = vmatpush.msra.mxu0 0.0
        %3088 = vmatpush.msra.mxu0 0.0
        %3089 = vmatpush.msra.mxu0 0.0
        %3090 = vmatpush.msra.mxu0 0.0
        %3091 = vmatpush.msra.mxu0 0.0
        %3092 = vmatpush.msra.mxu0 0.0
        %3093 = vmatpush.msra.mxu0 0.0
        %3094 = vmatpush.msra.mxu0 %v2885
        %3095 = vmatmul.f32.gmra.mxu0 %v2897
        %v3096 = vpop.f32.mrf.mxu0
        %v3097 = vadd.f32 0.0, %v3096
        %3098 = vdwg.mxu0
        %v3099 = vadd.f32 %v2841, %v2917
        %v3100 = vadd.f32 %v2842, %v2937
        %v3101 = vadd.f32 %v2843, %v2957
        %v3102 = vadd.f32 %v2844, %v2977
        %v3103 = vadd.f32 %v2845, %v2997
        %v3104 = vadd.f32 %v2846, %v3017
        %v3105 = vadd.f32 %v2847, %v3037
        %v3106 = vadd.f32 %v2848, %v3057
        %v3107 = vadd.f32 %v2849, %v3077
        %v3108 = vadd.f32 %v2850, %v3097
        %s3109 = scalar_lea.vmem %s2, 64
        %v3110 = vld [vmem:[%s3109] sm:$0xff]
        %3111 = vrot.lane.b32.xlu0 %v2315, 93
        %v3112 = vpop.permute.xlu0 %3111
        %3113 = vrot.lane.b32.xlu0 %v2316, 93
        %v3114 = vpop.permute.xlu0 %3113
        %3115 = vrot.lane.b32.xlu0 %v2317, 93
        %v3116 = vpop.permute.xlu0 %3115
        %3117 = vrot.lane.b32.xlu0 %v2318, 93
        %v3118 = vpop.permute.xlu0 %3117
        %3119 = vrot.lane.b32.xlu0 %v2319, 93
        %v3120 = vpop.permute.xlu0 %3119
        %3121 = vrot.lane.b32.xlu0 %v2320, 93
        %v3122 = vpop.permute.xlu0 %3121
        %3123 = vrot.lane.b32.xlu0 %v2321, 93
        %v3124 = vpop.permute.xlu0 %3123
        %3125 = vrot.lane.b32.xlu0 %v2322, 93
        %v3126 = vpop.permute.xlu0 %3125
        %3127 = vrot.lane.b32.xlu0 %v2323, 93
        %v3128 = vpop.permute.xlu0 %3127
        %3129 = vrot.lane.b32.xlu0 %v2324, 93
        %v3130 = vpop.permute.xlu0 %3129
        %3131 = vrot.lane.b32.xlu0 %v2325, 93
        %v3132 = vpop.permute.xlu0 %3131
        %vm3133 = vcmask 760832
        %v3134 = vsel %vm3133, %v3112, %v3114
        %v3135 = vsel %vm3133, %v3114, %v3116
        %v3136 = vsel %vm3133, %v3116, %v3118
        %v3137 = vsel %vm3133, %v3118, %v3120
        %v3138 = vsel %vm3133, %v3120, %v3122
        %v3139 = vsel %vm3133, %v3122, %v3124
        %v3140 = vsel %vm3133, %v3124, %v3126
        %v3141 = vsel %vm3133, %v3126, %v3128
        %v3142 = vsel %vm3133, %v3128, %v3130
        %v3143 = vsel %vm3133, %v3130, %v3132
        %v3155 = vsel %vm1132, %v3110, 0
        %3157 = vmatpush.msra.mxu0 0.0
        %3158 = vmatpush.msra.mxu0 0.0
        %3159 = vmatpush.msra.mxu0 0.0
        %3160 = vmatpush.msra.mxu0 0.0
        %3161 = vmatpush.msra.mxu0 0.0
        %3162 = vmatpush.msra.mxu0 0.0
        %3163 = vmatpush.msra.mxu0 0.0
        %3164 = vmatpush.msra.mxu0 0.0
        %3165 = vmatpush.msra.mxu0 0.0
        %3166 = vmatpush.msra.mxu0 0.0
        %3167 = vmatpush.msra.mxu0 0.0
        %3168 = vmatpush.msra.mxu0 0.0
        %3169 = vmatpush.msra.mxu0 0.0
        %3170 = vmatpush.msra.mxu0 0.0
        %3171 = vmatpush.msra.mxu0 0.0
        %3172 = vmatpush.msra.mxu0 %v3134
        %3173 = vmatmul.f32.gmra.mxu0 %v3155
        %v3174 = vpop.f32.mrf.mxu0
        %v3175 = vadd.f32 0.0, %v3174
        %3176 = vdwg.mxu0
        %3177 = vmatpush.msra.mxu0 0.0
        %3178 = vmatpush.msra.mxu0 0.0
        %3179 = vmatpush.msra.mxu0 0.0
        %3180 = vmatpush.msra.mxu0 0.0
        %3181 = vmatpush.msra.mxu0 0.0
        %3182 = vmatpush.msra.mxu0 0.0
        %3183 = vmatpush.msra.mxu0 0.0
        %3184 = vmatpush.msra.mxu0 0.0
        %3185 = vmatpush.msra.mxu0 0.0
        %3186 = vmatpush.msra.mxu0 0.0
        %3187 = vmatpush.msra.mxu0 0.0
        %3188 = vmatpush.msra.mxu0 0.0
        %3189 = vmatpush.msra.mxu0 0.0
        %3190 = vmatpush.msra.mxu0 0.0
        %3191 = vmatpush.msra.mxu0 0.0
        %3192 = vmatpush.msra.mxu0 %v3135
        %3193 = vmatmul.f32.gmra.mxu0 %v3155
        %v3194 = vpop.f32.mrf.mxu0
        %v3195 = vadd.f32 0.0, %v3194
        %3196 = vdwg.mxu0
        %3197 = vmatpush.msra.mxu0 0.0
        %3198 = vmatpush.msra.mxu0 0.0
        %3199 = vmatpush.msra.mxu0 0.0
        %3200 = vmatpush.msra.mxu0 0.0
        %3201 = vmatpush.msra.mxu0 0.0
        %3202 = vmatpush.msra.mxu0 0.0
        %3203 = vmatpush.msra.mxu0 0.0
        %3204 = vmatpush.msra.mxu0 0.0
        %3205 = vmatpush.msra.mxu0 0.0
        %3206 = vmatpush.msra.mxu0 0.0
        %3207 = vmatpush.msra.mxu0 0.0
        %3208 = vmatpush.msra.mxu0 0.0
        %3209 = vmatpush.msra.mxu0 0.0
        %3210 = vmatpush.msra.mxu0 0.0
        %3211 = vmatpush.msra.mxu0 0.0
        %3212 = vmatpush.msra.mxu0 %v3136
        %3213 = vmatmul.f32.gmra.mxu0 %v3155
        %v3214 = vpop.f32.mrf.mxu0
        %v3215 = vadd.f32 0.0, %v3214
        %3216 = vdwg.mxu0
        %3217 = vmatpush.msra.mxu0 0.0
        %3218 = vmatpush.msra.mxu0 0.0
        %3219 = vmatpush.msra.mxu0 0.0
        %3220 = vmatpush.msra.mxu0 0.0
        %3221 = vmatpush.msra.mxu0 0.0
        %3222 = vmatpush.msra.mxu0 0.0
        %3223 = vmatpush.msra.mxu0 0.0
        %3224 = vmatpush.msra.mxu0 0.0
        %3225 = vmatpush.msra.mxu0 0.0
        %3226 = vmatpush.msra.mxu0 0.0
        %3227 = vmatpush.msra.mxu0 0.0
        %3228 = vmatpush.msra.mxu0 0.0
        %3229 = vmatpush.msra.mxu0 0.0
        %3230 = vmatpush.msra.mxu0 0.0
        %3231 = vmatpush.msra.mxu0 0.0
        %3232 = vmatpush.msra.mxu0 %v3137
        %3233 = vmatmul.f32.gmra.mxu0 %v3155
        %v3234 = vpop.f32.mrf.mxu0
        %v3235 = vadd.f32 0.0, %v3234
        %3236 = vdwg.mxu0
        %3237 = vmatpush.msra.mxu0 0.0
        %3238 = vmatpush.msra.mxu0 0.0
        %3239 = vmatpush.msra.mxu0 0.0
        %3240 = vmatpush.msra.mxu0 0.0
        %3241 = vmatpush.msra.mxu0 0.0
        %3242 = vmatpush.msra.mxu0 0.0
        %3243 = vmatpush.msra.mxu0 0.0
        %3244 = vmatpush.msra.mxu0 0.0
        %3245 = vmatpush.msra.mxu0 0.0
        %3246 = vmatpush.msra.mxu0 0.0
        %3247 = vmatpush.msra.mxu0 0.0
        %3248 = vmatpush.msra.mxu0 0.0
        %3249 = vmatpush.msra.mxu0 0.0
        %3250 = vmatpush.msra.mxu0 0.0
        %3251 = vmatpush.msra.mxu0 0.0
        %3252 = vmatpush.msra.mxu0 %v3138
        %3253 = vmatmul.f32.gmra.mxu0 %v3155
        %v3254 = vpop.f32.mrf.mxu0
        %v3255 = vadd.f32 0.0, %v3254
        %3256 = vdwg.mxu0
        %3257 = vmatpush.msra.mxu0 0.0
        %3258 = vmatpush.msra.mxu0 0.0
        %3259 = vmatpush.msra.mxu0 0.0
        %3260 = vmatpush.msra.mxu0 0.0
        %3261 = vmatpush.msra.mxu0 0.0
        %3262 = vmatpush.msra.mxu0 0.0
        %3263 = vmatpush.msra.mxu0 0.0
        %3264 = vmatpush.msra.mxu0 0.0
        %3265 = vmatpush.msra.mxu0 0.0
        %3266 = vmatpush.msra.mxu0 0.0
        %3267 = vmatpush.msra.mxu0 0.0
        %3268 = vmatpush.msra.mxu0 0.0
        %3269 = vmatpush.msra.mxu0 0.0
        %3270 = vmatpush.msra.mxu0 0.0
        %3271 = vmatpush.msra.mxu0 0.0
        %3272 = vmatpush.msra.mxu0 %v3139
        %3273 = vmatmul.f32.gmra.mxu0 %v3155
        %v3274 = vpop.f32.mrf.mxu0
        %v3275 = vadd.f32 0.0, %v3274
        %3276 = vdwg.mxu0
        %3277 = vmatpush.msra.mxu0 0.0
        %3278 = vmatpush.msra.mxu0 0.0
        %3279 = vmatpush.msra.mxu0 0.0
        %3280 = vmatpush.msra.mxu0 0.0
        %3281 = vmatpush.msra.mxu0 0.0
        %3282 = vmatpush.msra.mxu0 0.0
        %3283 = vmatpush.msra.mxu0 0.0
        %3284 = vmatpush.msra.mxu0 0.0
        %3285 = vmatpush.msra.mxu0 0.0
        %3286 = vmatpush.msra.mxu0 0.0
        %3287 = vmatpush.msra.mxu0 0.0
        %3288 = vmatpush.msra.mxu0 0.0
        %3289 = vmatpush.msra.mxu0 0.0
        %3290 = vmatpush.msra.mxu0 0.0
        %3291 = vmatpush.msra.mxu0 0.0
        %3292 = vmatpush.msra.mxu0 %v3140
        %3293 = vmatmul.f32.gmra.mxu0 %v3155
        %v3294 = vpop.f32.mrf.mxu0
        %v3295 = vadd.f32 0.0, %v3294
        %3296 = vdwg.mxu0
        %3297 = vmatpush.msra.mxu0 0.0
        %3298 = vmatpush.msra.mxu0 0.0
        %3299 = vmatpush.msra.mxu0 0.0
        %3300 = vmatpush.msra.mxu0 0.0
        %3301 = vmatpush.msra.mxu0 0.0
        %3302 = vmatpush.msra.mxu0 0.0
        %3303 = vmatpush.msra.mxu0 0.0
        %3304 = vmatpush.msra.mxu0 0.0
        %3305 = vmatpush.msra.mxu0 0.0
        %3306 = vmatpush.msra.mxu0 0.0
        %3307 = vmatpush.msra.mxu0 0.0
        %3308 = vmatpush.msra.mxu0 0.0
        %3309 = vmatpush.msra.mxu0 0.0
        %3310 = vmatpush.msra.mxu0 0.0
        %3311 = vmatpush.msra.mxu0 0.0
        %3312 = vmatpush.msra.mxu0 %v3141
        %3313 = vmatmul.f32.gmra.mxu0 %v3155
        %v3314 = vpop.f32.mrf.mxu0
        %v3315 = vadd.f32 0.0, %v3314
        %3316 = vdwg.mxu0
        %3317 = vmatpush.msra.mxu0 0.0
        %3318 = vmatpush.msra.mxu0 0.0
        %3319 = vmatpush.msra.mxu0 0.0
        %3320 = vmatpush.msra.mxu0 0.0
        %3321 = vmatpush.msra.mxu0 0.0
        %3322 = vmatpush.msra.mxu0 0.0
        %3323 = vmatpush.msra.mxu0 0.0
        %3324 = vmatpush.msra.mxu0 0.0
        %3325 = vmatpush.msra.mxu0 0.0
        %3326 = vmatpush.msra.mxu0 0.0
        %3327 = vmatpush.msra.mxu0 0.0
        %3328 = vmatpush.msra.mxu0 0.0
        %3329 = vmatpush.msra.mxu0 0.0
        %3330 = vmatpush.msra.mxu0 0.0
        %3331 = vmatpush.msra.mxu0 0.0
        %3332 = vmatpush.msra.mxu0 %v3142
        %3333 = vmatmul.f32.gmra.mxu0 %v3155
        %v3334 = vpop.f32.mrf.mxu0
        %v3335 = vadd.f32 0.0, %v3334
        %3336 = vdwg.mxu0
        %3337 = vmatpush.msra.mxu0 0.0
        %3338 = vmatpush.msra.mxu0 0.0
        %3339 = vmatpush.msra.mxu0 0.0
        %3340 = vmatpush.msra.mxu0 0.0
        %3341 = vmatpush.msra.mxu0 0.0
        %3342 = vmatpush.msra.mxu0 0.0
        %3343 = vmatpush.msra.mxu0 0.0
        %3344 = vmatpush.msra.mxu0 0.0
        %3345 = vmatpush.msra.mxu0 0.0
        %3346 = vmatpush.msra.mxu0 0.0
        %3347 = vmatpush.msra.mxu0 0.0
        %3348 = vmatpush.msra.mxu0 0.0
        %3349 = vmatpush.msra.mxu0 0.0
        %3350 = vmatpush.msra.mxu0 0.0
        %3351 = vmatpush.msra.mxu0 0.0
        %3352 = vmatpush.msra.mxu0 %v3143
        %3353 = vmatmul.f32.gmra.mxu0 %v3155
        %v3354 = vpop.f32.mrf.mxu0
        %v3355 = vadd.f32 0.0, %v3354
        %3356 = vdwg.mxu0
        %v3357 = vadd.f32 %v3099, %v3175
        %v3358 = vadd.f32 %v3100, %v3195
        %v3359 = vadd.f32 %v3101, %v3215
        %v3360 = vadd.f32 %v3102, %v3235
        %v3361 = vadd.f32 %v3103, %v3255
        %v3362 = vadd.f32 %v3104, %v3275
        %v3363 = vadd.f32 %v3105, %v3295
        %v3364 = vadd.f32 %v3106, %v3315
        %v3365 = vadd.f32 %v3107, %v3335
        %v3366 = vadd.f32 %v3108, %v3355
        %v3367 = vld [vmem:[%s3] sm:$0xff]
        %3369 = vset.pattern.permute.xlu0 0
        %3370 = vperm.xlu0 %3369, %v3367
        %v3371 = vpop.permute.xlu0 %3370
        %v3373 = vadd.f32 %v3357, %v3371
        %v3374 = vadd.f32 %v3358, %v3371
        %v3375 = vadd.f32 %v3359, %v3371
        %v3376 = vadd.f32 %v3360, %v3371
        %v3377 = vadd.f32 %v3361, %v3371
        %v3378 = vadd.f32 %v3362, %v3371
        %v3379 = vadd.f32 %v3363, %v3371
        %v3380 = vadd.f32 %v3364, %v3371
        %v3381 = vadd.f32 %v3365, %v3371
        %v3382 = vadd.f32 %v3366, %v3371
        %v3383 = vmax.f32 %v3373, 0.0
        %v3384 = vmax.f32 %v3374, 0.0
        %v3385 = vmax.f32 %v3375, 0.0
        %v3386 = vmax.f32 %v3376, 0.0
        %v3387 = vmax.f32 %v3377, 0.0
        %v3388 = vmax.f32 %v3378, 0.0
        %v3389 = vmax.f32 %v3379, 0.0
        %v3390 = vmax.f32 %v3380, 0.0
        %v3391 = vmax.f32 %v3381, 0.0
        %v3392 = vmax.f32 %v3382, 0.0
        %v3393 = vld [vmem:[#allocation9] sm:$0xff]
        %v3394 = vld [vmem:[#allocation9 + $0x8] sm:$0x3]
        %v3397 = vperm.slane %v3393, 0
        %v3398 = vperm.slane %v3393, 1
        %v3399 = vperm.slane %v3393, 2
        %v3400 = vperm.slane %v3393, 3
        %v3401 = vperm.slane %v3393, 4
        %v3402 = vperm.slane %v3393, 5
        %v3403 = vperm.slane %v3393, 6
        %v3404 = vperm.slane %v3393, 7
        %v3405 = vperm.slane %v3394, 0
        %v3406 = vperm.slane %v3394, 1
        %v3417 = vmul.f32 %v3383, %v3397
        %v3418 = vmul.f32 %v3384, %v3398
        %v3419 = vmul.f32 %v3385, %v3399
        %v3420 = vmul.f32 %v3386, %v3400
        %v3421 = vmul.f32 %v3387, %v3401
        %v3422 = vmul.f32 %v3388, %v3402
        %v3423 = vmul.f32 %v3389, %v3403
        %v3424 = vmul.f32 %v3390, %v3404
        %v3425 = vmul.f32 %v3391, %v3405
        %v3426 = vmul.f32 %v3392, %v3406
        %3427 = vst [vmem:[#allocation3 + $0x8] sm:$0xff] %v3417
        %3428 = vst [vmem:[#allocation3 + $0x10] sm:$0xff] %v3418
        %3429 = vst [vmem:[#allocation3 + $0x18] sm:$0xff] %v3419
        %3430 = vst [vmem:[#allocation3 + $0x20] sm:$0xff] %v3420
        %3431 = vst [vmem:[#allocation3 + $0x28] sm:$0xff] %v3421
        %3432 = vst [vmem:[#allocation3 + $0x30] sm:$0xff] %v3422
        %3433 = vst [vmem:[#allocation3 + $0x38] sm:$0xff] %v3423
        %3434 = vst [vmem:[#allocation3 + $0x40] sm:$0xff] %v3424
        %3435 = vst [vmem:[#allocation3 + $0x48] sm:$0xff] %v3425
        %3436 = vst [vmem:[#allocation3 + $0x50] sm:$0xff] %v3426
        %v3437 = vld [vmem:[%s4] sm:$0xf]
        %v3438 = vld [vmem:[#allocation3] sm:$0xff]
        %v3439 = vld [vmem:[#allocation3 + $0x8] sm:$0xff]
        %v3440 = vld [vmem:[#allocation3 + $0x10] sm:$0xff]
        %v3441 = vld [vmem:[#allocation3 + $0x18] sm:$0xff]
        %v3442 = vld [vmem:[#allocation3 + $0x20] sm:$0xff]
        %v3443 = vld [vmem:[#allocation3 + $0x28] sm:$0xff]
        %v3444 = vld [vmem:[#allocation3 + $0x30] sm:$0xff]
        %v3445 = vld [vmem:[#allocation3 + $0x38] sm:$0xff]
        %v3446 = vld [vmem:[#allocation3 + $0x40] sm:$0xff]
        %v3447 = vld [vmem:[#allocation3 + $0x48] sm:$0xff]
        %v3448 = vld [vmem:[#allocation3 + $0x50] sm:$0xff]
        %s3449 = scalar_lea.vmem %s4, 4
        %v3450 = vld [vmem:[%s3449] sm:$0xf]
        %3462 = vrot.lane.b32.xlu0 %v3438, 34
        %v3463 = vpop.permute.xlu0 %3462
        %3464 = vrot.lane.b32.xlu0 %v3439, 34
        %v3465 = vpop.permute.xlu0 %3464
        %3466 = vrot.lane.b32.xlu0 %v3440, 34
        %v3467 = vpop.permute.xlu0 %3466
        %3468 = vrot.lane.b32.xlu0 %v3441, 34
        %v3469 = vpop.permute.xlu0 %3468
        %3470 = vrot.lane.b32.xlu0 %v3442, 34
        %v3471 = vpop.permute.xlu0 %3470
        %3472 = vrot.lane.b32.xlu0 %v3443, 34
        %v3473 = vpop.permute.xlu0 %3472
        %3474 = vrot.lane.b32.xlu0 %v3444, 34
        %v3475 = vpop.permute.xlu0 %3474
        %3476 = vrot.lane.b32.xlu0 %v3445, 34
        %v3477 = vpop.permute.xlu0 %3476
        %3478 = vrot.lane.b32.xlu0 %v3446, 34
        %v3479 = vpop.permute.xlu0 %3478
        %3480 = vrot.lane.b32.xlu0 %v3447, 34
        %v3481 = vpop.permute.xlu0 %3480
        %3482 = vrot.lane.b32.xlu0 %v3448, 34
        %v3483 = vpop.permute.xlu0 %3482
        %v3484 = vsel %vm1111, %v3463, %v3465
        %v3485 = vsel %vm1111, %v3465, %v3467
        %v3486 = vsel %vm1111, %v3467, %v3469
        %v3487 = vsel %vm1111, %v3469, %v3471
        %v3488 = vsel %vm1111, %v3471, %v3473
        %v3489 = vsel %vm1111, %v3473, %v3475
        %v3490 = vsel %vm1111, %v3475, %v3477
        %v3491 = vsel %vm1111, %v3477, %v3479
        %v3492 = vsel %vm1111, %v3479, %v3481
        %v3493 = vsel %vm1111, %v3481, %v3483
        %v3505 = vsel %vm1132, %v3450, 0
        %3507 = vmatpush.msra.mxu0 0.0
        %3508 = vmatpush.msra.mxu0 0.0
        %3509 = vmatpush.msra.mxu0 0.0
        %3510 = vmatpush.msra.mxu0 0.0
        %3511 = vmatpush.msra.mxu0 0.0
        %3512 = vmatpush.msra.mxu0 0.0
        %3513 = vmatpush.msra.mxu0 0.0
        %3514 = vmatpush.msra.mxu0 0.0
        %3515 = vmatpush.msra.mxu0 0.0
        %3516 = vmatpush.msra.mxu0 0.0
        %3517 = vmatpush.msra.mxu0 0.0
        %3518 = vmatpush.msra.mxu0 0.0
        %3519 = vmatpush.msra.mxu0 0.0
        %3520 = vmatpush.msra.mxu0 0.0
        %3521 = vmatpush.msra.mxu0 0.0
        %3522 = vmatpush.msra.mxu0 %v3484
        %3523 = vmatmul.f32.gmra.mxu0 %v3505
        %v3524 = vpop.f32.mrf.mxu0
        %v3525 = vadd.f32 0.0, %v3524
        %3526 = vdwg.mxu0
        %3527 = vmatpush.msra.mxu0 0.0
        %3528 = vmatpush.msra.mxu0 0.0
        %3529 = vmatpush.msra.mxu0 0.0
        %3530 = vmatpush.msra.mxu0 0.0
        %3531 = vmatpush.msra.mxu0 0.0
        %3532 = vmatpush.msra.mxu0 0.0
        %3533 = vmatpush.msra.mxu0 0.0
        %3534 = vmatpush.msra.mxu0 0.0
        %3535 = vmatpush.msra.mxu0 0.0
        %3536 = vmatpush.msra.mxu0 0.0
        %3537 = vmatpush.msra.mxu0 0.0
        %3538 = vmatpush.msra.mxu0 0.0
        %3539 = vmatpush.msra.mxu0 0.0
        %3540 = vmatpush.msra.mxu0 0.0
        %3541 = vmatpush.msra.mxu0 0.0
        %3542 = vmatpush.msra.mxu0 %v3485
        %3543 = vmatmul.f32.gmra.mxu0 %v3505
        %v3544 = vpop.f32.mrf.mxu0
        %v3545 = vadd.f32 0.0, %v3544
        %3546 = vdwg.mxu0
        %3547 = vmatpush.msra.mxu0 0.0
        %3548 = vmatpush.msra.mxu0 0.0
        %3549 = vmatpush.msra.mxu0 0.0
        %3550 = vmatpush.msra.mxu0 0.0
        %3551 = vmatpush.msra.mxu0 0.0
        %3552 = vmatpush.msra.mxu0 0.0
        %3553 = vmatpush.msra.mxu0 0.0
        %3554 = vmatpush.msra.mxu0 0.0
        %3555 = vmatpush.msra.mxu0 0.0
        %3556 = vmatpush.msra.mxu0 0.0
        %3557 = vmatpush.msra.mxu0 0.0
        %3558 = vmatpush.msra.mxu0 0.0
        %3559 = vmatpush.msra.mxu0 0.0
        %3560 = vmatpush.msra.mxu0 0.0
        %3561 = vmatpush.msra.mxu0 0.0
        %3562 = vmatpush.msra.mxu0 %v3486
        %3563 = vmatmul.f32.gmra.mxu0 %v3505
        %v3564 = vpop.f32.mrf.mxu0
        %v3565 = vadd.f32 0.0, %v3564
        %3566 = vdwg.mxu0
        %3567 = vmatpush.msra.mxu0 0.0
        %3568 = vmatpush.msra.mxu0 0.0
        %3569 = vmatpush.msra.mxu0 0.0
        %3570 = vmatpush.msra.mxu0 0.0
        %3571 = vmatpush.msra.mxu0 0.0
        %3572 = vmatpush.msra.mxu0 0.0
        %3573 = vmatpush.msra.mxu0 0.0
        %3574 = vmatpush.msra.mxu0 0.0
        %3575 = vmatpush.msra.mxu0 0.0
        %3576 = vmatpush.msra.mxu0 0.0
        %3577 = vmatpush.msra.mxu0 0.0
        %3578 = vmatpush.msra.mxu0 0.0
        %3579 = vmatpush.msra.mxu0 0.0
        %3580 = vmatpush.msra.mxu0 0.0
        %3581 = vmatpush.msra.mxu0 0.0
        %3582 = vmatpush.msra.mxu0 %v3487
        %3583 = vmatmul.f32.gmra.mxu0 %v3505
        %v3584 = vpop.f32.mrf.mxu0
        %v3585 = vadd.f32 0.0, %v3584
        %3586 = vdwg.mxu0
        %3587 = vmatpush.msra.mxu0 0.0
        %3588 = vmatpush.msra.mxu0 0.0
        %3589 = vmatpush.msra.mxu0 0.0
        %3590 = vmatpush.msra.mxu0 0.0
        %3591 = vmatpush.msra.mxu0 0.0
        %3592 = vmatpush.msra.mxu0 0.0
        %3593 = vmatpush.msra.mxu0 0.0
        %3594 = vmatpush.msra.mxu0 0.0
        %3595 = vmatpush.msra.mxu0 0.0
        %3596 = vmatpush.msra.mxu0 0.0
        %3597 = vmatpush.msra.mxu0 0.0
        %3598 = vmatpush.msra.mxu0 0.0
        %3599 = vmatpush.msra.mxu0 0.0
        %3600 = vmatpush.msra.mxu0 0.0
        %3601 = vmatpush.msra.mxu0 0.0
        %3602 = vmatpush.msra.mxu0 %v3488
        %3603 = vmatmul.f32.gmra.mxu0 %v3505
        %v3604 = vpop.f32.mrf.mxu0
        %v3605 = vadd.f32 0.0, %v3604
        %3606 = vdwg.mxu0
        %3607 = vmatpush.msra.mxu0 0.0
        %3608 = vmatpush.msra.mxu0 0.0
        %3609 = vmatpush.msra.mxu0 0.0
        %3610 = vmatpush.msra.mxu0 0.0
        %3611 = vmatpush.msra.mxu0 0.0
        %3612 = vmatpush.msra.mxu0 0.0
        %3613 = vmatpush.msra.mxu0 0.0
        %3614 = vmatpush.msra.mxu0 0.0
        %3615 = vmatpush.msra.mxu0 0.0
        %3616 = vmatpush.msra.mxu0 0.0
        %3617 = vmatpush.msra.mxu0 0.0
        %3618 = vmatpush.msra.mxu0 0.0
        %3619 = vmatpush.msra.mxu0 0.0
        %3620 = vmatpush.msra.mxu0 0.0
        %3621 = vmatpush.msra.mxu0 0.0
        %3622 = vmatpush.msra.mxu0 %v3489
        %3623 = vmatmul.f32.gmra.mxu0 %v3505
        %v3624 = vpop.f32.mrf.mxu0
        %v3625 = vadd.f32 0.0, %v3624
        %3626 = vdwg.mxu0
        %3627 = vmatpush.msra.mxu0 0.0
        %3628 = vmatpush.msra.mxu0 0.0
        %3629 = vmatpush.msra.mxu0 0.0
        %3630 = vmatpush.msra.mxu0 0.0
        %3631 = vmatpush.msra.mxu0 0.0
        %3632 = vmatpush.msra.mxu0 0.0
        %3633 = vmatpush.msra.mxu0 0.0
        %3634 = vmatpush.msra.mxu0 0.0
        %3635 = vmatpush.msra.mxu0 0.0
        %3636 = vmatpush.msra.mxu0 0.0
        %3637 = vmatpush.msra.mxu0 0.0
        %3638 = vmatpush.msra.mxu0 0.0
        %3639 = vmatpush.msra.mxu0 0.0
        %3640 = vmatpush.msra.mxu0 0.0
        %3641 = vmatpush.msra.mxu0 0.0
        %3642 = vmatpush.msra.mxu0 %v3490
        %3643 = vmatmul.f32.gmra.mxu0 %v3505
        %v3644 = vpop.f32.mrf.mxu0
        %v3645 = vadd.f32 0.0, %v3644
        %3646 = vdwg.mxu0
        %3647 = vmatpush.msra.mxu0 0.0
        %3648 = vmatpush.msra.mxu0 0.0
        %3649 = vmatpush.msra.mxu0 0.0
        %3650 = vmatpush.msra.mxu0 0.0
        %3651 = vmatpush.msra.mxu0 0.0
        %3652 = vmatpush.msra.mxu0 0.0
        %3653 = vmatpush.msra.mxu0 0.0
        %3654 = vmatpush.msra.mxu0 0.0
        %3655 = vmatpush.msra.mxu0 0.0
        %3656 = vmatpush.msra.mxu0 0.0
        %3657 = vmatpush.msra.mxu0 0.0
        %3658 = vmatpush.msra.mxu0 0.0
        %3659 = vmatpush.msra.mxu0 0.0
        %3660 = vmatpush.msra.mxu0 0.0
        %3661 = vmatpush.msra.mxu0 0.0
        %3662 = vmatpush.msra.mxu0 %v3491
        %3663 = vmatmul.f32.gmra.mxu0 %v3505
        %v3664 = vpop.f32.mrf.mxu0
        %v3665 = vadd.f32 0.0, %v3664
        %3666 = vdwg.mxu0
        %3667 = vmatpush.msra.mxu0 0.0
        %3668 = vmatpush.msra.mxu0 0.0
        %3669 = vmatpush.msra.mxu0 0.0
        %3670 = vmatpush.msra.mxu0 0.0
        %3671 = vmatpush.msra.mxu0 0.0
        %3672 = vmatpush.msra.mxu0 0.0
        %3673 = vmatpush.msra.mxu0 0.0
        %3674 = vmatpush.msra.mxu0 0.0
        %3675 = vmatpush.msra.mxu0 0.0
        %3676 = vmatpush.msra.mxu0 0.0
        %3677 = vmatpush.msra.mxu0 0.0
        %3678 = vmatpush.msra.mxu0 0.0
        %3679 = vmatpush.msra.mxu0 0.0
        %3680 = vmatpush.msra.mxu0 0.0
        %3681 = vmatpush.msra.mxu0 0.0
        %3682 = vmatpush.msra.mxu0 %v3492
        %3683 = vmatmul.f32.gmra.mxu0 %v3505
        %v3684 = vpop.f32.mrf.mxu0
        %v3685 = vadd.f32 0.0, %v3684
        %3686 = vdwg.mxu0
        %3687 = vmatpush.msra.mxu0 0.0
        %3688 = vmatpush.msra.mxu0 0.0
        %3689 = vmatpush.msra.mxu0 0.0
        %3690 = vmatpush.msra.mxu0 0.0
        %3691 = vmatpush.msra.mxu0 0.0
        %3692 = vmatpush.msra.mxu0 0.0
        %3693 = vmatpush.msra.mxu0 0.0
        %3694 = vmatpush.msra.mxu0 0.0
        %3695 = vmatpush.msra.mxu0 0.0
        %3696 = vmatpush.msra.mxu0 0.0
        %3697 = vmatpush.msra.mxu0 0.0
        %3698 = vmatpush.msra.mxu0 0.0
        %3699 = vmatpush.msra.mxu0 0.0
        %3700 = vmatpush.msra.mxu0 0.0
        %3701 = vmatpush.msra.mxu0 0.0
        %3702 = vmatpush.msra.mxu0 %v3493
        %3703 = vmatmul.f32.gmra.mxu0 %v3505
        %v3704 = vpop.f32.mrf.mxu0
        %v3705 = vadd.f32 0.0, %v3704
        %3706 = vdwg.mxu0
        %3707 = vrot.lane.b32.xlu0 %v3438, 35
        %v3708 = vpop.permute.xlu0 %3707
        %3709 = vrot.lane.b32.xlu0 %v3439, 35
        %v3710 = vpop.permute.xlu0 %3709
        %3711 = vrot.lane.b32.xlu0 %v3440, 35
        %v3712 = vpop.permute.xlu0 %3711
        %3713 = vrot.lane.b32.xlu0 %v3441, 35
        %v3714 = vpop.permute.xlu0 %3713
        %3715 = vrot.lane.b32.xlu0 %v3442, 35
        %v3716 = vpop.permute.xlu0 %3715
        %3717 = vrot.lane.b32.xlu0 %v3443, 35
        %v3718 = vpop.permute.xlu0 %3717
        %3719 = vrot.lane.b32.xlu0 %v3444, 35
        %v3720 = vpop.permute.xlu0 %3719
        %3721 = vrot.lane.b32.xlu0 %v3445, 35
        %v3722 = vpop.permute.xlu0 %3721
        %3723 = vrot.lane.b32.xlu0 %v3446, 35
        %v3724 = vpop.permute.xlu0 %3723
        %3725 = vrot.lane.b32.xlu0 %v3447, 35
        %v3726 = vpop.permute.xlu0 %3725
        %3727 = vrot.lane.b32.xlu0 %v3448, 35
        %v3728 = vpop.permute.xlu0 %3727
        %v3729 = vsel %vm1358, %v3708, %v3710
        %v3730 = vsel %vm1358, %v3710, %v3712
        %v3731 = vsel %vm1358, %v3712, %v3714
        %v3732 = vsel %vm1358, %v3714, %v3716
        %v3733 = vsel %vm1358, %v3716, %v3718
        %v3734 = vsel %vm1358, %v3718, %v3720
        %v3735 = vsel %vm1358, %v3720, %v3722
        %v3736 = vsel %vm1358, %v3722, %v3724
        %v3737 = vsel %vm1358, %v3724, %v3726
        %v3738 = vsel %vm1358, %v3726, %v3728
        %v3750 = vsel %vm1132, %v3437, 0
        %3752 = vmatpush.msra.mxu0 0.0
        %3753 = vmatpush.msra.mxu0 0.0
        %3754 = vmatpush.msra.mxu0 0.0
        %3755 = vmatpush.msra.mxu0 0.0
        %3756 = vmatpush.msra.mxu0 0.0
        %3757 = vmatpush.msra.mxu0 0.0
        %3758 = vmatpush.msra.mxu0 0.0
        %3759 = vmatpush.msra.mxu0 0.0
        %3760 = vmatpush.msra.mxu0 0.0
        %3761 = vmatpush.msra.mxu0 0.0
        %3762 = vmatpush.msra.mxu0 0.0
        %3763 = vmatpush.msra.mxu0 0.0
        %3764 = vmatpush.msra.mxu0 0.0
        %3765 = vmatpush.msra.mxu0 0.0
        %3766 = vmatpush.msra.mxu0 0.0
        %3767 = vmatpush.msra.mxu0 %v3729
        %3768 = vmatmul.f32.gmra.mxu0 %v3750
        %v3769 = vpop.f32.mrf.mxu0
        %v3770 = vadd.f32 %v3525, %v3769
        %3771 = vdwg.mxu0
        %3772 = vmatpush.msra.mxu0 0.0
        %3773 = vmatpush.msra.mxu0 0.0
        %3774 = vmatpush.msra.mxu0 0.0
        %3775 = vmatpush.msra.mxu0 0.0
        %3776 = vmatpush.msra.mxu0 0.0
        %3777 = vmatpush.msra.mxu0 0.0
        %3778 = vmatpush.msra.mxu0 0.0
        %3779 = vmatpush.msra.mxu0 0.0
        %3780 = vmatpush.msra.mxu0 0.0
        %3781 = vmatpush.msra.mxu0 0.0
        %3782 = vmatpush.msra.mxu0 0.0
        %3783 = vmatpush.msra.mxu0 0.0
        %3784 = vmatpush.msra.mxu0 0.0
        %3785 = vmatpush.msra.mxu0 0.0
        %3786 = vmatpush.msra.mxu0 0.0
        %3787 = vmatpush.msra.mxu0 %v3730
        %3788 = vmatmul.f32.gmra.mxu0 %v3750
        %v3789 = vpop.f32.mrf.mxu0
        %v3790 = vadd.f32 %v3545, %v3789
        %3791 = vdwg.mxu0
        %3792 = vmatpush.msra.mxu0 0.0
        %3793 = vmatpush.msra.mxu0 0.0
        %3794 = vmatpush.msra.mxu0 0.0
        %3795 = vmatpush.msra.mxu0 0.0
        %3796 = vmatpush.msra.mxu0 0.0
        %3797 = vmatpush.msra.mxu0 0.0
        %3798 = vmatpush.msra.mxu0 0.0
        %3799 = vmatpush.msra.mxu0 0.0
        %3800 = vmatpush.msra.mxu0 0.0
        %3801 = vmatpush.msra.mxu0 0.0
        %3802 = vmatpush.msra.mxu0 0.0
        %3803 = vmatpush.msra.mxu0 0.0
        %3804 = vmatpush.msra.mxu0 0.0
        %3805 = vmatpush.msra.mxu0 0.0
        %3806 = vmatpush.msra.mxu0 0.0
        %3807 = vmatpush.msra.mxu0 %v3731
        %3808 = vmatmul.f32.gmra.mxu0 %v3750
        %v3809 = vpop.f32.mrf.mxu0
        %v3810 = vadd.f32 %v3565, %v3809
        %3811 = vdwg.mxu0
        %3812 = vmatpush.msra.mxu0 0.0
        %3813 = vmatpush.msra.mxu0 0.0
        %3814 = vmatpush.msra.mxu0 0.0
        %3815 = vmatpush.msra.mxu0 0.0
        %3816 = vmatpush.msra.mxu0 0.0
        %3817 = vmatpush.msra.mxu0 0.0
        %3818 = vmatpush.msra.mxu0 0.0
        %3819 = vmatpush.msra.mxu0 0.0
        %3820 = vmatpush.msra.mxu0 0.0
        %3821 = vmatpush.msra.mxu0 0.0
        %3822 = vmatpush.msra.mxu0 0.0
        %3823 = vmatpush.msra.mxu0 0.0
        %3824 = vmatpush.msra.mxu0 0.0
        %3825 = vmatpush.msra.mxu0 0.0
        %3826 = vmatpush.msra.mxu0 0.0
        %3827 = vmatpush.msra.mxu0 %v3732
        %3828 = vmatmul.f32.gmra.mxu0 %v3750
        %v3829 = vpop.f32.mrf.mxu0
        %v3830 = vadd.f32 %v3585, %v3829
        %3831 = vdwg.mxu0
        %3832 = vmatpush.msra.mxu0 0.0
        %3833 = vmatpush.msra.mxu0 0.0
        %3834 = vmatpush.msra.mxu0 0.0
        %3835 = vmatpush.msra.mxu0 0.0
        %3836 = vmatpush.msra.mxu0 0.0
        %3837 = vmatpush.msra.mxu0 0.0
        %3838 = vmatpush.msra.mxu0 0.0
        %3839 = vmatpush.msra.mxu0 0.0
        %3840 = vmatpush.msra.mxu0 0.0
        %3841 = vmatpush.msra.mxu0 0.0
        %3842 = vmatpush.msra.mxu0 0.0
        %3843 = vmatpush.msra.mxu0 0.0
        %3844 = vmatpush.msra.mxu0 0.0
        %3845 = vmatpush.msra.mxu0 0.0
        %3846 = vmatpush.msra.mxu0 0.0
        %3847 = vmatpush.msra.mxu0 %v3733
        %3848 = vmatmul.f32.gmra.mxu0 %v3750
        %v3849 = vpop.f32.mrf.mxu0
        %v3850 = vadd.f32 %v3605, %v3849
        %3851 = vdwg.mxu0
        %3852 = vmatpush.msra.mxu0 0.0
        %3853 = vmatpush.msra.mxu0 0.0
        %3854 = vmatpush.msra.mxu0 0.0
        %3855 = vmatpush.msra.mxu0 0.0
        %3856 = vmatpush.msra.mxu0 0.0
        %3857 = vmatpush.msra.mxu0 0.0
        %3858 = vmatpush.msra.mxu0 0.0
        %3859 = vmatpush.msra.mxu0 0.0
        %3860 = vmatpush.msra.mxu0 0.0
        %3861 = vmatpush.msra.mxu0 0.0
        %3862 = vmatpush.msra.mxu0 0.0
        %3863 = vmatpush.msra.mxu0 0.0
        %3864 = vmatpush.msra.mxu0 0.0
        %3865 = vmatpush.msra.mxu0 0.0
        %3866 = vmatpush.msra.mxu0 0.0
        %3867 = vmatpush.msra.mxu0 %v3734
        %3868 = vmatmul.f32.gmra.mxu0 %v3750
        %v3869 = vpop.f32.mrf.mxu0
        %v3870 = vadd.f32 %v3625, %v3869
        %3871 = vdwg.mxu0
        %3872 = vmatpush.msra.mxu0 0.0
        %3873 = vmatpush.msra.mxu0 0.0
        %3874 = vmatpush.msra.mxu0 0.0
        %3875 = vmatpush.msra.mxu0 0.0
        %3876 = vmatpush.msra.mxu0 0.0
        %3877 = vmatpush.msra.mxu0 0.0
        %3878 = vmatpush.msra.mxu0 0.0
        %3879 = vmatpush.msra.mxu0 0.0
        %3880 = vmatpush.msra.mxu0 0.0
        %3881 = vmatpush.msra.mxu0 0.0
        %3882 = vmatpush.msra.mxu0 0.0
        %3883 = vmatpush.msra.mxu0 0.0
        %3884 = vmatpush.msra.mxu0 0.0
        %3885 = vmatpush.msra.mxu0 0.0
        %3886 = vmatpush.msra.mxu0 0.0
        %3887 = vmatpush.msra.mxu0 %v3735
        %3888 = vmatmul.f32.gmra.mxu0 %v3750
        %v3889 = vpop.f32.mrf.mxu0
        %v3890 = vadd.f32 %v3645, %v3889
        %3891 = vdwg.mxu0
        %3892 = vmatpush.msra.mxu0 0.0
        %3893 = vmatpush.msra.mxu0 0.0
        %3894 = vmatpush.msra.mxu0 0.0
        %3895 = vmatpush.msra.mxu0 0.0
        %3896 = vmatpush.msra.mxu0 0.0
        %3897 = vmatpush.msra.mxu0 0.0
        %3898 = vmatpush.msra.mxu0 0.0
        %3899 = vmatpush.msra.mxu0 0.0
        %3900 = vmatpush.msra.mxu0 0.0
        %3901 = vmatpush.msra.mxu0 0.0
        %3902 = vmatpush.msra.mxu0 0.0
        %3903 = vmatpush.msra.mxu0 0.0
        %3904 = vmatpush.msra.mxu0 0.0
        %3905 = vmatpush.msra.mxu0 0.0
        %3906 = vmatpush.msra.mxu0 0.0
        %3907 = vmatpush.msra.mxu0 %v3736
        %3908 = vmatmul.f32.gmra.mxu0 %v3750
        %v3909 = vpop.f32.mrf.mxu0
        %v3910 = vadd.f32 %v3665, %v3909
        %3911 = vdwg.mxu0
        %3912 = vmatpush.msra.mxu0 0.0
        %3913 = vmatpush.msra.mxu0 0.0
        %3914 = vmatpush.msra.mxu0 0.0
        %3915 = vmatpush.msra.mxu0 0.0
        %3916 = vmatpush.msra.mxu0 0.0
        %3917 = vmatpush.msra.mxu0 0.0
        %3918 = vmatpush.msra.mxu0 0.0
        %3919 = vmatpush.msra.mxu0 0.0
        %3920 = vmatpush.msra.mxu0 0.0
        %3921 = vmatpush.msra.mxu0 0.0
        %3922 = vmatpush.msra.mxu0 0.0
        %3923 = vmatpush.msra.mxu0 0.0
        %3924 = vmatpush.msra.mxu0 0.0
        %3925 = vmatpush.msra.mxu0 0.0
        %3926 = vmatpush.msra.mxu0 0.0
        %3927 = vmatpush.msra.mxu0 %v3737
        %3928 = vmatmul.f32.gmra.mxu0 %v3750
        %v3929 = vpop.f32.mrf.mxu0
        %v3930 = vadd.f32 %v3685, %v3929
        %3931 = vdwg.mxu0
        %3932 = vmatpush.msra.mxu0 0.0
        %3933 = vmatpush.msra.mxu0 0.0
        %3934 = vmatpush.msra.mxu0 0.0
        %3935 = vmatpush.msra.mxu0 0.0
        %3936 = vmatpush.msra.mxu0 0.0
        %3937 = vmatpush.msra.mxu0 0.0
        %3938 = vmatpush.msra.mxu0 0.0
        %3939 = vmatpush.msra.mxu0 0.0
        %3940 = vmatpush.msra.mxu0 0.0
        %3941 = vmatpush.msra.mxu0 0.0
        %3942 = vmatpush.msra.mxu0 0.0
        %3943 = vmatpush.msra.mxu0 0.0
        %3944 = vmatpush.msra.mxu0 0.0
        %3945 = vmatpush.msra.mxu0 0.0
        %3946 = vmatpush.msra.mxu0 0.0
        %3947 = vmatpush.msra.mxu0 %v3738
        %3948 = vmatmul.f32.gmra.mxu0 %v3750
        %v3949 = vpop.f32.mrf.mxu0
        %v3950 = vadd.f32 %v3705, %v3949
        %3951 = vdwg.mxu0
        %s3952 = scalar_lea.vmem %s4, 8
        %v3953 = vld [vmem:[%s3952] sm:$0xf]
        %3954 = vrot.lane.b32.xlu0 %v3438, 33
        %v3955 = vpop.permute.xlu0 %3954
        %3956 = vrot.lane.b32.xlu0 %v3439, 33
        %v3957 = vpop.permute.xlu0 %3956
        %3958 = vrot.lane.b32.xlu0 %v3440, 33
        %v3959 = vpop.permute.xlu0 %3958
        %3960 = vrot.lane.b32.xlu0 %v3441, 33
        %v3961 = vpop.permute.xlu0 %3960
        %3962 = vrot.lane.b32.xlu0 %v3442, 33
        %v3963 = vpop.permute.xlu0 %3962
        %3964 = vrot.lane.b32.xlu0 %v3443, 33
        %v3965 = vpop.permute.xlu0 %3964
        %3966 = vrot.lane.b32.xlu0 %v3444, 33
        %v3967 = vpop.permute.xlu0 %3966
        %3968 = vrot.lane.b32.xlu0 %v3445, 33
        %v3969 = vpop.permute.xlu0 %3968
        %3970 = vrot.lane.b32.xlu0 %v3446, 33
        %v3971 = vpop.permute.xlu0 %3970
        %3972 = vrot.lane.b32.xlu0 %v3447, 33
        %v3973 = vpop.permute.xlu0 %3972
        %3974 = vrot.lane.b32.xlu0 %v3448, 33
        %v3975 = vpop.permute.xlu0 %3974
        %v3976 = vsel %vm1606, %v3955, %v3957
        %v3977 = vsel %vm1606, %v3957, %v3959
        %v3978 = vsel %vm1606, %v3959, %v3961
        %v3979 = vsel %vm1606, %v3961, %v3963
        %v3980 = vsel %vm1606, %v3963, %v3965
        %v3981 = vsel %vm1606, %v3965, %v3967
        %v3982 = vsel %vm1606, %v3967, %v3969
        %v3983 = vsel %vm1606, %v3969, %v3971
        %v3984 = vsel %vm1606, %v3971, %v3973
        %v3985 = vsel %vm1606, %v3973, %v3975
        %v3997 = vsel %vm1132, %v3953, 0
        %3999 = vmatpush.msra.mxu0 0.0
        %4000 = vmatpush.msra.mxu0 0.0
        %4001 = vmatpush.msra.mxu0 0.0
        %4002 = vmatpush.msra.mxu0 0.0
        %4003 = vmatpush.msra.mxu0 0.0
        %4004 = vmatpush.msra.mxu0 0.0
        %4005 = vmatpush.msra.mxu0 0.0
        %4006 = vmatpush.msra.mxu0 0.0
        %4007 = vmatpush.msra.mxu0 0.0
        %4008 = vmatpush.msra.mxu0 0.0
        %4009 = vmatpush.msra.mxu0 0.0
        %4010 = vmatpush.msra.mxu0 0.0
        %4011 = vmatpush.msra.mxu0 0.0
        %4012 = vmatpush.msra.mxu0 0.0
        %4013 = vmatpush.msra.mxu0 0.0
        %4014 = vmatpush.msra.mxu0 %v3976
        %4015 = vmatmul.f32.gmra.mxu0 %v3997
        %v4016 = vpop.f32.mrf.mxu0
        %v4017 = vadd.f32 0.0, %v4016
        %4018 = vdwg.mxu0
        %4019 = vmatpush.msra.mxu0 0.0
        %4020 = vmatpush.msra.mxu0 0.0
        %4021 = vmatpush.msra.mxu0 0.0
        %4022 = vmatpush.msra.mxu0 0.0
        %4023 = vmatpush.msra.mxu0 0.0
        %4024 = vmatpush.msra.mxu0 0.0
        %4025 = vmatpush.msra.mxu0 0.0
        %4026 = vmatpush.msra.mxu0 0.0
        %4027 = vmatpush.msra.mxu0 0.0
        %4028 = vmatpush.msra.mxu0 0.0
        %4029 = vmatpush.msra.mxu0 0.0
        %4030 = vmatpush.msra.mxu0 0.0
        %4031 = vmatpush.msra.mxu0 0.0
        %4032 = vmatpush.msra.mxu0 0.0
        %4033 = vmatpush.msra.mxu0 0.0
        %4034 = vmatpush.msra.mxu0 %v3977
        %4035 = vmatmul.f32.gmra.mxu0 %v3997
        %v4036 = vpop.f32.mrf.mxu0
        %v4037 = vadd.f32 0.0, %v4036
        %4038 = vdwg.mxu0
        %4039 = vmatpush.msra.mxu0 0.0
        %4040 = vmatpush.msra.mxu0 0.0
        %4041 = vmatpush.msra.mxu0 0.0
        %4042 = vmatpush.msra.mxu0 0.0
        %4043 = vmatpush.msra.mxu0 0.0
        %4044 = vmatpush.msra.mxu0 0.0
        %4045 = vmatpush.msra.mxu0 0.0
        %4046 = vmatpush.msra.mxu0 0.0
        %4047 = vmatpush.msra.mxu0 0.0
        %4048 = vmatpush.msra.mxu0 0.0
        %4049 = vmatpush.msra.mxu0 0.0
        %4050 = vmatpush.msra.mxu0 0.0
        %4051 = vmatpush.msra.mxu0 0.0
        %4052 = vmatpush.msra.mxu0 0.0
        %4053 = vmatpush.msra.mxu0 0.0
        %4054 = vmatpush.msra.mxu0 %v3978
        %4055 = vmatmul.f32.gmra.mxu0 %v3997
        %v4056 = vpop.f32.mrf.mxu0
        %v4057 = vadd.f32 0.0, %v4056
        %4058 = vdwg.mxu0
        %4059 = vmatpush.msra.mxu0 0.0
        %4060 = vmatpush.msra.mxu0 0.0
        %4061 = vmatpush.msra.mxu0 0.0
        %4062 = vmatpush.msra.mxu0 0.0
        %4063 = vmatpush.msra.mxu0 0.0
        %4064 = vmatpush.msra.mxu0 0.0
        %4065 = vmatpush.msra.mxu0 0.0
        %4066 = vmatpush.msra.mxu0 0.0
        %4067 = vmatpush.msra.mxu0 0.0
        %4068 = vmatpush.msra.mxu0 0.0
        %4069 = vmatpush.msra.mxu0 0.0
        %4070 = vmatpush.msra.mxu0 0.0
        %4071 = vmatpush.msra.mxu0 0.0
        %4072 = vmatpush.msra.mxu0 0.0
        %4073 = vmatpush.msra.mxu0 0.0
        %4074 = vmatpush.msra.mxu0 %v3979
        %4075 = vmatmul.f32.gmra.mxu0 %v3997
        %v4076 = vpop.f32.mrf.mxu0
        %v4077 = vadd.f32 0.0, %v4076
        %4078 = vdwg.mxu0
        %4079 = vmatpush.msra.mxu0 0.0
        %4080 = vmatpush.msra.mxu0 0.0
        %4081 = vmatpush.msra.mxu0 0.0
        %4082 = vmatpush.msra.mxu0 0.0
        %4083 = vmatpush.msra.mxu0 0.0
        %4084 = vmatpush.msra.mxu0 0.0
        %4085 = vmatpush.msra.mxu0 0.0
        %4086 = vmatpush.msra.mxu0 0.0
        %4087 = vmatpush.msra.mxu0 0.0
        %4088 = vmatpush.msra.mxu0 0.0
        %4089 = vmatpush.msra.mxu0 0.0
        %4090 = vmatpush.msra.mxu0 0.0
        %4091 = vmatpush.msra.mxu0 0.0
        %4092 = vmatpush.msra.mxu0 0.0
        %4093 = vmatpush.msra.mxu0 0.0
        %4094 = vmatpush.msra.mxu0 %v3980
        %4095 = vmatmul.f32.gmra.mxu0 %v3997
        %v4096 = vpop.f32.mrf.mxu0
        %v4097 = vadd.f32 0.0, %v4096
        %4098 = vdwg.mxu0
        %4099 = vmatpush.msra.mxu0 0.0
        %4100 = vmatpush.msra.mxu0 0.0
        %4101 = vmatpush.msra.mxu0 0.0
        %4102 = vmatpush.msra.mxu0 0.0
        %4103 = vmatpush.msra.mxu0 0.0
        %4104 = vmatpush.msra.mxu0 0.0
        %4105 = vmatpush.msra.mxu0 0.0
        %4106 = vmatpush.msra.mxu0 0.0
        %4107 = vmatpush.msra.mxu0 0.0
        %4108 = vmatpush.msra.mxu0 0.0
        %4109 = vmatpush.msra.mxu0 0.0
        %4110 = vmatpush.msra.mxu0 0.0
        %4111 = vmatpush.msra.mxu0 0.0
        %4112 = vmatpush.msra.mxu0 0.0
        %4113 = vmatpush.msra.mxu0 0.0
        %4114 = vmatpush.msra.mxu0 %v3981
        %4115 = vmatmul.f32.gmra.mxu0 %v3997
        %v4116 = vpop.f32.mrf.mxu0
        %v4117 = vadd.f32 0.0, %v4116
        %4118 = vdwg.mxu0
        %4119 = vmatpush.msra.mxu0 0.0
        %4120 = vmatpush.msra.mxu0 0.0
        %4121 = vmatpush.msra.mxu0 0.0
        %4122 = vmatpush.msra.mxu0 0.0
        %4123 = vmatpush.msra.mxu0 0.0
        %4124 = vmatpush.msra.mxu0 0.0
        %4125 = vmatpush.msra.mxu0 0.0
        %4126 = vmatpush.msra.mxu0 0.0
        %4127 = vmatpush.msra.mxu0 0.0
        %4128 = vmatpush.msra.mxu0 0.0
        %4129 = vmatpush.msra.mxu0 0.0
        %4130 = vmatpush.msra.mxu0 0.0
        %4131 = vmatpush.msra.mxu0 0.0
        %4132 = vmatpush.msra.mxu0 0.0
        %4133 = vmatpush.msra.mxu0 0.0
        %4134 = vmatpush.msra.mxu0 %v3982
        %4135 = vmatmul.f32.gmra.mxu0 %v3997
        %v4136 = vpop.f32.mrf.mxu0
        %v4137 = vadd.f32 0.0, %v4136
        %4138 = vdwg.mxu0
        %4139 = vmatpush.msra.mxu0 0.0
        %4140 = vmatpush.msra.mxu0 0.0
        %4141 = vmatpush.msra.mxu0 0.0
        %4142 = vmatpush.msra.mxu0 0.0
        %4143 = vmatpush.msra.mxu0 0.0
        %4144 = vmatpush.msra.mxu0 0.0
        %4145 = vmatpush.msra.mxu0 0.0
        %4146 = vmatpush.msra.mxu0 0.0
        %4147 = vmatpush.msra.mxu0 0.0
        %4148 = vmatpush.msra.mxu0 0.0
        %4149 = vmatpush.msra.mxu0 0.0
        %4150 = vmatpush.msra.mxu0 0.0
        %4151 = vmatpush.msra.mxu0 0.0
        %4152 = vmatpush.msra.mxu0 0.0
        %4153 = vmatpush.msra.mxu0 0.0
        %4154 = vmatpush.msra.mxu0 %v3983
        %4155 = vmatmul.f32.gmra.mxu0 %v3997
        %v4156 = vpop.f32.mrf.mxu0
        %v4157 = vadd.f32 0.0, %v4156
        %4158 = vdwg.mxu0
        %4159 = vmatpush.msra.mxu0 0.0
        %4160 = vmatpush.msra.mxu0 0.0
        %4161 = vmatpush.msra.mxu0 0.0
        %4162 = vmatpush.msra.mxu0 0.0
        %4163 = vmatpush.msra.mxu0 0.0
        %4164 = vmatpush.msra.mxu0 0.0
        %4165 = vmatpush.msra.mxu0 0.0
        %4166 = vmatpush.msra.mxu0 0.0
        %4167 = vmatpush.msra.mxu0 0.0
        %4168 = vmatpush.msra.mxu0 0.0
        %4169 = vmatpush.msra.mxu0 0.0
        %4170 = vmatpush.msra.mxu0 0.0
        %4171 = vmatpush.msra.mxu0 0.0
        %4172 = vmatpush.msra.mxu0 0.0
        %4173 = vmatpush.msra.mxu0 0.0
        %4174 = vmatpush.msra.mxu0 %v3984
        %4175 = vmatmul.f32.gmra.mxu0 %v3997
        %v4176 = vpop.f32.mrf.mxu0
        %v4177 = vadd.f32 0.0, %v4176
        %4178 = vdwg.mxu0
        %4179 = vmatpush.msra.mxu0 0.0
        %4180 = vmatpush.msra.mxu0 0.0
        %4181 = vmatpush.msra.mxu0 0.0
        %4182 = vmatpush.msra.mxu0 0.0
        %4183 = vmatpush.msra.mxu0 0.0
        %4184 = vmatpush.msra.mxu0 0.0
        %4185 = vmatpush.msra.mxu0 0.0
        %4186 = vmatpush.msra.mxu0 0.0
        %4187 = vmatpush.msra.mxu0 0.0
        %4188 = vmatpush.msra.mxu0 0.0
        %4189 = vmatpush.msra.mxu0 0.0
        %4190 = vmatpush.msra.mxu0 0.0
        %4191 = vmatpush.msra.mxu0 0.0
        %4192 = vmatpush.msra.mxu0 0.0
        %4193 = vmatpush.msra.mxu0 0.0
        %4194 = vmatpush.msra.mxu0 %v3985
        %4195 = vmatmul.f32.gmra.mxu0 %v3997
        %v4196 = vpop.f32.mrf.mxu0
        %v4197 = vadd.f32 0.0, %v4196
        %4198 = vdwg.mxu0
        %v4199 = vadd.f32 %v3770, %v4017
        %v4200 = vadd.f32 %v3790, %v4037
        %v4201 = vadd.f32 %v3810, %v4057
        %v4202 = vadd.f32 %v3830, %v4077
        %v4203 = vadd.f32 %v3850, %v4097
        %v4204 = vadd.f32 %v3870, %v4117
        %v4205 = vadd.f32 %v3890, %v4137
        %v4206 = vadd.f32 %v3910, %v4157
        %v4207 = vadd.f32 %v3930, %v4177
        %v4208 = vadd.f32 %v3950, %v4197
        %s4209 = scalar_lea.vmem %s4, 12
        %v4210 = vld [vmem:[%s4209] sm:$0xf]
        %4211 = vrot.lane.b32.xlu0 %v3438, 1
        %v4212 = vpop.permute.xlu0 %4211
        %4213 = vrot.lane.b32.xlu0 %v3439, 1
        %v4214 = vpop.permute.xlu0 %4213
        %4215 = vrot.lane.b32.xlu0 %v3440, 1
        %v4216 = vpop.permute.xlu0 %4215
        %4217 = vrot.lane.b32.xlu0 %v3441, 1
        %v4218 = vpop.permute.xlu0 %4217
        %4219 = vrot.lane.b32.xlu0 %v3442, 1
        %v4220 = vpop.permute.xlu0 %4219
        %4221 = vrot.lane.b32.xlu0 %v3443, 1
        %v4222 = vpop.permute.xlu0 %4221
        %4223 = vrot.lane.b32.xlu0 %v3444, 1
        %v4224 = vpop.permute.xlu0 %4223
        %4225 = vrot.lane.b32.xlu0 %v3445, 1
        %v4226 = vpop.permute.xlu0 %4225
        %4227 = vrot.lane.b32.xlu0 %v3446, 1
        %v4228 = vpop.permute.xlu0 %4227
        %4229 = vrot.lane.b32.xlu0 %v3447, 1
        %v4230 = vpop.permute.xlu0 %4229
        %4231 = vrot.lane.b32.xlu0 %v3448, 1
        %v4232 = vpop.permute.xlu0 %4231
        %v4233 = vsel %vm1864, %v4212, %v4214
        %v4234 = vsel %vm1864, %v4214, %v4216
        %v4235 = vsel %vm1864, %v4216, %v4218
        %v4236 = vsel %vm1864, %v4218, %v4220
        %v4237 = vsel %vm1864, %v4220, %v4222
        %v4238 = vsel %vm1864, %v4222, %v4224
        %v4239 = vsel %vm1864, %v4224, %v4226
        %v4240 = vsel %vm1864, %v4226, %v4228
        %v4241 = vsel %vm1864, %v4228, %v4230
        %v4242 = vsel %vm1864, %v4230, %v4232
        %v4254 = vsel %vm1132, %v4210, 0
        %4256 = vmatpush.msra.mxu0 0.0
        %4257 = vmatpush.msra.mxu0 0.0
        %4258 = vmatpush.msra.mxu0 0.0
        %4259 = vmatpush.msra.mxu0 0.0
        %4260 = vmatpush.msra.mxu0 0.0
        %4261 = vmatpush.msra.mxu0 0.0
        %4262 = vmatpush.msra.mxu0 0.0
        %4263 = vmatpush.msra.mxu0 0.0
        %4264 = vmatpush.msra.mxu0 0.0
        %4265 = vmatpush.msra.mxu0 0.0
        %4266 = vmatpush.msra.mxu0 0.0
        %4267 = vmatpush.msra.mxu0 0.0
        %4268 = vmatpush.msra.mxu0 0.0
        %4269 = vmatpush.msra.mxu0 0.0
        %4270 = vmatpush.msra.mxu0 0.0
        %4271 = vmatpush.msra.mxu0 %v4233
        %4272 = vmatmul.f32.gmra.mxu0 %v4254
        %v4273 = vpop.f32.mrf.mxu0
        %v4274 = vadd.f32 0.0, %v4273
        %4275 = vdwg.mxu0
        %4276 = vmatpush.msra.mxu0 0.0
        %4277 = vmatpush.msra.mxu0 0.0
        %4278 = vmatpush.msra.mxu0 0.0
        %4279 = vmatpush.msra.mxu0 0.0
        %4280 = vmatpush.msra.mxu0 0.0
        %4281 = vmatpush.msra.mxu0 0.0
        %4282 = vmatpush.msra.mxu0 0.0
        %4283 = vmatpush.msra.mxu0 0.0
        %4284 = vmatpush.msra.mxu0 0.0
        %4285 = vmatpush.msra.mxu0 0.0
        %4286 = vmatpush.msra.mxu0 0.0
        %4287 = vmatpush.msra.mxu0 0.0
        %4288 = vmatpush.msra.mxu0 0.0
        %4289 = vmatpush.msra.mxu0 0.0
        %4290 = vmatpush.msra.mxu0 0.0
        %4291 = vmatpush.msra.mxu0 %v4234
        %4292 = vmatmul.f32.gmra.mxu0 %v4254
        %v4293 = vpop.f32.mrf.mxu0
        %v4294 = vadd.f32 0.0, %v4293
        %4295 = vdwg.mxu0
        %4296 = vmatpush.msra.mxu0 0.0
        %4297 = vmatpush.msra.mxu0 0.0
        %4298 = vmatpush.msra.mxu0 0.0
        %4299 = vmatpush.msra.mxu0 0.0
        %4300 = vmatpush.msra.mxu0 0.0
        %4301 = vmatpush.msra.mxu0 0.0
        %4302 = vmatpush.msra.mxu0 0.0
        %4303 = vmatpush.msra.mxu0 0.0
        %4304 = vmatpush.msra.mxu0 0.0
        %4305 = vmatpush.msra.mxu0 0.0
        %4306 = vmatpush.msra.mxu0 0.0
        %4307 = vmatpush.msra.mxu0 0.0
        %4308 = vmatpush.msra.mxu0 0.0
        %4309 = vmatpush.msra.mxu0 0.0
        %4310 = vmatpush.msra.mxu0 0.0
        %4311 = vmatpush.msra.mxu0 %v4235
        %4312 = vmatmul.f32.gmra.mxu0 %v4254
        %v4313 = vpop.f32.mrf.mxu0
        %v4314 = vadd.f32 0.0, %v4313
        %4315 = vdwg.mxu0
        %4316 = vmatpush.msra.mxu0 0.0
        %4317 = vmatpush.msra.mxu0 0.0
        %4318 = vmatpush.msra.mxu0 0.0
        %4319 = vmatpush.msra.mxu0 0.0
        %4320 = vmatpush.msra.mxu0 0.0
        %4321 = vmatpush.msra.mxu0 0.0
        %4322 = vmatpush.msra.mxu0 0.0
        %4323 = vmatpush.msra.mxu0 0.0
        %4324 = vmatpush.msra.mxu0 0.0
        %4325 = vmatpush.msra.mxu0 0.0
        %4326 = vmatpush.msra.mxu0 0.0
        %4327 = vmatpush.msra.mxu0 0.0
        %4328 = vmatpush.msra.mxu0 0.0
        %4329 = vmatpush.msra.mxu0 0.0
        %4330 = vmatpush.msra.mxu0 0.0
        %4331 = vmatpush.msra.mxu0 %v4236
        %4332 = vmatmul.f32.gmra.mxu0 %v4254
        %v4333 = vpop.f32.mrf.mxu0
        %v4334 = vadd.f32 0.0, %v4333
        %4335 = vdwg.mxu0
        %4336 = vmatpush.msra.mxu0 0.0
        %4337 = vmatpush.msra.mxu0 0.0
        %4338 = vmatpush.msra.mxu0 0.0
        %4339 = vmatpush.msra.mxu0 0.0
        %4340 = vmatpush.msra.mxu0 0.0
        %4341 = vmatpush.msra.mxu0 0.0
        %4342 = vmatpush.msra.mxu0 0.0
        %4343 = vmatpush.msra.mxu0 0.0
        %4344 = vmatpush.msra.mxu0 0.0
        %4345 = vmatpush.msra.mxu0 0.0
        %4346 = vmatpush.msra.mxu0 0.0
        %4347 = vmatpush.msra.mxu0 0.0
        %4348 = vmatpush.msra.mxu0 0.0
        %4349 = vmatpush.msra.mxu0 0.0
        %4350 = vmatpush.msra.mxu0 0.0
        %4351 = vmatpush.msra.mxu0 %v4237
        %4352 = vmatmul.f32.gmra.mxu0 %v4254
        %v4353 = vpop.f32.mrf.mxu0
        %v4354 = vadd.f32 0.0, %v4353
        %4355 = vdwg.mxu0
        %4356 = vmatpush.msra.mxu0 0.0
        %4357 = vmatpush.msra.mxu0 0.0
        %4358 = vmatpush.msra.mxu0 0.0
        %4359 = vmatpush.msra.mxu0 0.0
        %4360 = vmatpush.msra.mxu0 0.0
        %4361 = vmatpush.msra.mxu0 0.0
        %4362 = vmatpush.msra.mxu0 0.0
        %4363 = vmatpush.msra.mxu0 0.0
        %4364 = vmatpush.msra.mxu0 0.0
        %4365 = vmatpush.msra.mxu0 0.0
        %4366 = vmatpush.msra.mxu0 0.0
        %4367 = vmatpush.msra.mxu0 0.0
        %4368 = vmatpush.msra.mxu0 0.0
        %4369 = vmatpush.msra.mxu0 0.0
        %4370 = vmatpush.msra.mxu0 0.0
        %4371 = vmatpush.msra.mxu0 %v4238
        %4372 = vmatmul.f32.gmra.mxu0 %v4254
        %v4373 = vpop.f32.mrf.mxu0
        %v4374 = vadd.f32 0.0, %v4373
        %4375 = vdwg.mxu0
        %4376 = vmatpush.msra.mxu0 0.0
        %4377 = vmatpush.msra.mxu0 0.0
        %4378 = vmatpush.msra.mxu0 0.0
        %4379 = vmatpush.msra.mxu0 0.0
        %4380 = vmatpush.msra.mxu0 0.0
        %4381 = vmatpush.msra.mxu0 0.0
        %4382 = vmatpush.msra.mxu0 0.0
        %4383 = vmatpush.msra.mxu0 0.0
        %4384 = vmatpush.msra.mxu0 0.0
        %4385 = vmatpush.msra.mxu0 0.0
        %4386 = vmatpush.msra.mxu0 0.0
        %4387 = vmatpush.msra.mxu0 0.0
        %4388 = vmatpush.msra.mxu0 0.0
        %4389 = vmatpush.msra.mxu0 0.0
        %4390 = vmatpush.msra.mxu0 0.0
        %4391 = vmatpush.msra.mxu0 %v4239
        %4392 = vmatmul.f32.gmra.mxu0 %v4254
        %v4393 = vpop.f32.mrf.mxu0
        %v4394 = vadd.f32 0.0, %v4393
        %4395 = vdwg.mxu0
        %4396 = vmatpush.msra.mxu0 0.0
        %4397 = vmatpush.msra.mxu0 0.0
        %4398 = vmatpush.msra.mxu0 0.0
        %4399 = vmatpush.msra.mxu0 0.0
        %4400 = vmatpush.msra.mxu0 0.0
        %4401 = vmatpush.msra.mxu0 0.0
        %4402 = vmatpush.msra.mxu0 0.0
        %4403 = vmatpush.msra.mxu0 0.0
        %4404 = vmatpush.msra.mxu0 0.0
        %4405 = vmatpush.msra.mxu0 0.0
        %4406 = vmatpush.msra.mxu0 0.0
        %4407 = vmatpush.msra.mxu0 0.0
        %4408 = vmatpush.msra.mxu0 0.0
        %4409 = vmatpush.msra.mxu0 0.0
        %4410 = vmatpush.msra.mxu0 0.0
        %4411 = vmatpush.msra.mxu0 %v4240
        %4412 = vmatmul.f32.gmra.mxu0 %v4254
        %v4413 = vpop.f32.mrf.mxu0
        %v4414 = vadd.f32 0.0, %v4413
        %4415 = vdwg.mxu0
        %4416 = vmatpush.msra.mxu0 0.0
        %4417 = vmatpush.msra.mxu0 0.0
        %4418 = vmatpush.msra.mxu0 0.0
        %4419 = vmatpush.msra.mxu0 0.0
        %4420 = vmatpush.msra.mxu0 0.0
        %4421 = vmatpush.msra.mxu0 0.0
        %4422 = vmatpush.msra.mxu0 0.0
        %4423 = vmatpush.msra.mxu0 0.0
        %4424 = vmatpush.msra.mxu0 0.0
        %4425 = vmatpush.msra.mxu0 0.0
        %4426 = vmatpush.msra.mxu0 0.0
        %4427 = vmatpush.msra.mxu0 0.0
        %4428 = vmatpush.msra.mxu0 0.0
        %4429 = vmatpush.msra.mxu0 0.0
        %4430 = vmatpush.msra.mxu0 0.0
        %4431 = vmatpush.msra.mxu0 %v4241
        %4432 = vmatmul.f32.gmra.mxu0 %v4254
        %v4433 = vpop.f32.mrf.mxu0
        %v4434 = vadd.f32 0.0, %v4433
        %4435 = vdwg.mxu0
        %4436 = vmatpush.msra.mxu0 0.0
        %4437 = vmatpush.msra.mxu0 0.0
        %4438 = vmatpush.msra.mxu0 0.0
        %4439 = vmatpush.msra.mxu0 0.0
        %4440 = vmatpush.msra.mxu0 0.0
        %4441 = vmatpush.msra.mxu0 0.0
        %4442 = vmatpush.msra.mxu0 0.0
        %4443 = vmatpush.msra.mxu0 0.0
        %4444 = vmatpush.msra.mxu0 0.0
        %4445 = vmatpush.msra.mxu0 0.0
        %4446 = vmatpush.msra.mxu0 0.0
        %4447 = vmatpush.msra.mxu0 0.0
        %4448 = vmatpush.msra.mxu0 0.0
        %4449 = vmatpush.msra.mxu0 0.0
        %4450 = vmatpush.msra.mxu0 0.0
        %4451 = vmatpush.msra.mxu0 %v4242
        %4452 = vmatmul.f32.gmra.mxu0 %v4254
        %v4453 = vpop.f32.mrf.mxu0
        %v4454 = vadd.f32 0.0, %v4453
        %4455 = vdwg.mxu0
        %v4456 = vadd.f32 %v4199, %v4274
        %v4457 = vadd.f32 %v4200, %v4294
        %v4458 = vadd.f32 %v4201, %v4314
        %v4459 = vadd.f32 %v4202, %v4334
        %v4460 = vadd.f32 %v4203, %v4354
        %v4461 = vadd.f32 %v4204, %v4374
        %v4462 = vadd.f32 %v4205, %v4394
        %v4463 = vadd.f32 %v4206, %v4414
        %v4464 = vadd.f32 %v4207, %v4434
        %v4465 = vadd.f32 %v4208, %v4454
        %s4466 = scalar_lea.vmem %s4, 16
        %v4467 = vld [vmem:[%s4466] sm:$0xf]
        %v4469 = vsel %vm1132, %v4467, 0
        %4471 = vmatpush.msra.mxu0 0.0
        %4472 = vmatpush.msra.mxu0 0.0
        %4473 = vmatpush.msra.mxu0 0.0
        %4474 = vmatpush.msra.mxu0 0.0
        %4475 = vmatpush.msra.mxu0 0.0
        %4476 = vmatpush.msra.mxu0 0.0
        %4477 = vmatpush.msra.mxu0 0.0
        %4478 = vmatpush.msra.mxu0 0.0
        %4479 = vmatpush.msra.mxu0 0.0
        %4480 = vmatpush.msra.mxu0 0.0
        %4481 = vmatpush.msra.mxu0 0.0
        %4482 = vmatpush.msra.mxu0 0.0
        %4483 = vmatpush.msra.mxu0 0.0
        %4484 = vmatpush.msra.mxu0 0.0
        %4485 = vmatpush.msra.mxu0 0.0
        %4486 = vmatpush.msra.mxu0 %v3439
        %4487 = vmatmul.f32.gmra.mxu0 %v4469
        %v4488 = vpop.f32.mrf.mxu0
        %v4489 = vadd.f32 0.0, %v4488
        %4490 = vdwg.mxu0
        %4491 = vmatpush.msra.mxu0 0.0
        %4492 = vmatpush.msra.mxu0 0.0
        %4493 = vmatpush.msra.mxu0 0.0
        %4494 = vmatpush.msra.mxu0 0.0
        %4495 = vmatpush.msra.mxu0 0.0
        %4496 = vmatpush.msra.mxu0 0.0
        %4497 = vmatpush.msra.mxu0 0.0
        %4498 = vmatpush.msra.mxu0 0.0
        %4499 = vmatpush.msra.mxu0 0.0
        %4500 = vmatpush.msra.mxu0 0.0
        %4501 = vmatpush.msra.mxu0 0.0
        %4502 = vmatpush.msra.mxu0 0.0
        %4503 = vmatpush.msra.mxu0 0.0
        %4504 = vmatpush.msra.mxu0 0.0
        %4505 = vmatpush.msra.mxu0 0.0
        %4506 = vmatpush.msra.mxu0 %v3440
        %4507 = vmatmul.f32.gmra.mxu0 %v4469
        %v4508 = vpop.f32.mrf.mxu0
        %v4509 = vadd.f32 0.0, %v4508
        %4510 = vdwg.mxu0
        %4511 = vmatpush.msra.mxu0 0.0
        %4512 = vmatpush.msra.mxu0 0.0
        %4513 = vmatpush.msra.mxu0 0.0
        %4514 = vmatpush.msra.mxu0 0.0
        %4515 = vmatpush.msra.mxu0 0.0
        %4516 = vmatpush.msra.mxu0 0.0
        %4517 = vmatpush.msra.mxu0 0.0
        %4518 = vmatpush.msra.mxu0 0.0
        %4519 = vmatpush.msra.mxu0 0.0
        %4520 = vmatpush.msra.mxu0 0.0
        %4521 = vmatpush.msra.mxu0 0.0
        %4522 = vmatpush.msra.mxu0 0.0
        %4523 = vmatpush.msra.mxu0 0.0
        %4524 = vmatpush.msra.mxu0 0.0
        %4525 = vmatpush.msra.mxu0 0.0
        %4526 = vmatpush.msra.mxu0 %v3441
        %4527 = vmatmul.f32.gmra.mxu0 %v4469
        %v4528 = vpop.f32.mrf.mxu0
        %v4529 = vadd.f32 0.0, %v4528
        %4530 = vdwg.mxu0
        %4531 = vmatpush.msra.mxu0 0.0
        %4532 = vmatpush.msra.mxu0 0.0
        %4533 = vmatpush.msra.mxu0 0.0
        %4534 = vmatpush.msra.mxu0 0.0
        %4535 = vmatpush.msra.mxu0 0.0
        %4536 = vmatpush.msra.mxu0 0.0
        %4537 = vmatpush.msra.mxu0 0.0
        %4538 = vmatpush.msra.mxu0 0.0
        %4539 = vmatpush.msra.mxu0 0.0
        %4540 = vmatpush.msra.mxu0 0.0
        %4541 = vmatpush.msra.mxu0 0.0
        %4542 = vmatpush.msra.mxu0 0.0
        %4543 = vmatpush.msra.mxu0 0.0
        %4544 = vmatpush.msra.mxu0 0.0
        %4545 = vmatpush.msra.mxu0 0.0
        %4546 = vmatpush.msra.mxu0 %v3442
        %4547 = vmatmul.f32.gmra.mxu0 %v4469
        %v4548 = vpop.f32.mrf.mxu0
        %v4549 = vadd.f32 0.0, %v4548
        %4550 = vdwg.mxu0
        %4551 = vmatpush.msra.mxu0 0.0
        %4552 = vmatpush.msra.mxu0 0.0
        %4553 = vmatpush.msra.mxu0 0.0
        %4554 = vmatpush.msra.mxu0 0.0
        %4555 = vmatpush.msra.mxu0 0.0
        %4556 = vmatpush.msra.mxu0 0.0
        %4557 = vmatpush.msra.mxu0 0.0
        %4558 = vmatpush.msra.mxu0 0.0
        %4559 = vmatpush.msra.mxu0 0.0
        %4560 = vmatpush.msra.mxu0 0.0
        %4561 = vmatpush.msra.mxu0 0.0
        %4562 = vmatpush.msra.mxu0 0.0
        %4563 = vmatpush.msra.mxu0 0.0
        %4564 = vmatpush.msra.mxu0 0.0
        %4565 = vmatpush.msra.mxu0 0.0
        %4566 = vmatpush.msra.mxu0 %v3443
        %4567 = vmatmul.f32.gmra.mxu0 %v4469
        %v4568 = vpop.f32.mrf.mxu0
        %v4569 = vadd.f32 0.0, %v4568
        %4570 = vdwg.mxu0
        %4571 = vmatpush.msra.mxu0 0.0
        %4572 = vmatpush.msra.mxu0 0.0
        %4573 = vmatpush.msra.mxu0 0.0
        %4574 = vmatpush.msra.mxu0 0.0
        %4575 = vmatpush.msra.mxu0 0.0
        %4576 = vmatpush.msra.mxu0 0.0
        %4577 = vmatpush.msra.mxu0 0.0
        %4578 = vmatpush.msra.mxu0 0.0
        %4579 = vmatpush.msra.mxu0 0.0
        %4580 = vmatpush.msra.mxu0 0.0
        %4581 = vmatpush.msra.mxu0 0.0
        %4582 = vmatpush.msra.mxu0 0.0
        %4583 = vmatpush.msra.mxu0 0.0
        %4584 = vmatpush.msra.mxu0 0.0
        %4585 = vmatpush.msra.mxu0 0.0
        %4586 = vmatpush.msra.mxu0 %v3444
        %4587 = vmatmul.f32.gmra.mxu0 %v4469
        %v4588 = vpop.f32.mrf.mxu0
        %v4589 = vadd.f32 0.0, %v4588
        %4590 = vdwg.mxu0
        %4591 = vmatpush.msra.mxu0 0.0
        %4592 = vmatpush.msra.mxu0 0.0
        %4593 = vmatpush.msra.mxu0 0.0
        %4594 = vmatpush.msra.mxu0 0.0
        %4595 = vmatpush.msra.mxu0 0.0
        %4596 = vmatpush.msra.mxu0 0.0
        %4597 = vmatpush.msra.mxu0 0.0
        %4598 = vmatpush.msra.mxu0 0.0
        %4599 = vmatpush.msra.mxu0 0.0
        %4600 = vmatpush.msra.mxu0 0.0
        %4601 = vmatpush.msra.mxu0 0.0
        %4602 = vmatpush.msra.mxu0 0.0
        %4603 = vmatpush.msra.mxu0 0.0
        %4604 = vmatpush.msra.mxu0 0.0
        %4605 = vmatpush.msra.mxu0 0.0
        %4606 = vmatpush.msra.mxu0 %v3445
        %4607 = vmatmul.f32.gmra.mxu0 %v4469
        %v4608 = vpop.f32.mrf.mxu0
        %v4609 = vadd.f32 0.0, %v4608
        %4610 = vdwg.mxu0
        %4611 = vmatpush.msra.mxu0 0.0
        %4612 = vmatpush.msra.mxu0 0.0
        %4613 = vmatpush.msra.mxu0 0.0
        %4614 = vmatpush.msra.mxu0 0.0
        %4615 = vmatpush.msra.mxu0 0.0
        %4616 = vmatpush.msra.mxu0 0.0
        %4617 = vmatpush.msra.mxu0 0.0
        %4618 = vmatpush.msra.mxu0 0.0
        %4619 = vmatpush.msra.mxu0 0.0
        %4620 = vmatpush.msra.mxu0 0.0
        %4621 = vmatpush.msra.mxu0 0.0
        %4622 = vmatpush.msra.mxu0 0.0
        %4623 = vmatpush.msra.mxu0 0.0
        %4624 = vmatpush.msra.mxu0 0.0
        %4625 = vmatpush.msra.mxu0 0.0
        %4626 = vmatpush.msra.mxu0 %v3446
        %4627 = vmatmul.f32.gmra.mxu0 %v4469
        %v4628 = vpop.f32.mrf.mxu0
        %v4629 = vadd.f32 0.0, %v4628
        %4630 = vdwg.mxu0
        %4631 = vmatpush.msra.mxu0 0.0
        %4632 = vmatpush.msra.mxu0 0.0
        %4633 = vmatpush.msra.mxu0 0.0
        %4634 = vmatpush.msra.mxu0 0.0
        %4635 = vmatpush.msra.mxu0 0.0
        %4636 = vmatpush.msra.mxu0 0.0
        %4637 = vmatpush.msra.mxu0 0.0
        %4638 = vmatpush.msra.mxu0 0.0
        %4639 = vmatpush.msra.mxu0 0.0
        %4640 = vmatpush.msra.mxu0 0.0
        %4641 = vmatpush.msra.mxu0 0.0
        %4642 = vmatpush.msra.mxu0 0.0
        %4643 = vmatpush.msra.mxu0 0.0
        %4644 = vmatpush.msra.mxu0 0.0
        %4645 = vmatpush.msra.mxu0 0.0
        %4646 = vmatpush.msra.mxu0 %v3447
        %4647 = vmatmul.f32.gmra.mxu0 %v4469
        %v4648 = vpop.f32.mrf.mxu0
        %v4649 = vadd.f32 0.0, %v4648
        %4650 = vdwg.mxu0
        %4651 = vmatpush.msra.mxu0 0.0
        %4652 = vmatpush.msra.mxu0 0.0
        %4653 = vmatpush.msra.mxu0 0.0
        %4654 = vmatpush.msra.mxu0 0.0
        %4655 = vmatpush.msra.mxu0 0.0
        %4656 = vmatpush.msra.mxu0 0.0
        %4657 = vmatpush.msra.mxu0 0.0
        %4658 = vmatpush.msra.mxu0 0.0
        %4659 = vmatpush.msra.mxu0 0.0
        %4660 = vmatpush.msra.mxu0 0.0
        %4661 = vmatpush.msra.mxu0 0.0
        %4662 = vmatpush.msra.mxu0 0.0
        %4663 = vmatpush.msra.mxu0 0.0
        %4664 = vmatpush.msra.mxu0 0.0
        %4665 = vmatpush.msra.mxu0 0.0
        %4666 = vmatpush.msra.mxu0 %v3448
        %4667 = vmatmul.f32.gmra.mxu0 %v4469
        %v4668 = vpop.f32.mrf.mxu0
        %v4669 = vadd.f32 0.0, %v4668
        %4670 = vdwg.mxu0
        %v4671 = vadd.f32 %v4456, %v4489
        %v4672 = vadd.f32 %v4457, %v4509
        %v4673 = vadd.f32 %v4458, %v4529
        %v4674 = vadd.f32 %v4459, %v4549
        %v4675 = vadd.f32 %v4460, %v4569
        %v4676 = vadd.f32 %v4461, %v4589
        %v4677 = vadd.f32 %v4462, %v4609
        %v4678 = vadd.f32 %v4463, %v4629
        %v4679 = vadd.f32 %v4464, %v4649
        %v4680 = vadd.f32 %v4465, %v4669
        %s4681 = scalar_lea.vmem %s4, 20
        %v4682 = vld [vmem:[%s4681] sm:$0xf]
        %v4683 = vld [vmem:[#allocation3 + $0x8] sm:$0xff]
        %v4684 = vld [vmem:[#allocation3 + $0x10] sm:$0xff]
        %v4685 = vld [vmem:[#allocation3 + $0x18] sm:$0xff]
        %v4686 = vld [vmem:[#allocation3 + $0x20] sm:$0xff]
        %v4687 = vld [vmem:[#allocation3 + $0x28] sm:$0xff]
        %v4688 = vld [vmem:[#allocation3 + $0x30] sm:$0xff]
        %v4689 = vld [vmem:[#allocation3 + $0x38] sm:$0xff]
        %v4690 = vld [vmem:[#allocation3 + $0x40] sm:$0xff]
        %v4691 = vld [vmem:[#allocation3 + $0x48] sm:$0xff]
        %v4692 = vld [vmem:[#allocation3 + $0x50] sm:$0xff]
        %v4693 = vld [vmem:[#allocation3 + $0x58] sm:$0xff]
        %4705 = vrot.lane.b32.xlu0 %v4683, 127
        %v4706 = vpop.permute.xlu0 %4705
        %4707 = vrot.lane.b32.xlu0 %v4684, 127
        %v4708 = vpop.permute.xlu0 %4707
        %4709 = vrot.lane.b32.xlu0 %v4685, 127
        %v4710 = vpop.permute.xlu0 %4709
        %4711 = vrot.lane.b32.xlu0 %v4686, 127
        %v4712 = vpop.permute.xlu0 %4711
        %4713 = vrot.lane.b32.xlu0 %v4687, 127
        %v4714 = vpop.permute.xlu0 %4713
        %4715 = vrot.lane.b32.xlu0 %v4688, 127
        %v4716 = vpop.permute.xlu0 %4715
        %4717 = vrot.lane.b32.xlu0 %v4689, 127
        %v4718 = vpop.permute.xlu0 %4717
        %4719 = vrot.lane.b32.xlu0 %v4690, 127
        %v4720 = vpop.permute.xlu0 %4719
        %4721 = vrot.lane.b32.xlu0 %v4691, 127
        %v4722 = vpop.permute.xlu0 %4721
        %4723 = vrot.lane.b32.xlu0 %v4692, 127
        %v4724 = vpop.permute.xlu0 %4723
        %4725 = vrot.lane.b32.xlu0 %v4693, 127
        %v4726 = vpop.permute.xlu0 %4725
        %v4727 = vsel %vm2359, %v4706, %v4708
        %v4728 = vsel %vm2359, %v4708, %v4710
        %v4729 = vsel %vm2359, %v4710, %v4712
        %v4730 = vsel %vm2359, %v4712, %v4714
        %v4731 = vsel %vm2359, %v4714, %v4716
        %v4732 = vsel %vm2359, %v4716, %v4718
        %v4733 = vsel %vm2359, %v4718, %v4720
        %v4734 = vsel %vm2359, %v4720, %v4722
        %v4735 = vsel %vm2359, %v4722, %v4724
        %v4736 = vsel %vm2359, %v4724, %v4726
        %v4748 = vsel %vm1132, %v4682, 0
        %4750 = vmatpush.msra.mxu0 0.0
        %4751 = vmatpush.msra.mxu0 0.0
        %4752 = vmatpush.msra.mxu0 0.0
        %4753 = vmatpush.msra.mxu0 0.0
        %4754 = vmatpush.msra.mxu0 0.0
        %4755 = vmatpush.msra.mxu0 0.0
        %4756 = vmatpush.msra.mxu0 0.0
        %4757 = vmatpush.msra.mxu0 0.0
        %4758 = vmatpush.msra.mxu0 0.0
        %4759 = vmatpush.msra.mxu0 0.0
        %4760 = vmatpush.msra.mxu0 0.0
        %4761 = vmatpush.msra.mxu0 0.0
        %4762 = vmatpush.msra.mxu0 0.0
        %4763 = vmatpush.msra.mxu0 0.0
        %4764 = vmatpush.msra.mxu0 0.0
        %4765 = vmatpush.msra.mxu0 %v4727
        %4766 = vmatmul.f32.gmra.mxu0 %v4748
        %v4767 = vpop.f32.mrf.mxu0
        %v4768 = vadd.f32 0.0, %v4767
        %4769 = vdwg.mxu0
        %4770 = vmatpush.msra.mxu0 0.0
        %4771 = vmatpush.msra.mxu0 0.0
        %4772 = vmatpush.msra.mxu0 0.0
        %4773 = vmatpush.msra.mxu0 0.0
        %4774 = vmatpush.msra.mxu0 0.0
        %4775 = vmatpush.msra.mxu0 0.0
        %4776 = vmatpush.msra.mxu0 0.0
        %4777 = vmatpush.msra.mxu0 0.0
        %4778 = vmatpush.msra.mxu0 0.0
        %4779 = vmatpush.msra.mxu0 0.0
        %4780 = vmatpush.msra.mxu0 0.0
        %4781 = vmatpush.msra.mxu0 0.0
        %4782 = vmatpush.msra.mxu0 0.0
        %4783 = vmatpush.msra.mxu0 0.0
        %4784 = vmatpush.msra.mxu0 0.0
        %4785 = vmatpush.msra.mxu0 %v4728
        %4786 = vmatmul.f32.gmra.mxu0 %v4748
        %v4787 = vpop.f32.mrf.mxu0
        %v4788 = vadd.f32 0.0, %v4787
        %4789 = vdwg.mxu0
        %4790 = vmatpush.msra.mxu0 0.0
        %4791 = vmatpush.msra.mxu0 0.0
        %4792 = vmatpush.msra.mxu0 0.0
        %4793 = vmatpush.msra.mxu0 0.0
        %4794 = vmatpush.msra.mxu0 0.0
        %4795 = vmatpush.msra.mxu0 0.0
        %4796 = vmatpush.msra.mxu0 0.0
        %4797 = vmatpush.msra.mxu0 0.0
        %4798 = vmatpush.msra.mxu0 0.0
        %4799 = vmatpush.msra.mxu0 0.0
        %4800 = vmatpush.msra.mxu0 0.0
        %4801 = vmatpush.msra.mxu0 0.0
        %4802 = vmatpush.msra.mxu0 0.0
        %4803 = vmatpush.msra.mxu0 0.0
        %4804 = vmatpush.msra.mxu0 0.0
        %4805 = vmatpush.msra.mxu0 %v4729
        %4806 = vmatmul.f32.gmra.mxu0 %v4748
        %v4807 = vpop.f32.mrf.mxu0
        %v4808 = vadd.f32 0.0, %v4807
        %4809 = vdwg.mxu0
        %4810 = vmatpush.msra.mxu0 0.0
        %4811 = vmatpush.msra.mxu0 0.0
        %4812 = vmatpush.msra.mxu0 0.0
        %4813 = vmatpush.msra.mxu0 0.0
        %4814 = vmatpush.msra.mxu0 0.0
        %4815 = vmatpush.msra.mxu0 0.0
        %4816 = vmatpush.msra.mxu0 0.0
        %4817 = vmatpush.msra.mxu0 0.0
        %4818 = vmatpush.msra.mxu0 0.0
        %4819 = vmatpush.msra.mxu0 0.0
        %4820 = vmatpush.msra.mxu0 0.0
        %4821 = vmatpush.msra.mxu0 0.0
        %4822 = vmatpush.msra.mxu0 0.0
        %4823 = vmatpush.msra.mxu0 0.0
        %4824 = vmatpush.msra.mxu0 0.0
        %4825 = vmatpush.msra.mxu0 %v4730
        %4826 = vmatmul.f32.gmra.mxu0 %v4748
        %v4827 = vpop.f32.mrf.mxu0
        %v4828 = vadd.f32 0.0, %v4827
        %4829 = vdwg.mxu0
        %4830 = vmatpush.msra.mxu0 0.0
        %4831 = vmatpush.msra.mxu0 0.0
        %4832 = vmatpush.msra.mxu0 0.0
        %4833 = vmatpush.msra.mxu0 0.0
        %4834 = vmatpush.msra.mxu0 0.0
        %4835 = vmatpush.msra.mxu0 0.0
        %4836 = vmatpush.msra.mxu0 0.0
        %4837 = vmatpush.msra.mxu0 0.0
        %4838 = vmatpush.msra.mxu0 0.0
        %4839 = vmatpush.msra.mxu0 0.0
        %4840 = vmatpush.msra.mxu0 0.0
        %4841 = vmatpush.msra.mxu0 0.0
        %4842 = vmatpush.msra.mxu0 0.0
        %4843 = vmatpush.msra.mxu0 0.0
        %4844 = vmatpush.msra.mxu0 0.0
        %4845 = vmatpush.msra.mxu0 %v4731
        %4846 = vmatmul.f32.gmra.mxu0 %v4748
        %v4847 = vpop.f32.mrf.mxu0
        %v4848 = vadd.f32 0.0, %v4847
        %4849 = vdwg.mxu0
        %4850 = vmatpush.msra.mxu0 0.0
        %4851 = vmatpush.msra.mxu0 0.0
        %4852 = vmatpush.msra.mxu0 0.0
        %4853 = vmatpush.msra.mxu0 0.0
        %4854 = vmatpush.msra.mxu0 0.0
        %4855 = vmatpush.msra.mxu0 0.0
        %4856 = vmatpush.msra.mxu0 0.0
        %4857 = vmatpush.msra.mxu0 0.0
        %4858 = vmatpush.msra.mxu0 0.0
        %4859 = vmatpush.msra.mxu0 0.0
        %4860 = vmatpush.msra.mxu0 0.0
        %4861 = vmatpush.msra.mxu0 0.0
        %4862 = vmatpush.msra.mxu0 0.0
        %4863 = vmatpush.msra.mxu0 0.0
        %4864 = vmatpush.msra.mxu0 0.0
        %4865 = vmatpush.msra.mxu0 %v4732
        %4866 = vmatmul.f32.gmra.mxu0 %v4748
        %v4867 = vpop.f32.mrf.mxu0
        %v4868 = vadd.f32 0.0, %v4867
        %4869 = vdwg.mxu0
        %4870 = vmatpush.msra.mxu0 0.0
        %4871 = vmatpush.msra.mxu0 0.0
        %4872 = vmatpush.msra.mxu0 0.0
        %4873 = vmatpush.msra.mxu0 0.0
        %4874 = vmatpush.msra.mxu0 0.0
        %4875 = vmatpush.msra.mxu0 0.0
        %4876 = vmatpush.msra.mxu0 0.0
        %4877 = vmatpush.msra.mxu0 0.0
        %4878 = vmatpush.msra.mxu0 0.0
        %4879 = vmatpush.msra.mxu0 0.0
        %4880 = vmatpush.msra.mxu0 0.0
        %4881 = vmatpush.msra.mxu0 0.0
        %4882 = vmatpush.msra.mxu0 0.0
        %4883 = vmatpush.msra.mxu0 0.0
        %4884 = vmatpush.msra.mxu0 0.0
        %4885 = vmatpush.msra.mxu0 %v4733
        %4886 = vmatmul.f32.gmra.mxu0 %v4748
        %v4887 = vpop.f32.mrf.mxu0
        %v4888 = vadd.f32 0.0, %v4887
        %4889 = vdwg.mxu0
        %4890 = vmatpush.msra.mxu0 0.0
        %4891 = vmatpush.msra.mxu0 0.0
        %4892 = vmatpush.msra.mxu0 0.0
        %4893 = vmatpush.msra.mxu0 0.0
        %4894 = vmatpush.msra.mxu0 0.0
        %4895 = vmatpush.msra.mxu0 0.0
        %4896 = vmatpush.msra.mxu0 0.0
        %4897 = vmatpush.msra.mxu0 0.0
        %4898 = vmatpush.msra.mxu0 0.0
        %4899 = vmatpush.msra.mxu0 0.0
        %4900 = vmatpush.msra.mxu0 0.0
        %4901 = vmatpush.msra.mxu0 0.0
        %4902 = vmatpush.msra.mxu0 0.0
        %4903 = vmatpush.msra.mxu0 0.0
        %4904 = vmatpush.msra.mxu0 0.0
        %4905 = vmatpush.msra.mxu0 %v4734
        %4906 = vmatmul.f32.gmra.mxu0 %v4748
        %v4907 = vpop.f32.mrf.mxu0
        %v4908 = vadd.f32 0.0, %v4907
        %4909 = vdwg.mxu0
        %4910 = vmatpush.msra.mxu0 0.0
        %4911 = vmatpush.msra.mxu0 0.0
        %4912 = vmatpush.msra.mxu0 0.0
        %4913 = vmatpush.msra.mxu0 0.0
        %4914 = vmatpush.msra.mxu0 0.0
        %4915 = vmatpush.msra.mxu0 0.0
        %4916 = vmatpush.msra.mxu0 0.0
        %4917 = vmatpush.msra.mxu0 0.0
        %4918 = vmatpush.msra.mxu0 0.0
        %4919 = vmatpush.msra.mxu0 0.0
        %4920 = vmatpush.msra.mxu0 0.0
        %4921 = vmatpush.msra.mxu0 0.0
        %4922 = vmatpush.msra.mxu0 0.0
        %4923 = vmatpush.msra.mxu0 0.0
        %4924 = vmatpush.msra.mxu0 0.0
        %4925 = vmatpush.msra.mxu0 %v4735
        %4926 = vmatmul.f32.gmra.mxu0 %v4748
        %v4927 = vpop.f32.mrf.mxu0
        %v4928 = vadd.f32 0.0, %v4927
        %4929 = vdwg.mxu0
        %4930 = vmatpush.msra.mxu0 0.0
        %4931 = vmatpush.msra.mxu0 0.0
        %4932 = vmatpush.msra.mxu0 0.0
        %4933 = vmatpush.msra.mxu0 0.0
        %4934 = vmatpush.msra.mxu0 0.0
        %4935 = vmatpush.msra.mxu0 0.0
        %4936 = vmatpush.msra.mxu0 0.0
        %4937 = vmatpush.msra.mxu0 0.0
        %4938 = vmatpush.msra.mxu0 0.0
        %4939 = vmatpush.msra.mxu0 0.0
        %4940 = vmatpush.msra.mxu0 0.0
        %4941 = vmatpush.msra.mxu0 0.0
        %4942 = vmatpush.msra.mxu0 0.0
        %4943 = vmatpush.msra.mxu0 0.0
        %4944 = vmatpush.msra.mxu0 0.0
        %4945 = vmatpush.msra.mxu0 %v4736
        %4946 = vmatmul.f32.gmra.mxu0 %v4748
        %v4947 = vpop.f32.mrf.mxu0
        %v4948 = vadd.f32 0.0, %v4947
        %4949 = vdwg.mxu0
        %v4950 = vadd.f32 %v4671, %v4768
        %v4951 = vadd.f32 %v4672, %v4788
        %v4952 = vadd.f32 %v4673, %v4808
        %v4953 = vadd.f32 %v4674, %v4828
        %v4954 = vadd.f32 %v4675, %v4848
        %v4955 = vadd.f32 %v4676, %v4868
        %v4956 = vadd.f32 %v4677, %v4888
        %v4957 = vadd.f32 %v4678, %v4908
        %v4958 = vadd.f32 %v4679, %v4928
        %v4959 = vadd.f32 %v4680, %v4948
        %s4960 = scalar_lea.vmem %s4, 24
        %v4961 = vld [vmem:[%s4960] sm:$0xf]
        %4962 = vrot.lane.b32.xlu0 %v4683, 95
        %v4963 = vpop.permute.xlu0 %4962
        %4964 = vrot.lane.b32.xlu0 %v4684, 95
        %v4965 = vpop.permute.xlu0 %4964
        %4966 = vrot.lane.b32.xlu0 %v4685, 95
        %v4967 = vpop.permute.xlu0 %4966
        %4968 = vrot.lane.b32.xlu0 %v4686, 95
        %v4969 = vpop.permute.xlu0 %4968
        %4970 = vrot.lane.b32.xlu0 %v4687, 95
        %v4971 = vpop.permute.xlu0 %4970
        %4972 = vrot.lane.b32.xlu0 %v4688, 95
        %v4973 = vpop.permute.xlu0 %4972
        %4974 = vrot.lane.b32.xlu0 %v4689, 95
        %v4975 = vpop.permute.xlu0 %4974
        %4976 = vrot.lane.b32.xlu0 %v4690, 95
        %v4977 = vpop.permute.xlu0 %4976
        %4978 = vrot.lane.b32.xlu0 %v4691, 95
        %v4979 = vpop.permute.xlu0 %4978
        %4980 = vrot.lane.b32.xlu0 %v4692, 95
        %v4981 = vpop.permute.xlu0 %4980
        %4982 = vrot.lane.b32.xlu0 %v4693, 95
        %v4983 = vpop.permute.xlu0 %4982
        %v4984 = vsel %vm2617, %v4963, %v4965
        %v4985 = vsel %vm2617, %v4965, %v4967
        %v4986 = vsel %vm2617, %v4967, %v4969
        %v4987 = vsel %vm2617, %v4969, %v4971
        %v4988 = vsel %vm2617, %v4971, %v4973
        %v4989 = vsel %vm2617, %v4973, %v4975
        %v4990 = vsel %vm2617, %v4975, %v4977
        %v4991 = vsel %vm2617, %v4977, %v4979
        %v4992 = vsel %vm2617, %v4979, %v4981
        %v4993 = vsel %vm2617, %v4981, %v4983
        %v5005 = vsel %vm1132, %v4961, 0
        %5007 = vmatpush.msra.mxu0 0.0
        %5008 = vmatpush.msra.mxu0 0.0
        %5009 = vmatpush.msra.mxu0 0.0
        %5010 = vmatpush.msra.mxu0 0.0
        %5011 = vmatpush.msra.mxu0 0.0
        %5012 = vmatpush.msra.mxu0 0.0
        %5013 = vmatpush.msra.mxu0 0.0
        %5014 = vmatpush.msra.mxu0 0.0
        %5015 = vmatpush.msra.mxu0 0.0
        %5016 = vmatpush.msra.mxu0 0.0
        %5017 = vmatpush.msra.mxu0 0.0
        %5018 = vmatpush.msra.mxu0 0.0
        %5019 = vmatpush.msra.mxu0 0.0
        %5020 = vmatpush.msra.mxu0 0.0
        %5021 = vmatpush.msra.mxu0 0.0
        %5022 = vmatpush.msra.mxu0 %v4984
        %5023 = vmatmul.f32.gmra.mxu0 %v5005
        %v5024 = vpop.f32.mrf.mxu0
        %v5025 = vadd.f32 0.0, %v5024
        %5026 = vdwg.mxu0
        %5027 = vmatpush.msra.mxu0 0.0
        %5028 = vmatpush.msra.mxu0 0.0
        %5029 = vmatpush.msra.mxu0 0.0
        %5030 = vmatpush.msra.mxu0 0.0
        %5031 = vmatpush.msra.mxu0 0.0
        %5032 = vmatpush.msra.mxu0 0.0
        %5033 = vmatpush.msra.mxu0 0.0
        %5034 = vmatpush.msra.mxu0 0.0
        %5035 = vmatpush.msra.mxu0 0.0
        %5036 = vmatpush.msra.mxu0 0.0
        %5037 = vmatpush.msra.mxu0 0.0
        %5038 = vmatpush.msra.mxu0 0.0
        %5039 = vmatpush.msra.mxu0 0.0
        %5040 = vmatpush.msra.mxu0 0.0
        %5041 = vmatpush.msra.mxu0 0.0
        %5042 = vmatpush.msra.mxu0 %v4985
        %5043 = vmatmul.f32.gmra.mxu0 %v5005
        %v5044 = vpop.f32.mrf.mxu0
        %v5045 = vadd.f32 0.0, %v5044
        %5046 = vdwg.mxu0
        %5047 = vmatpush.msra.mxu0 0.0
        %5048 = vmatpush.msra.mxu0 0.0
        %5049 = vmatpush.msra.mxu0 0.0
        %5050 = vmatpush.msra.mxu0 0.0
        %5051 = vmatpush.msra.mxu0 0.0
        %5052 = vmatpush.msra.mxu0 0.0
        %5053 = vmatpush.msra.mxu0 0.0
        %5054 = vmatpush.msra.mxu0 0.0
        %5055 = vmatpush.msra.mxu0 0.0
        %5056 = vmatpush.msra.mxu0 0.0
        %5057 = vmatpush.msra.mxu0 0.0
        %5058 = vmatpush.msra.mxu0 0.0
        %5059 = vmatpush.msra.mxu0 0.0
        %5060 = vmatpush.msra.mxu0 0.0
        %5061 = vmatpush.msra.mxu0 0.0
        %5062 = vmatpush.msra.mxu0 %v4986
        %5063 = vmatmul.f32.gmra.mxu0 %v5005
        %v5064 = vpop.f32.mrf.mxu0
        %v5065 = vadd.f32 0.0, %v5064
        %5066 = vdwg.mxu0
        %5067 = vmatpush.msra.mxu0 0.0
        %5068 = vmatpush.msra.mxu0 0.0
        %5069 = vmatpush.msra.mxu0 0.0
        %5070 = vmatpush.msra.mxu0 0.0
        %5071 = vmatpush.msra.mxu0 0.0
        %5072 = vmatpush.msra.mxu0 0.0
        %5073 = vmatpush.msra.mxu0 0.0
        %5074 = vmatpush.msra.mxu0 0.0
        %5075 = vmatpush.msra.mxu0 0.0
        %5076 = vmatpush.msra.mxu0 0.0
        %5077 = vmatpush.msra.mxu0 0.0
        %5078 = vmatpush.msra.mxu0 0.0
        %5079 = vmatpush.msra.mxu0 0.0
        %5080 = vmatpush.msra.mxu0 0.0
        %5081 = vmatpush.msra.mxu0 0.0
        %5082 = vmatpush.msra.mxu0 %v4987
        %5083 = vmatmul.f32.gmra.mxu0 %v5005
        %v5084 = vpop.f32.mrf.mxu0
        %v5085 = vadd.f32 0.0, %v5084
        %5086 = vdwg.mxu0
        %5087 = vmatpush.msra.mxu0 0.0
        %5088 = vmatpush.msra.mxu0 0.0
        %5089 = vmatpush.msra.mxu0 0.0
        %5090 = vmatpush.msra.mxu0 0.0
        %5091 = vmatpush.msra.mxu0 0.0
        %5092 = vmatpush.msra.mxu0 0.0
        %5093 = vmatpush.msra.mxu0 0.0
        %5094 = vmatpush.msra.mxu0 0.0
        %5095 = vmatpush.msra.mxu0 0.0
        %5096 = vmatpush.msra.mxu0 0.0
        %5097 = vmatpush.msra.mxu0 0.0
        %5098 = vmatpush.msra.mxu0 0.0
        %5099 = vmatpush.msra.mxu0 0.0
        %5100 = vmatpush.msra.mxu0 0.0
        %5101 = vmatpush.msra.mxu0 0.0
        %5102 = vmatpush.msra.mxu0 %v4988
        %5103 = vmatmul.f32.gmra.mxu0 %v5005
        %v5104 = vpop.f32.mrf.mxu0
        %v5105 = vadd.f32 0.0, %v5104
        %5106 = vdwg.mxu0
        %5107 = vmatpush.msra.mxu0 0.0
        %5108 = vmatpush.msra.mxu0 0.0
        %5109 = vmatpush.msra.mxu0 0.0
        %5110 = vmatpush.msra.mxu0 0.0
        %5111 = vmatpush.msra.mxu0 0.0
        %5112 = vmatpush.msra.mxu0 0.0
        %5113 = vmatpush.msra.mxu0 0.0
        %5114 = vmatpush.msra.mxu0 0.0
        %5115 = vmatpush.msra.mxu0 0.0
        %5116 = vmatpush.msra.mxu0 0.0
        %5117 = vmatpush.msra.mxu0 0.0
        %5118 = vmatpush.msra.mxu0 0.0
        %5119 = vmatpush.msra.mxu0 0.0
        %5120 = vmatpush.msra.mxu0 0.0
        %5121 = vmatpush.msra.mxu0 0.0
        %5122 = vmatpush.msra.mxu0 %v4989
        %5123 = vmatmul.f32.gmra.mxu0 %v5005
        %v5124 = vpop.f32.mrf.mxu0
        %v5125 = vadd.f32 0.0, %v5124
        %5126 = vdwg.mxu0
        %5127 = vmatpush.msra.mxu0 0.0
        %5128 = vmatpush.msra.mxu0 0.0
        %5129 = vmatpush.msra.mxu0 0.0
        %5130 = vmatpush.msra.mxu0 0.0
        %5131 = vmatpush.msra.mxu0 0.0
        %5132 = vmatpush.msra.mxu0 0.0
        %5133 = vmatpush.msra.mxu0 0.0
        %5134 = vmatpush.msra.mxu0 0.0
        %5135 = vmatpush.msra.mxu0 0.0
        %5136 = vmatpush.msra.mxu0 0.0
        %5137 = vmatpush.msra.mxu0 0.0
        %5138 = vmatpush.msra.mxu0 0.0
        %5139 = vmatpush.msra.mxu0 0.0
        %5140 = vmatpush.msra.mxu0 0.0
        %5141 = vmatpush.msra.mxu0 0.0
        %5142 = vmatpush.msra.mxu0 %v4990
        %5143 = vmatmul.f32.gmra.mxu0 %v5005
        %v5144 = vpop.f32.mrf.mxu0
        %v5145 = vadd.f32 0.0, %v5144
        %5146 = vdwg.mxu0
        %5147 = vmatpush.msra.mxu0 0.0
        %5148 = vmatpush.msra.mxu0 0.0
        %5149 = vmatpush.msra.mxu0 0.0
        %5150 = vmatpush.msra.mxu0 0.0
        %5151 = vmatpush.msra.mxu0 0.0
        %5152 = vmatpush.msra.mxu0 0.0
        %5153 = vmatpush.msra.mxu0 0.0
        %5154 = vmatpush.msra.mxu0 0.0
        %5155 = vmatpush.msra.mxu0 0.0
        %5156 = vmatpush.msra.mxu0 0.0
        %5157 = vmatpush.msra.mxu0 0.0
        %5158 = vmatpush.msra.mxu0 0.0
        %5159 = vmatpush.msra.mxu0 0.0
        %5160 = vmatpush.msra.mxu0 0.0
        %5161 = vmatpush.msra.mxu0 0.0
        %5162 = vmatpush.msra.mxu0 %v4991
        %5163 = vmatmul.f32.gmra.mxu0 %v5005
        %v5164 = vpop.f32.mrf.mxu0
        %v5165 = vadd.f32 0.0, %v5164
        %5166 = vdwg.mxu0
        %5167 = vmatpush.msra.mxu0 0.0
        %5168 = vmatpush.msra.mxu0 0.0
        %5169 = vmatpush.msra.mxu0 0.0
        %5170 = vmatpush.msra.mxu0 0.0
        %5171 = vmatpush.msra.mxu0 0.0
        %5172 = vmatpush.msra.mxu0 0.0
        %5173 = vmatpush.msra.mxu0 0.0
        %5174 = vmatpush.msra.mxu0 0.0
        %5175 = vmatpush.msra.mxu0 0.0
        %5176 = vmatpush.msra.mxu0 0.0
        %5177 = vmatpush.msra.mxu0 0.0
        %5178 = vmatpush.msra.mxu0 0.0
        %5179 = vmatpush.msra.mxu0 0.0
        %5180 = vmatpush.msra.mxu0 0.0
        %5181 = vmatpush.msra.mxu0 0.0
        %5182 = vmatpush.msra.mxu0 %v4992
        %5183 = vmatmul.f32.gmra.mxu0 %v5005
        %v5184 = vpop.f32.mrf.mxu0
        %v5185 = vadd.f32 0.0, %v5184
        %5186 = vdwg.mxu0
        %5187 = vmatpush.msra.mxu0 0.0
        %5188 = vmatpush.msra.mxu0 0.0
        %5189 = vmatpush.msra.mxu0 0.0
        %5190 = vmatpush.msra.mxu0 0.0
        %5191 = vmatpush.msra.mxu0 0.0
        %5192 = vmatpush.msra.mxu0 0.0
        %5193 = vmatpush.msra.mxu0 0.0
        %5194 = vmatpush.msra.mxu0 0.0
        %5195 = vmatpush.msra.mxu0 0.0
        %5196 = vmatpush.msra.mxu0 0.0
        %5197 = vmatpush.msra.mxu0 0.0
        %5198 = vmatpush.msra.mxu0 0.0
        %5199 = vmatpush.msra.mxu0 0.0
        %5200 = vmatpush.msra.mxu0 0.0
        %5201 = vmatpush.msra.mxu0 0.0
        %5202 = vmatpush.msra.mxu0 %v4993
        %5203 = vmatmul.f32.gmra.mxu0 %v5005
        %v5204 = vpop.f32.mrf.mxu0
        %v5205 = vadd.f32 0.0, %v5204
        %5206 = vdwg.mxu0
        %v5207 = vadd.f32 %v4950, %v5025
        %v5208 = vadd.f32 %v4951, %v5045
        %v5209 = vadd.f32 %v4952, %v5065
        %v5210 = vadd.f32 %v4953, %v5085
        %v5211 = vadd.f32 %v4954, %v5105
        %v5212 = vadd.f32 %v4955, %v5125
        %v5213 = vadd.f32 %v4956, %v5145
        %v5214 = vadd.f32 %v4957, %v5165
        %v5215 = vadd.f32 %v4958, %v5185
        %v5216 = vadd.f32 %v4959, %v5205
        %s5217 = scalar_lea.vmem %s4, 28
        %v5218 = vld [vmem:[%s5217] sm:$0xf]
        %5219 = vrot.lane.b32.xlu0 %v4683, 94
        %v5220 = vpop.permute.xlu0 %5219
        %5221 = vrot.lane.b32.xlu0 %v4684, 94
        %v5222 = vpop.permute.xlu0 %5221
        %5223 = vrot.lane.b32.xlu0 %v4685, 94
        %v5224 = vpop.permute.xlu0 %5223
        %5225 = vrot.lane.b32.xlu0 %v4686, 94
        %v5226 = vpop.permute.xlu0 %5225
        %5227 = vrot.lane.b32.xlu0 %v4687, 94
        %v5228 = vpop.permute.xlu0 %5227
        %5229 = vrot.lane.b32.xlu0 %v4688, 94
        %v5230 = vpop.permute.xlu0 %5229
        %5231 = vrot.lane.b32.xlu0 %v4689, 94
        %v5232 = vpop.permute.xlu0 %5231
        %5233 = vrot.lane.b32.xlu0 %v4690, 94
        %v5234 = vpop.permute.xlu0 %5233
        %5235 = vrot.lane.b32.xlu0 %v4691, 94
        %v5236 = vpop.permute.xlu0 %5235
        %5237 = vrot.lane.b32.xlu0 %v4692, 94
        %v5238 = vpop.permute.xlu0 %5237
        %5239 = vrot.lane.b32.xlu0 %v4693, 94
        %v5240 = vpop.permute.xlu0 %5239
        %v5241 = vsel %vm2875, %v5220, %v5222
        %v5242 = vsel %vm2875, %v5222, %v5224
        %v5243 = vsel %vm2875, %v5224, %v5226
        %v5244 = vsel %vm2875, %v5226, %v5228
        %v5245 = vsel %vm2875, %v5228, %v5230
        %v5246 = vsel %vm2875, %v5230, %v5232
        %v5247 = vsel %vm2875, %v5232, %v5234
        %v5248 = vsel %vm2875, %v5234, %v5236
        %v5249 = vsel %vm2875, %v5236, %v5238
        %v5250 = vsel %vm2875, %v5238, %v5240
        %v5262 = vsel %vm1132, %v5218, 0
        %5264 = vmatpush.msra.mxu0 0.0
        %5265 = vmatpush.msra.mxu0 0.0
        %5266 = vmatpush.msra.mxu0 0.0
        %5267 = vmatpush.msra.mxu0 0.0
        %5268 = vmatpush.msra.mxu0 0.0
        %5269 = vmatpush.msra.mxu0 0.0
        %5270 = vmatpush.msra.mxu0 0.0
        %5271 = vmatpush.msra.mxu0 0.0
        %5272 = vmatpush.msra.mxu0 0.0
        %5273 = vmatpush.msra.mxu0 0.0
        %5274 = vmatpush.msra.mxu0 0.0
        %5275 = vmatpush.msra.mxu0 0.0
        %5276 = vmatpush.msra.mxu0 0.0
        %5277 = vmatpush.msra.mxu0 0.0
        %5278 = vmatpush.msra.mxu0 0.0
        %5279 = vmatpush.msra.mxu0 %v5241
        %5280 = vmatmul.f32.gmra.mxu0 %v5262
        %v5281 = vpop.f32.mrf.mxu0
        %v5282 = vadd.f32 0.0, %v5281
        %5283 = vdwg.mxu0
        %5284 = vmatpush.msra.mxu0 0.0
        %5285 = vmatpush.msra.mxu0 0.0
        %5286 = vmatpush.msra.mxu0 0.0
        %5287 = vmatpush.msra.mxu0 0.0
        %5288 = vmatpush.msra.mxu0 0.0
        %5289 = vmatpush.msra.mxu0 0.0
        %5290 = vmatpush.msra.mxu0 0.0
        %5291 = vmatpush.msra.mxu0 0.0
        %5292 = vmatpush.msra.mxu0 0.0
        %5293 = vmatpush.msra.mxu0 0.0
        %5294 = vmatpush.msra.mxu0 0.0
        %5295 = vmatpush.msra.mxu0 0.0
        %5296 = vmatpush.msra.mxu0 0.0
        %5297 = vmatpush.msra.mxu0 0.0
        %5298 = vmatpush.msra.mxu0 0.0
        %5299 = vmatpush.msra.mxu0 %v5242
        %5300 = vmatmul.f32.gmra.mxu0 %v5262
        %v5301 = vpop.f32.mrf.mxu0
        %v5302 = vadd.f32 0.0, %v5301
        %5303 = vdwg.mxu0
        %5304 = vmatpush.msra.mxu0 0.0
        %5305 = vmatpush.msra.mxu0 0.0
        %5306 = vmatpush.msra.mxu0 0.0
        %5307 = vmatpush.msra.mxu0 0.0
        %5308 = vmatpush.msra.mxu0 0.0
        %5309 = vmatpush.msra.mxu0 0.0
        %5310 = vmatpush.msra.mxu0 0.0
        %5311 = vmatpush.msra.mxu0 0.0
        %5312 = vmatpush.msra.mxu0 0.0
        %5313 = vmatpush.msra.mxu0 0.0
        %5314 = vmatpush.msra.mxu0 0.0
        %5315 = vmatpush.msra.mxu0 0.0
        %5316 = vmatpush.msra.mxu0 0.0
        %5317 = vmatpush.msra.mxu0 0.0
        %5318 = vmatpush.msra.mxu0 0.0
        %5319 = vmatpush.msra.mxu0 %v5243
        %5320 = vmatmul.f32.gmra.mxu0 %v5262
        %v5321 = vpop.f32.mrf.mxu0
        %v5322 = vadd.f32 0.0, %v5321
        %5323 = vdwg.mxu0
        %5324 = vmatpush.msra.mxu0 0.0
        %5325 = vmatpush.msra.mxu0 0.0
        %5326 = vmatpush.msra.mxu0 0.0
        %5327 = vmatpush.msra.mxu0 0.0
        %5328 = vmatpush.msra.mxu0 0.0
        %5329 = vmatpush.msra.mxu0 0.0
        %5330 = vmatpush.msra.mxu0 0.0
        %5331 = vmatpush.msra.mxu0 0.0
        %5332 = vmatpush.msra.mxu0 0.0
        %5333 = vmatpush.msra.mxu0 0.0
        %5334 = vmatpush.msra.mxu0 0.0
        %5335 = vmatpush.msra.mxu0 0.0
        %5336 = vmatpush.msra.mxu0 0.0
        %5337 = vmatpush.msra.mxu0 0.0
        %5338 = vmatpush.msra.mxu0 0.0
        %5339 = vmatpush.msra.mxu0 %v5244
        %5340 = vmatmul.f32.gmra.mxu0 %v5262
        %v5341 = vpop.f32.mrf.mxu0
        %v5342 = vadd.f32 0.0, %v5341
        %5343 = vdwg.mxu0
        %5344 = vmatpush.msra.mxu0 0.0
        %5345 = vmatpush.msra.mxu0 0.0
        %5346 = vmatpush.msra.mxu0 0.0
        %5347 = vmatpush.msra.mxu0 0.0
        %5348 = vmatpush.msra.mxu0 0.0
        %5349 = vmatpush.msra.mxu0 0.0
        %5350 = vmatpush.msra.mxu0 0.0
        %5351 = vmatpush.msra.mxu0 0.0
        %5352 = vmatpush.msra.mxu0 0.0
        %5353 = vmatpush.msra.mxu0 0.0
        %5354 = vmatpush.msra.mxu0 0.0
        %5355 = vmatpush.msra.mxu0 0.0
        %5356 = vmatpush.msra.mxu0 0.0
        %5357 = vmatpush.msra.mxu0 0.0
        %5358 = vmatpush.msra.mxu0 0.0
        %5359 = vmatpush.msra.mxu0 %v5245
        %5360 = vmatmul.f32.gmra.mxu0 %v5262
        %v5361 = vpop.f32.mrf.mxu0
        %v5362 = vadd.f32 0.0, %v5361
        %5363 = vdwg.mxu0
        %5364 = vmatpush.msra.mxu0 0.0
        %5365 = vmatpush.msra.mxu0 0.0
        %5366 = vmatpush.msra.mxu0 0.0
        %5367 = vmatpush.msra.mxu0 0.0
        %5368 = vmatpush.msra.mxu0 0.0
        %5369 = vmatpush.msra.mxu0 0.0
        %5370 = vmatpush.msra.mxu0 0.0
        %5371 = vmatpush.msra.mxu0 0.0
        %5372 = vmatpush.msra.mxu0 0.0
        %5373 = vmatpush.msra.mxu0 0.0
        %5374 = vmatpush.msra.mxu0 0.0
        %5375 = vmatpush.msra.mxu0 0.0
        %5376 = vmatpush.msra.mxu0 0.0
        %5377 = vmatpush.msra.mxu0 0.0
        %5378 = vmatpush.msra.mxu0 0.0
        %5379 = vmatpush.msra.mxu0 %v5246
        %5380 = vmatmul.f32.gmra.mxu0 %v5262
        %v5381 = vpop.f32.mrf.mxu0
        %v5382 = vadd.f32 0.0, %v5381
        %5383 = vdwg.mxu0
        %5384 = vmatpush.msra.mxu0 0.0
        %5385 = vmatpush.msra.mxu0 0.0
        %5386 = vmatpush.msra.mxu0 0.0
        %5387 = vmatpush.msra.mxu0 0.0
        %5388 = vmatpush.msra.mxu0 0.0
        %5389 = vmatpush.msra.mxu0 0.0
        %5390 = vmatpush.msra.mxu0 0.0
        %5391 = vmatpush.msra.mxu0 0.0
        %5392 = vmatpush.msra.mxu0 0.0
        %5393 = vmatpush.msra.mxu0 0.0
        %5394 = vmatpush.msra.mxu0 0.0
        %5395 = vmatpush.msra.mxu0 0.0
        %5396 = vmatpush.msra.mxu0 0.0
        %5397 = vmatpush.msra.mxu0 0.0
        %5398 = vmatpush.msra.mxu0 0.0
        %5399 = vmatpush.msra.mxu0 %v5247
        %5400 = vmatmul.f32.gmra.mxu0 %v5262
        %v5401 = vpop.f32.mrf.mxu0
        %v5402 = vadd.f32 0.0, %v5401
        %5403 = vdwg.mxu0
        %5404 = vmatpush.msra.mxu0 0.0
        %5405 = vmatpush.msra.mxu0 0.0
        %5406 = vmatpush.msra.mxu0 0.0
        %5407 = vmatpush.msra.mxu0 0.0
        %5408 = vmatpush.msra.mxu0 0.0
        %5409 = vmatpush.msra.mxu0 0.0
        %5410 = vmatpush.msra.mxu0 0.0
        %5411 = vmatpush.msra.mxu0 0.0
        %5412 = vmatpush.msra.mxu0 0.0
        %5413 = vmatpush.msra.mxu0 0.0
        %5414 = vmatpush.msra.mxu0 0.0
        %5415 = vmatpush.msra.mxu0 0.0
        %5416 = vmatpush.msra.mxu0 0.0
        %5417 = vmatpush.msra.mxu0 0.0
        %5418 = vmatpush.msra.mxu0 0.0
        %5419 = vmatpush.msra.mxu0 %v5248
        %5420 = vmatmul.f32.gmra.mxu0 %v5262
        %v5421 = vpop.f32.mrf.mxu0
        %v5422 = vadd.f32 0.0, %v5421
        %5423 = vdwg.mxu0
        %5424 = vmatpush.msra.mxu0 0.0
        %5425 = vmatpush.msra.mxu0 0.0
        %5426 = vmatpush.msra.mxu0 0.0
        %5427 = vmatpush.msra.mxu0 0.0
        %5428 = vmatpush.msra.mxu0 0.0
        %5429 = vmatpush.msra.mxu0 0.0
        %5430 = vmatpush.msra.mxu0 0.0
        %5431 = vmatpush.msra.mxu0 0.0
        %5432 = vmatpush.msra.mxu0 0.0
        %5433 = vmatpush.msra.mxu0 0.0
        %5434 = vmatpush.msra.mxu0 0.0
        %5435 = vmatpush.msra.mxu0 0.0
        %5436 = vmatpush.msra.mxu0 0.0
        %5437 = vmatpush.msra.mxu0 0.0
        %5438 = vmatpush.msra.mxu0 0.0
        %5439 = vmatpush.msra.mxu0 %v5249
        %5440 = vmatmul.f32.gmra.mxu0 %v5262
        %v5441 = vpop.f32.mrf.mxu0
        %v5442 = vadd.f32 0.0, %v5441
        %5443 = vdwg.mxu0
        %5444 = vmatpush.msra.mxu0 0.0
        %5445 = vmatpush.msra.mxu0 0.0
        %5446 = vmatpush.msra.mxu0 0.0
        %5447 = vmatpush.msra.mxu0 0.0
        %5448 = vmatpush.msra.mxu0 0.0
        %5449 = vmatpush.msra.mxu0 0.0
        %5450 = vmatpush.msra.mxu0 0.0
        %5451 = vmatpush.msra.mxu0 0.0
        %5452 = vmatpush.msra.mxu0 0.0
        %5453 = vmatpush.msra.mxu0 0.0
        %5454 = vmatpush.msra.mxu0 0.0
        %5455 = vmatpush.msra.mxu0 0.0
        %5456 = vmatpush.msra.mxu0 0.0
        %5457 = vmatpush.msra.mxu0 0.0
        %5458 = vmatpush.msra.mxu0 0.0
        %5459 = vmatpush.msra.mxu0 %v5250
        %5460 = vmatmul.f32.gmra.mxu0 %v5262
        %v5461 = vpop.f32.mrf.mxu0
        %v5462 = vadd.f32 0.0, %v5461
        %5463 = vdwg.mxu0
        %v5464 = vadd.f32 %v5207, %v5282
        %v5465 = vadd.f32 %v5208, %v5302
        %v5466 = vadd.f32 %v5209, %v5322
        %v5467 = vadd.f32 %v5210, %v5342
        %v5468 = vadd.f32 %v5211, %v5362
        %v5469 = vadd.f32 %v5212, %v5382
        %v5470 = vadd.f32 %v5213, %v5402
        %v5471 = vadd.f32 %v5214, %v5422
        %v5472 = vadd.f32 %v5215, %v5442
        %v5473 = vadd.f32 %v5216, %v5462
        %s5474 = scalar_lea.vmem %s4, 32
        %v5475 = vld [vmem:[%s5474] sm:$0xf]
        %5476 = vrot.lane.b32.xlu0 %v4683, 93
        %v5477 = vpop.permute.xlu0 %5476
        %5478 = vrot.lane.b32.xlu0 %v4684, 93
        %v5479 = vpop.permute.xlu0 %5478
        %5480 = vrot.lane.b32.xlu0 %v4685, 93
        %v5481 = vpop.permute.xlu0 %5480
        %5482 = vrot.lane.b32.xlu0 %v4686, 93
        %v5483 = vpop.permute.xlu0 %5482
        %5484 = vrot.lane.b32.xlu0 %v4687, 93
        %v5485 = vpop.permute.xlu0 %5484
        %5486 = vrot.lane.b32.xlu0 %v4688, 93
        %v5487 = vpop.permute.xlu0 %5486
        %5488 = vrot.lane.b32.xlu0 %v4689, 93
        %v5489 = vpop.permute.xlu0 %5488
        %5490 = vrot.lane.b32.xlu0 %v4690, 93
        %v5491 = vpop.permute.xlu0 %5490
        %5492 = vrot.lane.b32.xlu0 %v4691, 93
        %v5493 = vpop.permute.xlu0 %5492
        %5494 = vrot.lane.b32.xlu0 %v4692, 93
        %v5495 = vpop.permute.xlu0 %5494
        %5496 = vrot.lane.b32.xlu0 %v4693, 93
        %v5497 = vpop.permute.xlu0 %5496
        %v5498 = vsel %vm3133, %v5477, %v5479
        %v5499 = vsel %vm3133, %v5479, %v5481
        %v5500 = vsel %vm3133, %v5481, %v5483
        %v5501 = vsel %vm3133, %v5483, %v5485
        %v5502 = vsel %vm3133, %v5485, %v5487
        %v5503 = vsel %vm3133, %v5487, %v5489
        %v5504 = vsel %vm3133, %v5489, %v5491
        %v5505 = vsel %vm3133, %v5491, %v5493
        %v5506 = vsel %vm3133, %v5493, %v5495
        %v5507 = vsel %vm3133, %v5495, %v5497
        %v5519 = vsel %vm1132, %v5475, 0
        %5521 = vmatpush.msra.mxu0 0.0
        %5522 = vmatpush.msra.mxu0 0.0
        %5523 = vmatpush.msra.mxu0 0.0
        %5524 = vmatpush.msra.mxu0 0.0
        %5525 = vmatpush.msra.mxu0 0.0
        %5526 = vmatpush.msra.mxu0 0.0
        %5527 = vmatpush.msra.mxu0 0.0
        %5528 = vmatpush.msra.mxu0 0.0
        %5529 = vmatpush.msra.mxu0 0.0
        %5530 = vmatpush.msra.mxu0 0.0
        %5531 = vmatpush.msra.mxu0 0.0
        %5532 = vmatpush.msra.mxu0 0.0
        %5533 = vmatpush.msra.mxu0 0.0
        %5534 = vmatpush.msra.mxu0 0.0
        %5535 = vmatpush.msra.mxu0 0.0
        %5536 = vmatpush.msra.mxu0 %v5498
        %5537 = vmatmul.f32.gmra.mxu0 %v5519
        %v5538 = vpop.f32.mrf.mxu0
        %v5539 = vadd.f32 0.0, %v5538
        %5540 = vdwg.mxu0
        %5541 = vmatpush.msra.mxu0 0.0
        %5542 = vmatpush.msra.mxu0 0.0
        %5543 = vmatpush.msra.mxu0 0.0
        %5544 = vmatpush.msra.mxu0 0.0
        %5545 = vmatpush.msra.mxu0 0.0
        %5546 = vmatpush.msra.mxu0 0.0
        %5547 = vmatpush.msra.mxu0 0.0
        %5548 = vmatpush.msra.mxu0 0.0
        %5549 = vmatpush.msra.mxu0 0.0
        %5550 = vmatpush.msra.mxu0 0.0
        %5551 = vmatpush.msra.mxu0 0.0
        %5552 = vmatpush.msra.mxu0 0.0
        %5553 = vmatpush.msra.mxu0 0.0
        %5554 = vmatpush.msra.mxu0 0.0
        %5555 = vmatpush.msra.mxu0 0.0
        %5556 = vmatpush.msra.mxu0 %v5499
        %5557 = vmatmul.f32.gmra.mxu0 %v5519
        %v5558 = vpop.f32.mrf.mxu0
        %v5559 = vadd.f32 0.0, %v5558
        %5560 = vdwg.mxu0
        %5561 = vmatpush.msra.mxu0 0.0
        %5562 = vmatpush.msra.mxu0 0.0
        %5563 = vmatpush.msra.mxu0 0.0
        %5564 = vmatpush.msra.mxu0 0.0
        %5565 = vmatpush.msra.mxu0 0.0
        %5566 = vmatpush.msra.mxu0 0.0
        %5567 = vmatpush.msra.mxu0 0.0
        %5568 = vmatpush.msra.mxu0 0.0
        %5569 = vmatpush.msra.mxu0 0.0
        %5570 = vmatpush.msra.mxu0 0.0
        %5571 = vmatpush.msra.mxu0 0.0
        %5572 = vmatpush.msra.mxu0 0.0
        %5573 = vmatpush.msra.mxu0 0.0
        %5574 = vmatpush.msra.mxu0 0.0
        %5575 = vmatpush.msra.mxu0 0.0
        %5576 = vmatpush.msra.mxu0 %v5500
        %5577 = vmatmul.f32.gmra.mxu0 %v5519
        %v5578 = vpop.f32.mrf.mxu0
        %v5579 = vadd.f32 0.0, %v5578
        %5580 = vdwg.mxu0
        %5581 = vmatpush.msra.mxu0 0.0
        %5582 = vmatpush.msra.mxu0 0.0
        %5583 = vmatpush.msra.mxu0 0.0
        %5584 = vmatpush.msra.mxu0 0.0
        %5585 = vmatpush.msra.mxu0 0.0
        %5586 = vmatpush.msra.mxu0 0.0
        %5587 = vmatpush.msra.mxu0 0.0
        %5588 = vmatpush.msra.mxu0 0.0
        %5589 = vmatpush.msra.mxu0 0.0
        %5590 = vmatpush.msra.mxu0 0.0
        %5591 = vmatpush.msra.mxu0 0.0
        %5592 = vmatpush.msra.mxu0 0.0
        %5593 = vmatpush.msra.mxu0 0.0
        %5594 = vmatpush.msra.mxu0 0.0
        %5595 = vmatpush.msra.mxu0 0.0
        %5596 = vmatpush.msra.mxu0 %v5501
        %5597 = vmatmul.f32.gmra.mxu0 %v5519
        %v5598 = vpop.f32.mrf.mxu0
        %v5599 = vadd.f32 0.0, %v5598
        %5600 = vdwg.mxu0
        %5601 = vmatpush.msra.mxu0 0.0
        %5602 = vmatpush.msra.mxu0 0.0
        %5603 = vmatpush.msra.mxu0 0.0
        %5604 = vmatpush.msra.mxu0 0.0
        %5605 = vmatpush.msra.mxu0 0.0
        %5606 = vmatpush.msra.mxu0 0.0
        %5607 = vmatpush.msra.mxu0 0.0
        %5608 = vmatpush.msra.mxu0 0.0
        %5609 = vmatpush.msra.mxu0 0.0
        %5610 = vmatpush.msra.mxu0 0.0
        %5611 = vmatpush.msra.mxu0 0.0
        %5612 = vmatpush.msra.mxu0 0.0
        %5613 = vmatpush.msra.mxu0 0.0
        %5614 = vmatpush.msra.mxu0 0.0
        %5615 = vmatpush.msra.mxu0 0.0
        %5616 = vmatpush.msra.mxu0 %v5502
        %5617 = vmatmul.f32.gmra.mxu0 %v5519
        %v5618 = vpop.f32.mrf.mxu0
        %v5619 = vadd.f32 0.0, %v5618
        %5620 = vdwg.mxu0
        %5621 = vmatpush.msra.mxu0 0.0
        %5622 = vmatpush.msra.mxu0 0.0
        %5623 = vmatpush.msra.mxu0 0.0
        %5624 = vmatpush.msra.mxu0 0.0
        %5625 = vmatpush.msra.mxu0 0.0
        %5626 = vmatpush.msra.mxu0 0.0
        %5627 = vmatpush.msra.mxu0 0.0
        %5628 = vmatpush.msra.mxu0 0.0
        %5629 = vmatpush.msra.mxu0 0.0
        %5630 = vmatpush.msra.mxu0 0.0
        %5631 = vmatpush.msra.mxu0 0.0
        %5632 = vmatpush.msra.mxu0 0.0
        %5633 = vmatpush.msra.mxu0 0.0
        %5634 = vmatpush.msra.mxu0 0.0
        %5635 = vmatpush.msra.mxu0 0.0
        %5636 = vmatpush.msra.mxu0 %v5503
        %5637 = vmatmul.f32.gmra.mxu0 %v5519
        %v5638 = vpop.f32.mrf.mxu0
        %v5639 = vadd.f32 0.0, %v5638
        %5640 = vdwg.mxu0
        %5641 = vmatpush.msra.mxu0 0.0
        %5642 = vmatpush.msra.mxu0 0.0
        %5643 = vmatpush.msra.mxu0 0.0
        %5644 = vmatpush.msra.mxu0 0.0
        %5645 = vmatpush.msra.mxu0 0.0
        %5646 = vmatpush.msra.mxu0 0.0
        %5647 = vmatpush.msra.mxu0 0.0
        %5648 = vmatpush.msra.mxu0 0.0
        %5649 = vmatpush.msra.mxu0 0.0
        %5650 = vmatpush.msra.mxu0 0.0
        %5651 = vmatpush.msra.mxu0 0.0
        %5652 = vmatpush.msra.mxu0 0.0
        %5653 = vmatpush.msra.mxu0 0.0
        %5654 = vmatpush.msra.mxu0 0.0
        %5655 = vmatpush.msra.mxu0 0.0
        %5656 = vmatpush.msra.mxu0 %v5504
        %5657 = vmatmul.f32.gmra.mxu0 %v5519
        %v5658 = vpop.f32.mrf.mxu0
        %v5659 = vadd.f32 0.0, %v5658
        %5660 = vdwg.mxu0
        %5661 = vmatpush.msra.mxu0 0.0
        %5662 = vmatpush.msra.mxu0 0.0
        %5663 = vmatpush.msra.mxu0 0.0
        %5664 = vmatpush.msra.mxu0 0.0
        %5665 = vmatpush.msra.mxu0 0.0
        %5666 = vmatpush.msra.mxu0 0.0
        %5667 = vmatpush.msra.mxu0 0.0
        %5668 = vmatpush.msra.mxu0 0.0
        %5669 = vmatpush.msra.mxu0 0.0
        %5670 = vmatpush.msra.mxu0 0.0
        %5671 = vmatpush.msra.mxu0 0.0
        %5672 = vmatpush.msra.mxu0 0.0
        %5673 = vmatpush.msra.mxu0 0.0
        %5674 = vmatpush.msra.mxu0 0.0
        %5675 = vmatpush.msra.mxu0 0.0
        %5676 = vmatpush.msra.mxu0 %v5505
        %5677 = vmatmul.f32.gmra.mxu0 %v5519
        %v5678 = vpop.f32.mrf.mxu0
        %v5679 = vadd.f32 0.0, %v5678
        %5680 = vdwg.mxu0
        %5681 = vmatpush.msra.mxu0 0.0
        %5682 = vmatpush.msra.mxu0 0.0
        %5683 = vmatpush.msra.mxu0 0.0
        %5684 = vmatpush.msra.mxu0 0.0
        %5685 = vmatpush.msra.mxu0 0.0
        %5686 = vmatpush.msra.mxu0 0.0
        %5687 = vmatpush.msra.mxu0 0.0
        %5688 = vmatpush.msra.mxu0 0.0
        %5689 = vmatpush.msra.mxu0 0.0
        %5690 = vmatpush.msra.mxu0 0.0
        %5691 = vmatpush.msra.mxu0 0.0
        %5692 = vmatpush.msra.mxu0 0.0
        %5693 = vmatpush.msra.mxu0 0.0
        %5694 = vmatpush.msra.mxu0 0.0
        %5695 = vmatpush.msra.mxu0 0.0
        %5696 = vmatpush.msra.mxu0 %v5506
        %5697 = vmatmul.f32.gmra.mxu0 %v5519
        %v5698 = vpop.f32.mrf.mxu0
        %v5699 = vadd.f32 0.0, %v5698
        %5700 = vdwg.mxu0
        %5701 = vmatpush.msra.mxu0 0.0
        %5702 = vmatpush.msra.mxu0 0.0
        %5703 = vmatpush.msra.mxu0 0.0
        %5704 = vmatpush.msra.mxu0 0.0
        %5705 = vmatpush.msra.mxu0 0.0
        %5706 = vmatpush.msra.mxu0 0.0
        %5707 = vmatpush.msra.mxu0 0.0
        %5708 = vmatpush.msra.mxu0 0.0
        %5709 = vmatpush.msra.mxu0 0.0
        %5710 = vmatpush.msra.mxu0 0.0
        %5711 = vmatpush.msra.mxu0 0.0
        %5712 = vmatpush.msra.mxu0 0.0
        %5713 = vmatpush.msra.mxu0 0.0
        %5714 = vmatpush.msra.mxu0 0.0
        %5715 = vmatpush.msra.mxu0 0.0
        %5716 = vmatpush.msra.mxu0 %v5507
        %5717 = vmatmul.f32.gmra.mxu0 %v5519
        %v5718 = vpop.f32.mrf.mxu0
        %v5719 = vadd.f32 0.0, %v5718
        %5720 = vdwg.mxu0
        %v5721 = vadd.f32 %v5464, %v5539
        %v5722 = vadd.f32 %v5465, %v5559
        %v5723 = vadd.f32 %v5466, %v5579
        %v5724 = vadd.f32 %v5467, %v5599
        %v5725 = vadd.f32 %v5468, %v5619
        %v5726 = vadd.f32 %v5469, %v5639
        %v5727 = vadd.f32 %v5470, %v5659
        %v5728 = vadd.f32 %v5471, %v5679
        %v5729 = vadd.f32 %v5472, %v5699
        %v5730 = vadd.f32 %v5473, %v5719
        %v5731 = vld [vmem:[%s5] sm:$0xf]
        %5733 = vset.pattern.permute.xlu0 0
        %5734 = vperm.xlu0 %5733, %v5731
        %v5735 = vpop.permute.xlu0 %5734
        %v5737 = vadd.f32 %v5721, %v5735
        %v5738 = vadd.f32 %v5722, %v5735
        %v5739 = vadd.f32 %v5723, %v5735
        %v5740 = vadd.f32 %v5724, %v5735
        %v5741 = vadd.f32 %v5725, %v5735
        %v5742 = vadd.f32 %v5726, %v5735
        %v5743 = vadd.f32 %v5727, %v5735
        %v5744 = vadd.f32 %v5728, %v5735
        %v5745 = vadd.f32 %v5729, %v5735
        %v5746 = vadd.f32 %v5730, %v5735
        %v5747 = vmax.f32 %v5737, 0.0
        %v5748 = vmax.f32 %v5738, 0.0
        %v5749 = vmax.f32 %v5739, 0.0
        %v5750 = vmax.f32 %v5740, 0.0
        %v5751 = vmax.f32 %v5741, 0.0
        %v5752 = vmax.f32 %v5742, 0.0
        %v5753 = vmax.f32 %v5743, 0.0
        %v5754 = vmax.f32 %v5744, 0.0
        %v5755 = vmax.f32 %v5745, 0.0
        %v5756 = vmax.f32 %v5746, 0.0
        %v5767 = vrot.slane %v5748, 4
        %v5768 = vrot.slane %v5750, 4
        %v5769 = vrot.slane %v5752, 4
        %v5770 = vrot.slane %v5754, 4
        %v5771 = vrot.slane %v5756, 4
        %vm5772 = vcmask 1043456
        %v5773 = vsel %vm5772, %v5747, %v5767
        %v5774 = vsel %vm5772, %v5749, %v5768
        %v5775 = vsel %vm5772, %v5751, %v5769
        %v5776 = vsel %vm5772, %v5753, %v5770
        %v5777 = vsel %vm5772, %v5755, %v5771
        %5783 = vst [vmem:[%s327] sm:$0xff] %v5773
        %5784 = vst [vmem:[%s327 + $0x8] sm:$0xff] %v5774
        %5785 = vst [vmem:[%s327 + $0x10] sm:$0xff] %v5775
        %5786 = vst [vmem:[%s327 + $0x18] sm:$0xff] %v5776
        %5787 = vst [vmem:[%s327 + $0x20] sm:$0xff] %v5777
        %s5788 = sand.u32 %s185, 1
        %s5789 = scalar_lea.sflag [#allocation6], %s5788
        %s5790 = sand.u32 %s185, 1
        %s5791 = smul.addr %s5790, 40
        %s5792 = scalar_lea.vmem [#allocation10], %s5791
        // Predicated region
        $region61: #{tpu_custom_call.1} parent=47 // pred_check
          %p5793 = pneg %p195
        $region62: #{tpu_custom_call.1} parent=47 // pred_check_branch
          %5795 = sbr.rel (%p5793) target = $region64
        $region63: #{tpu_custom_call.1} parent=47 // pred_region
          %5797 = vsyncadd %s5789, 0
          %s5798 = smul.addr %s25, 10
          %s5799 = smul.addr %s5798, 4
          %s5800 = scalar_lea.hbm %s7, %s5799
          %s5802 = sshll.u32 %s5792, 4
          %s5803 = int_to_ptr.vmem [resolvable:$true] %s5802
          %s5804 = sshll.u32 %s5800, 4
          %s5805 = int_to_ptr.hbm [resolvable:$true] %s5804
          %5807 = dma.vmem_to_hbm [thread:$0]  %s5803, 640, %s5805, %s5789
        $region64: #{tpu_custom_call.1} parent=47 // pred_fallthru
          _
      $region48: #{tpu_custom_call.1} parent=5 // pred_fallthru
        _
      %p5808 = scmp.le.s32.totalorder 2, %s20
      // Predicated region
      $region65: #{tpu_custom_call.1} parent=5 // pred_check
        %p5809 = pneg %p5808
      $region66: #{tpu_custom_call.1} parent=5 // pred_check_branch
        %5811 = sbr.rel (%p5809) target = $region68
      $region67: #{tpu_custom_call.1} parent=5 // pred_region
        %s5812 = ssub.s32 %s20, 2
        // Predicated region
        $region69: #{tpu_custom_call.1} parent=67 // pred_check
          %p5813 = pneg %p201
        $region70: #{tpu_custom_call.1} parent=67 // pred_check_branch
          %5815 = sbr.rel (%p5813) target = $region72
        $region71: #{tpu_custom_call.1} parent=67 // pred_region
          %s5816 = sand.u32 %s186, 1
          %s5817 = scalar_lea.sflag [#allocation6], %s5816
          %s5818 = sand.u32 %s186, 1
          %s5819 = smul.addr %s5818, 40
          %s5820 = scalar_lea.vmem [#allocation10], %s5819
          %5822 = dma.done %s5817, 640
        $region72: #{tpu_custom_call.1} parent=67 // pred_fallthru
          _
      $region68: #{tpu_custom_call.1} parent=5 // pred_fallthru
        _
    $region6: #{tpu_custom_call.1} parent=1 // loop_footer
      %s24 = sadd.s32 1, %s20
    $region7: #{tpu_custom_call.1} parent=1 // loop_footer_branch
      %19 = sbr.rel target = $region3
    $region8: #{tpu_custom_call.1} parent=1 // loop_exit
      _
    %5823 = vsyncpa [#allocation5], 1
    %s5824 = scalar_lea.sflag [#allocation5], 1
    %5825 = vsyncpa %s5824, 1
    %5826 = vsyncpa [#allocation8], 1
    %5827 = vsyncpa [#allocation6], 1
    %s5828 = scalar_lea.sflag [#allocation6], 1
    %5829 = vsyncpa %s5828, 1

</llo_original>
